<compile_context>
chip_gen: v7x
topology: tpu7x:2x2x1
jax: 0.10.0
libtpu: 0.0.40
codegen_flags: <defaults>
</compile_context>

<pallas_src>
import math
from functools import partial

import numpy as np

import jax
import jax.numpy as jnp
from jax.experimental import pallas as pl
from jax.experimental.pallas import tpu as pltpu


# --------------------------------------------------------------------------------------
# Kernel
# --------------------------------------------------------------------------------------
def _tranad_kernel(src_ref, tgt_ref, w8_ref, w16_ref, b_ref,
                   c_enc_ref, c_dec_ref, c_kvL_ref, c_kvT_ref,
                   x1_ref, x2_ref,
                   *, n_features, n_windows, batch, tgt_len, d_ff):
    F, L, B, T = n_features, n_windows, batch, tgt_len
    D, H = 2 * F, n_features
    HBL, HBT = H * B * L, H * B * T
    sqrt_f = math.sqrt(F)
    f32 = jnp.float32

    # ---- static lane offsets inside the packed weight / bias slabs -------------------
    ABLK = 4 * D                        # one attention block: [Wq | Wk | Wv | Wo]
    OFF_FFN1 = 5 * ABLK                 # 3x FFN first linear (D, d_ff)
    OFF_FC_W = OFF_FFN1 + 3 * d_ff      # fc weight (D, F)
    OFF_FFN2_B = OFF_FFN1 + 3 * d_ff    # bias slab only: 3x FFN second bias (1, D)
    OFF_FC_B = OFF_FFN2_B + 3 * D       # bias slab only: fc bias (1, F)

    def mha(q_in, kv_in, blk, kv_const_ref, minv_ref, self_attn):
        """Multi-head attention with all (head, batch) segments packed along lanes."""
        base = blk * ABLK
        if self_attn:
            qkv = (jnp.dot(q_in, w8_ref[:, base:base + 3 * D],
                           preferred_element_type=f32)
                   + b_ref[:, base:base + 3 * D])
            q, k, v = qkv[:, 0:D], qkv[:, D:2 * D], qkv[:, 2 * D:3 * D]
        else:
            q = (jnp.dot(q_in, w8_ref[:, base:base + D],
                         preferred_element_type=f32)
                 + b_ref[:, base:base + D])
            kv = (jnp.dot(kv_in, w8_ref[:, base + D:base + 3 * D],
                          preferred_element_type=f32)
                  + b_ref[:, base + D:base + 3 * D])
            k, v = kv[:, 0:D], kv[:, D:2 * D]

        hm = kv_const_ref[:, 0:D]          # (H*B*Lk, D) per-head feature mask
        seg = kv_const_ref[:, D:]          # (H*B*Lk, H*B*Lk) segment-sum matrix
        minv = minv_ref[...]               # (rows, H*B*Lk) 1.0 where cross-batch

        kp = jnp.concatenate([k] * H, axis=0) * hm      # (H*B*Lk, D)
        vp = jnp.concatenate([v] * H, axis=0) * hm

        # all (head, batch) scores in one lane-dense tile; NT dot (no KP.T materialized)
        s = jax.lax.dot_general(q, kp, (((1,), (1,)), ((), ())),
                                preferred_element_type=f32)   # (rows, H*B*Lk)
        s = s - minv * 1e30                                    # kill cross-batch pre-max
        s = s - jnp.max(s, axis=-1, keepdims=True)
        e = jnp.exp(s)
        # segmented softmax denominator; +minv keeps dead (cross-batch) segments at ~1
        denom = jnp.dot(e, seg, preferred_element_type=f32) + minv + 1e-30
        pn = e * pl.reciprocal(denom, approx=True)
        out = jnp.dot(pn, vp, preferred_element_type=f32)      # heads re-concatenated
        return (jnp.dot(out, w8_ref[:, base + 3 * D:base + 4 * D],
                        preferred_element_type=f32)
                + b_ref[:, base + 3 * D:base + 4 * D])

    def ffn(x, m):
        w1 = w8_ref[:, OFF_FFN1 + m * d_ff:OFF_FFN1 + (m + 1) * d_ff]
        b1 = b_ref[:, OFF_FFN1 + m * d_ff:OFF_FFN1 + (m + 1) * d_ff]
        w2 = w16_ref[:, m * D:(m + 1) * D]
        b2 = b_ref[:, OFF_FFN2_B + m * D:OFF_FFN2_B + (m + 1) * D]
        h = jnp.dot(x, w1, preferred_element_type=f32) + b1
        h = jnp.where(h >= 0, h, 0.01 * h)                     # LeakyReLU
        return jnp.dot(h, w2, preferred_element_type=f32) + b2

    def encoder_layer(x, m_enc_ref):
        x = x + mha(x, x, 0, c_kvL_ref, m_enc_ref, True)
        return x + ffn(x, 0)

    def decoder_layer(t, memory, blk_self, blk_cross, fidx, m_self_ref, m_cross_ref):
        t = t + mha(t, t, blk_self, c_kvT_ref, m_self_ref, True)
        t = t + mha(t, memory, blk_cross, c_kvL_ref, m_cross_ref, False)
        return t + ffn(t, fidx)

    def fc(x):
        y = (jnp.dot(x, w8_ref[:, OFF_FC_W:OFF_FC_W + F], preferred_element_type=f32)
             + b_ref[:, OFF_FC_B:OFF_FC_B + F])
        return 1.0 / (1.0 + jnp.exp(-y))                       # sigmoid

    # ---- constant views (ref views -> loads happen at use sites, short live ranges) --
    pe = c_enc_ref[:, 0:D]                                     # (B*L, D)
    m_enc_ref = c_enc_ref.at[:, D:D + HBL]                     # (B*L, HBL)
    m_dself_ref = c_dec_ref.at[:, 0:HBT]                       # (B*T, HBT)
    m_dcross_ref = c_dec_ref.at[:, HBT:HBT + HBL]              # (B*T, HBL)

    # ---- forward: both phases, whole batch packed into the same tiles ----------------
    src = src_ref[...]                      # (B*L, F), rows interleaved (pos, batch)
    tgt = tgt_ref[...]                      # (B*T, F)
    src_s = src * sqrt_f
    tgt_rep = jnp.concatenate([tgt, tgt], axis=-1)   # target.repeat(1,1,2) -> (B*T, D)

    # Phase 1: c = 0
    enc1 = jnp.concatenate([src_s, jnp.zeros_like(src_s)], axis=-1) + pe
    mem1 = encoder_layer(enc1, m_enc_ref)
    x1 = fc(decoder_layer(tgt_rep, mem1, 1, 2, 1, m_dself_ref, m_dcross_ref))  # (B*T, F)

    # Phase 2: c = (x1 - src)**2, broadcast over the window axis (T == 1)
    diff = jnp.concatenate([x1] * L, axis=0) - src             # (B*L, F)
    enc2 = jnp.concatenate([src_s, diff * diff * sqrt_f], axis=-1) + pe
    mem2 = encoder_layer(enc2, m_enc_ref)                       # same encoder weights
    x2 = fc(decoder_layer(tgt_rep, mem2, 3, 4, 2, m_dself_ref, m_dcross_ref))

    x1_ref[...] = x1
    x2_ref[...] = x2


# --------------------------------------------------------------------------------------
# Parameter init (deterministic, synthetic) — packed, pre-transposed (in, out) layout
# --------------------------------------------------------------------------------------
def init_tranad_params(key, n_features, d_ff=16):
    """Packed slabs:
       w8   : (D, 5*4D + 3*d_ff + F)   5 attn blocks [Wq|Wk|Wv|Wo], 3 FFN W1, fc W
       w16  : (d_ff, 3*D)              3 FFN W2
       bias : (1, 5*4D + 3*d_ff + 3*D + F)
       All (in, out) layout; Wq/bq pre-scaled by 1/sqrt(head_dim)."""
    F = n_features
    D, H = 2 * F, n_features
    q_scale = 1.0 / math.sqrt(D // H)

    def linear(k, din, dout):
        kw, kb = jax.random.split(k)
        bound = 1.0 / math.sqrt(din)
        w = jax.random.uniform(kw, (din, dout), jnp.float32, -bound, bound)
        b = jax.random.uniform(kb, (1, dout), jnp.float32, -bound, bound)
        return w, b

    keys = jax.random.split(key, 9)
    w8_parts, b_attn = [], []
    # attention blocks: 0=encoder, 1=dec1 self, 2=dec1 cross, 3=dec2 self, 4=dec2 cross
    for m in range(5):
        kq, kk, kv, ko = jax.random.split(keys[m], 4)
        wq, bq = linear(kq, D, D)
        wk, bk = linear(kk, D, D)
        wv, bv = linear(kv, D, D)
        wo, bo = linear(ko, D, D)
        w8_parts.append(jnp.concatenate([wq * q_scale, wk, wv, wo], axis=1))
        b_attn.append(jnp.concatenate([bq * q_scale, bk, bv, bo], axis=1))
    w16_parts, b_ffn1, b_ffn2 = [], [], []
    # FFNs: 0=encoder, 1=dec1, 2=dec2
    for m in range(3):
        k1, k2 = jax.random.split(keys[5 + m])
        w1, b1 = linear(k1, D, d_ff)
        w2, b2 = linear(k2, d_ff, D)
        w8_parts.append(w1)
        w16_parts.append(w2)
        b_ffn1.append(b1)
        b_ffn2.append(b2)
    fc_w, fc_b = linear(keys[8], D, F)
    return {
        "w8": jnp.concatenate(w8_parts + [fc_w], axis=1),
        "w16": jnp.concatenate(w16_parts, axis=1),
        "bias": jnp.concatenate(b_attn + b_ffn1 + b_ffn2 + [fc_b], axis=1),
    }


# --------------------------------------------------------------------------------------
# Host-side (numpy) constants: PE, head masks, segment matrices, cross-batch masks
# --------------------------------------------------------------------------------------
def _sinusoidal_pe(max_len, d_model):
    pos = np.arange(max_len, dtype=np.float32)[:, None]
    div = np.exp(np.arange(0, d_model, 2, dtype=np.float32)
                 * (-math.log(10000.0) / d_model))
    pe = np.zeros((max_len, d_model), np.float32)
    pe[:, 0::2] = np.sin(pos * div)
    pe[:, 1::2] = np.cos(pos * div)
    return pe


def _build_constants(B, L, T, F):
    """Row layout of activations: row = pos*B + b (interleaved (position, batch)).
       Packed attention columns: col = h*(B*Lk) + kv_row."""
    D, H = 2 * F, F
    hd = D // H

    pe_rows = np.repeat(_sinusoidal_pe(L, D), B, axis=0)        # (B*L, D)

    def col_batch(lk):
        return np.tile(np.tile(np.arange(B), lk), H)            # (H*B*lk,)

    def head_mask(lk):                                          # (H*B*lk, D)
        hm = np.zeros((H * B * lk, D), np.float32)
        for h in range(H):
            hm[h * B * lk:(h + 1) * B * lk, h * hd:(h + 1) * hd] = 1.0
        return hm

    def seg_mat(lk):                                            # (H*B*lk, H*B*lk)
        key = np.repeat(np.arange(H), B * lk) * B + col_batch(lk)
        return (key[:, None] == key[None, :]).astype(np.float32)

    def inv_mask(lq, lk):                                       # (B*lq, H*B*lk)
        rb = np.tile(np.arange(B), lq)
        return (rb[:, None] != col_batch(lk)[None, :]).astype(np.float32)

    c_enc = np.concatenate([pe_rows, inv_mask(L, L)], axis=1)          # (B*L, D+HBL)
    c_dec = np.concatenate([inv_mask(T, T), inv_mask(T, L)], axis=1)   # (B*T, HBT+HBL)
    c_kvL = np.concatenate([head_mask(L), seg_mat(L)], axis=1)         # (HBL, D+HBL)
    c_kvT = np.concatenate([head_mask(T), seg_mat(T)], axis=1)         # (HBT, D+HBT)
    return (jnp.asarray(c_enc), jnp.asarray(c_dec),
            jnp.asarray(c_kvL), jnp.asarray(c_kvT))


# --------------------------------------------------------------------------------------
# Forward (single fused, gridless pallas_call; no host transposes, only free reshapes)
# --------------------------------------------------------------------------------------
def tranad_forward(src, target, params):
    """src: (W, B, F)  target: (T, B, F)  (PyTorch sequence-first layout)."""
    W, B, F = src.shape
    T = target.shape[0]
    assert T == 1, "TranAD uses the last window element as target (T == 1)"
    d_ff = params["w16"].shape[0]

    c_enc, c_dec, c_kvL, c_kvT = _build_constants(B, W, T, F)

    # free reshapes (contiguous), rows interleaved (position, batch)
    src_rows = src.reshape(W * B, F)
    tgt_rows = target.reshape(T * B, F)

    vmem = pl.BlockSpec(memory_space=pltpu.MemorySpace.VMEM)
    x1_rows, x2_rows = pl.pallas_call(
        partial(_tranad_kernel, n_features=F, n_windows=W, batch=B,
                tgt_len=T, d_ff=d_ff),
        out_shape=(jax.ShapeDtypeStruct((T * B, F), jnp.float32),
                   jax.ShapeDtypeStruct((T * B, F), jnp.float32)),
        in_specs=[vmem] * 9,
        out_specs=(vmem, vmem),
    )(src_rows, tgt_rows, params["w8"], params["w16"], params["bias"],
      c_enc, c_dec, c_kvL, c_kvT)

    # free reshapes back to PyTorch layout
    return x1_rows.reshape(T, B, F), x2_rows.reshape(T, B, F)


# --------------------------------------------------------------------------------------
if __name__ == "__main__":
    N_FEATURES = 4          # -> d_model = 8, num_heads = 4, head_dim = 2, d_ff = 16
    N_WINDOWS = 10          # sequence length (module's n_windows)
    BATCH = 2
    T_LEN = 1               # target = last window element, shape (1, B, F)

    key = jax.random.PRNGKey(0)
    k_param, k_src, k_tgt = jax.random.split(key, 3)
    params = init_tranad_params(k_param, N_FEATURES)

    src = jax.random.normal(k_src, (N_WINDOWS, BATCH, N_FEATURES), jnp.float32)
    target = jax.random.normal(k_tgt, (T_LEN, BATCH, N_FEATURES), jnp.float32)

    fwd = jax.jit(lambda s, t: tranad_forward(s, t, params))
    x1, x2 = fwd(src, target)
    jax.block_until_ready((x1, x2))

    assert x1.shape == (T_LEN, BATCH, N_FEATURES)
    assert x2.shape == (T_LEN, BATCH, N_FEATURES)
    assert bool(jnp.all(jnp.isfinite(x1))) and bool(jnp.all(jnp.isfinite(x2)))
    print("KERNEL_OK")
</pallas_src>

<mosaic_0001>
module attributes {stable_mosaic.version = 11 : i64} {
  func.func @_tranad_kernel(%arg0: memref<20x4xf32, #tpu.memory_space<vmem>>, %arg1: memref<2x4xf32, #tpu.memory_space<vmem>>, %arg2: memref<8x212xf32, #tpu.memory_space<vmem>>, %arg3: memref<16x24xf32, #tpu.memory_space<vmem>>, %arg4: memref<1x236xf32, #tpu.memory_space<vmem>>, %arg5: memref<20x88xf32, #tpu.memory_space<vmem>>, %arg6: memref<2x88xf32, #tpu.memory_space<vmem>>, %arg7: memref<80x88xf32, #tpu.memory_space<vmem>>, %arg8: memref<8x16xf32, #tpu.memory_space<vmem>>, %arg9: memref<2x4xf32, #tpu.memory_space<vmem>>, %arg10: memref<2x4xf32, #tpu.memory_space<vmem>>) attributes {dimension_semantics = [], scalar_prefetch = 0 : i64, scratch_operands = 0 : i64, tpu.core_type = #tpu.core_type<tc>} {
    %c0 = arith.constant 0 : index
    %c0_0 = arith.constant 0 : index
    %0 = vector.load %arg5[%c0, %c0_0] : memref<20x88xf32, #tpu.memory_space<vmem>>, vector<20x8xf32>
    %c0_1 = arith.constant 0 : index
    %c0_2 = arith.constant 0 : index
    %1 = vector.load %arg0[%c0_1, %c0_2] : memref<20x4xf32, #tpu.memory_space<vmem>>, vector<20x4xf32>
    %c0_3 = arith.constant 0 : index
    %c0_4 = arith.constant 0 : index
    %2 = vector.load %arg1[%c0_3, %c0_4] : memref<2x4xf32, #tpu.memory_space<vmem>>, vector<2x4xf32>
    %cst = arith.constant 2.000000e+00 : f32
    %3 = vector.broadcast %cst : f32 to vector<20x4xf32>
    %4 = arith.mulf %1, %3 : vector<20x4xf32>
    %5 = tpu.concatenate %2, %2 in 1 : vector<2x4xf32>, vector<2x4xf32> -> vector<2x8xf32>
    %cst_5 = arith.constant 0.000000e+00 : f32
    %6 = vector.broadcast %cst_5 : f32 to vector<20x4xf32>
    %7 = tpu.concatenate %4, %6 in 1 : vector<20x4xf32>, vector<20x4xf32> -> vector<20x8xf32>
    %8 = arith.addf %7, %0 : vector<20x8xf32>
    %c0_6 = arith.constant 0 : index
    %c0_7 = arith.constant 0 : index
    %9 = vector.load %arg2[%c0_6, %c0_7] : memref<8x212xf32, #tpu.memory_space<vmem>>, vector<8x24xf32>
    %cst_8 = arith.constant dense<0.000000e+00> : vector<20x24xf32>
    %10 = tpu.matmul %8, %9, %cst_8 {dimension_numbers = #tpu.dot_dimension_numbers<[1], [0], [0], [1], [0, 0, 1, 1], [], []>} : vector<20x8xf32>, vector<8x24xf32>, vector<20x24xf32> -> vector<20x24xf32>
    %c0_9 = arith.constant 0 : index
    %c0_10 = arith.constant 0 : index
    %11 = vector.load %arg4[%c0_9, %c0_10] : memref<1x236xf32, #tpu.memory_space<vmem>>, vector<1x24xf32>
    %12 = vector.broadcast %11 : vector<1x24xf32> to vector<20x24xf32>
    %13 = arith.addf %10, %12 : vector<20x24xf32>
    %14 = vector.extract_strided_slice %13 {offsets = [0, 0], sizes = [20, 8], strides = [1, 1]} : vector<20x24xf32> to vector<20x8xf32>
    %15 = vector.extract_strided_slice %13 {offsets = [0, 8], sizes = [20, 8], strides = [1, 1]} : vector<20x24xf32> to vector<20x8xf32>
    %16 = vector.extract_strided_slice %13 {offsets = [0, 16], sizes = [20, 8], strides = [1, 1]} : vector<20x24xf32> to vector<20x8xf32>
    %c0_11 = arith.constant 0 : index
    %c0_12 = arith.constant 0 : index
    %17 = vector.load %arg7[%c0_11, %c0_12] : memref<80x88xf32, #tpu.memory_space<vmem>>, vector<80x8xf32>
    %c0_13 = arith.constant 0 : index
    %c8 = arith.constant 8 : index
    %18 = vector.load %arg7[%c0_13, %c8] : memref<80x88xf32, #tpu.memory_space<vmem>>, vector<80x80xf32>
    %c0_14 = arith.constant 0 : index
    %c8_15 = arith.constant 8 : index
    %19 = vector.load %arg5[%c0_14, %c8_15] : memref<20x88xf32, #tpu.memory_space<vmem>>, vector<20x80xf32>
    %20 = tpu.concatenate %15, %15, %15, %15 in 0 : vector<20x8xf32>, vector<20x8xf32>, vector<20x8xf32>, vector<20x8xf32> -> vector<80x8xf32>
    %21 = arith.mulf %20, %17 : vector<80x8xf32>
    %22 = tpu.concatenate %16, %16, %16, %16 in 0 : vector<20x8xf32>, vector<20x8xf32>, vector<20x8xf32>, vector<20x8xf32> -> vector<80x8xf32>
    %23 = arith.mulf %22, %17 : vector<80x8xf32>
    %cst_16 = arith.constant dense<0.000000e+00> : vector<20x80xf32>
    %24 = tpu.matmul %14, %21, %cst_16 {dimension_numbers = #tpu.dot_dimension_numbers<[1], [1], [0], [0], [0, 0, 1, 0], [], []>} : vector<20x8xf32>, vector<80x8xf32>, vector<20x80xf32> -> vector<20x80xf32>
    %cst_17 = arith.constant 1.000000e+30 : f32
    %25 = vector.broadcast %cst_17 : f32 to vector<20x80xf32>
    %26 = arith.mulf %19, %25 : vector<20x80xf32>
    %27 = arith.subf %24, %26 : vector<20x80xf32>
    %cst_18 = arith.constant dense<0xFF800000> : vector<20xf32>
    %28 = vector.multi_reduction <maximumf>, %27, %cst_18 [1] : vector<20x80xf32> to vector<20xf32>
    %29 = vector.shape_cast %28 : vector<20xf32> to vector<20x1xf32>
    %30 = vector.broadcast %29 : vector<20x1xf32> to vector<20x80xf32>
    %31 = arith.subf %27, %30 : vector<20x80xf32>
    %32 = math.exp %31 : vector<20x80xf32>
    %cst_19 = arith.constant dense<0.000000e+00> : vector<20x80xf32>
    %33 = tpu.matmul %32, %18, %cst_19 {dimension_numbers = #tpu.dot_dimension_numbers<[1], [0], [0], [1], [0, 0, 1, 1], [], []>} : vector<20x80xf32>, vector<80x80xf32>, vector<20x80xf32> -> vector<20x80xf32>
    %34 = arith.addf %33, %19 : vector<20x80xf32>
    %cst_20 = arith.constant 1.000000e-30 : f32
    %35 = vector.broadcast %cst_20 : f32 to vector<20x80xf32>
    %36 = arith.addf %34, %35 : vector<20x80xf32>
    %37 = tpu.reciprocal %36 {approx = true} : vector<20x80xf32> -> vector<20x80xf32>
    %38 = arith.mulf %32, %37 : vector<20x80xf32>
    %cst_21 = arith.constant dense<0.000000e+00> : vector<20x8xf32>
    %39 = tpu.matmul %38, %23, %cst_21 {dimension_numbers = #tpu.dot_dimension_numbers<[1], [0], [0], [1], [0, 0, 1, 1], [], []>} : vector<20x80xf32>, vector<80x8xf32>, vector<20x8xf32> -> vector<20x8xf32>
    %c0_22 = arith.constant 0 : index
    %c24 = arith.constant 24 : index
    %40 = vector.load %arg2[%c0_22, %c24] : memref<8x212xf32, #tpu.memory_space<vmem>>, vector<8x8xf32>
    %cst_23 = arith.constant dense<0.000000e+00> : vector<20x8xf32>
    %41 = tpu.matmul %39, %40, %cst_23 {dimension_numbers = #tpu.dot_dimension_numbers<[1], [0], [0], [1], [0, 0, 1, 1], [], []>} : vector<20x8xf32>, vector<8x8xf32>, vector<20x8xf32> -> vector<20x8xf32>
    %c0_24 = arith.constant 0 : index
    %c24_25 = arith.constant 24 : index
    %42 = vector.load %arg4[%c0_24, %c24_25] : memref<1x236xf32, #tpu.memory_space<vmem>>, vector<1x8xf32>
    %43 = vector.broadcast %42 : vector<1x8xf32> to vector<20x8xf32>
    %44 = arith.addf %41, %43 : vector<20x8xf32>
    %45 = arith.addf %8, %44 : vector<20x8xf32>
    %c0_26 = arith.constant 0 : index
    %c160 = arith.constant 160 : index
    %46 = vector.load %arg2[%c0_26, %c160] : memref<8x212xf32, #tpu.memory_space<vmem>>, vector<8x16xf32>
    %c0_27 = arith.constant 0 : index
    %c160_28 = arith.constant 160 : index
    %47 = vector.load %arg4[%c0_27, %c160_28] : memref<1x236xf32, #tpu.memory_space<vmem>>, vector<1x16xf32>
    %c0_29 = arith.constant 0 : index
    %c0_30 = arith.constant 0 : index
    %48 = vector.load %arg3[%c0_29, %c0_30] : memref<16x24xf32, #tpu.memory_space<vmem>>, vector<16x8xf32>
    %c0_31 = arith.constant 0 : index
    %c208 = arith.constant 208 : index
    %49 = vector.load %arg4[%c0_31, %c208] : memref<1x236xf32, #tpu.memory_space<vmem>>, vector<1x8xf32>
    %cst_32 = arith.constant dense<0.000000e+00> : vector<20x16xf32>
    %50 = tpu.matmul %45, %46, %cst_32 {dimension_numbers = #tpu.dot_dimension_numbers<[1], [0], [0], [1], [0, 0, 1, 1], [], []>} : vector<20x8xf32>, vector<8x16xf32>, vector<20x16xf32> -> vector<20x16xf32>
    %51 = vector.broadcast %47 : vector<1x16xf32> to vector<20x16xf32>
    %52 = arith.addf %50, %51 : vector<20x16xf32>
    %cst_33 = arith.constant 0.000000e+00 : f32
    %53 = vector.broadcast %cst_33 : f32 to vector<20x16xf32>
    %54 = arith.cmpf oge, %52, %53 : vector<20x16xf32>
    %cst_34 = arith.constant 0.00999999977 : f32
    %55 = vector.broadcast %cst_34 : f32 to vector<20x16xf32>
    %56 = arith.mulf %55, %52 : vector<20x16xf32>
    %57 = arith.select %54, %52, %56 : vector<20x16xi1>, vector<20x16xf32>
    %cst_35 = arith.constant dense<0.000000e+00> : vector<20x8xf32>
    %58 = tpu.matmul %57, %48, %cst_35 {dimension_numbers = #tpu.dot_dimension_numbers<[1], [0], [0], [1], [0, 0, 1, 1], [], []>} : vector<20x16xf32>, vector<16x8xf32>, vector<20x8xf32> -> vector<20x8xf32>
    %59 = vector.broadcast %49 : vector<1x8xf32> to vector<20x8xf32>
    %60 = arith.addf %58, %59 : vector<20x8xf32>
    %61 = arith.addf %45, %60 : vector<20x8xf32>
    %c0_36 = arith.constant 0 : index
    %c32 = arith.constant 32 : index
    %62 = vector.load %arg2[%c0_36, %c32] : memref<8x212xf32, #tpu.memory_space<vmem>>, vector<8x24xf32>
    %cst_37 = arith.constant dense<0.000000e+00> : vector<2x24xf32>
    %63 = tpu.matmul %5, %62, %cst_37 {dimension_numbers = #tpu.dot_dimension_numbers<[1], [0], [0], [1], [0, 0, 1, 1], [], []>} : vector<2x8xf32>, vector<8x24xf32>, vector<2x24xf32> -> vector<2x24xf32>
    %c0_38 = arith.constant 0 : index
    %c32_39 = arith.constant 32 : index
    %64 = vector.load %arg4[%c0_38, %c32_39] : memref<1x236xf32, #tpu.memory_space<vmem>>, vector<1x24xf32>
    %65 = vector.broadcast %64 : vector<1x24xf32> to vector<2x24xf32>
    %66 = arith.addf %63, %65 : vector<2x24xf32>
    %67 = vector.extract_strided_slice %66 {offsets = [0, 0], sizes = [2, 8], strides = [1, 1]} : vector<2x24xf32> to vector<2x8xf32>
    %68 = vector.extract_strided_slice %66 {offsets = [0, 8], sizes = [2, 8], strides = [1, 1]} : vector<2x24xf32> to vector<2x8xf32>
    %69 = vector.extract_strided_slice %66 {offsets = [0, 16], sizes = [2, 8], strides = [1, 1]} : vector<2x24xf32> to vector<2x8xf32>
    %c0_40 = arith.constant 0 : index
    %c0_41 = arith.constant 0 : index
    %70 = vector.load %arg8[%c0_40, %c0_41] : memref<8x16xf32, #tpu.memory_space<vmem>>, vector<8x8xf32>
    %c0_42 = arith.constant 0 : index
    %c8_43 = arith.constant 8 : index
    %71 = vector.load %arg8[%c0_42, %c8_43] : memref<8x16xf32, #tpu.memory_space<vmem>>, vector<8x8xf32>
    %c0_44 = arith.constant 0 : index
    %c0_45 = arith.constant 0 : index
    %72 = vector.load %arg6[%c0_44, %c0_45] : memref<2x88xf32, #tpu.memory_space<vmem>>, vector<2x8xf32>
    %73 = tpu.concatenate %68, %68, %68, %68 in 0 : vector<2x8xf32>, vector<2x8xf32>, vector<2x8xf32>, vector<2x8xf32> -> vector<8x8xf32>
    %74 = arith.mulf %73, %70 : vector<8x8xf32>
    %75 = tpu.concatenate %69, %69, %69, %69 in 0 : vector<2x8xf32>, vector<2x8xf32>, vector<2x8xf32>, vector<2x8xf32> -> vector<8x8xf32>
    %76 = arith.mulf %75, %70 : vector<8x8xf32>
    %cst_46 = arith.constant dense<0.000000e+00> : vector<2x8xf32>
    %77 = tpu.matmul %67, %74, %cst_46 {dimension_numbers = #tpu.dot_dimension_numbers<[1], [1], [0], [0], [0, 0, 1, 0], [], []>} : vector<2x8xf32>, vector<8x8xf32>, vector<2x8xf32> -> vector<2x8xf32>
    %cst_47 = arith.constant 1.000000e+30 : f32
    %78 = vector.broadcast %cst_47 : f32 to vector<2x8xf32>
    %79 = arith.mulf %72, %78 : vector<2x8xf32>
    %80 = arith.subf %77, %79 : vector<2x8xf32>
    %cst_48 = arith.constant dense<0xFF800000> : vector<2xf32>
    %81 = vector.multi_reduction <maximumf>, %80, %cst_48 [1] : vector<2x8xf32> to vector<2xf32>
    %82 = vector.shape_cast %81 : vector<2xf32> to vector<2x1xf32>
    %83 = vector.broadcast %82 : vector<2x1xf32> to vector<2x8xf32>
    %84 = arith.subf %80, %83 : vector<2x8xf32>
    %85 = math.exp %84 : vector<2x8xf32>
    %cst_49 = arith.constant dense<0.000000e+00> : vector<2x8xf32>
    %86 = tpu.matmul %85, %71, %cst_49 {dimension_numbers = #tpu.dot_dimension_numbers<[1], [0], [0], [1], [0, 0, 1, 1], [], []>} : vector<2x8xf32>, vector<8x8xf32>, vector<2x8xf32> -> vector<2x8xf32>
    %87 = arith.addf %86, %72 : vector<2x8xf32>
    %cst_50 = arith.constant 1.000000e-30 : f32
    %88 = vector.broadcast %cst_50 : f32 to vector<2x8xf32>
    %89 = arith.addf %87, %88 : vector<2x8xf32>
    %90 = tpu.reciprocal %89 {approx = true} : vector<2x8xf32> -> vector<2x8xf32>
    %91 = arith.mulf %85, %90 : vector<2x8xf32>
    %cst_51 = arith.constant dense<0.000000e+00> : vector<2x8xf32>
    %92 = tpu.matmul %91, %76, %cst_51 {dimension_numbers = #tpu.dot_dimension_numbers<[1], [0], [0], [1], [0, 0, 1, 1], [], []>} : vector<2x8xf32>, vector<8x8xf32>, vector<2x8xf32> -> vector<2x8xf32>
    %c0_52 = arith.constant 0 : index
    %c56 = arith.constant 56 : index
    %93 = vector.load %arg2[%c0_52, %c56] : memref<8x212xf32, #tpu.memory_space<vmem>>, vector<8x8xf32>
    %cst_53 = arith.constant dense<0.000000e+00> : vector<2x8xf32>
    %94 = tpu.matmul %92, %93, %cst_53 {dimension_numbers = #tpu.dot_dimension_numbers<[1], [0], [0], [1], [0, 0, 1, 1], [], []>} : vector<2x8xf32>, vector<8x8xf32>, vector<2x8xf32> -> vector<2x8xf32>
    %c0_54 = arith.constant 0 : index
    %c56_55 = arith.constant 56 : index
    %95 = vector.load %arg4[%c0_54, %c56_55] : memref<1x236xf32, #tpu.memory_space<vmem>>, vector<1x8xf32>
    %96 = vector.broadcast %95 : vector<1x8xf32> to vector<2x8xf32>
    %97 = arith.addf %94, %96 : vector<2x8xf32>
    %98 = arith.addf %5, %97 : vector<2x8xf32>
    %c0_56 = arith.constant 0 : index
    %c64 = arith.constant 64 : index
    %99 = vector.load %arg2[%c0_56, %c64] : memref<8x212xf32, #tpu.memory_space<vmem>>, vector<8x8xf32>
    %cst_57 = arith.constant dense<0.000000e+00> : vector<2x8xf32>
    %100 = tpu.matmul %98, %99, %cst_57 {dimension_numbers = #tpu.dot_dimension_numbers<[1], [0], [0], [1], [0, 0, 1, 1], [], []>} : vector<2x8xf32>, vector<8x8xf32>, vector<2x8xf32> -> vector<2x8xf32>
    %c0_58 = arith.constant 0 : index
    %c64_59 = arith.constant 64 : index
    %101 = vector.load %arg4[%c0_58, %c64_59] : memref<1x236xf32, #tpu.memory_space<vmem>>, vector<1x8xf32>
    %102 = vector.broadcast %101 : vector<1x8xf32> to vector<2x8xf32>
    %103 = arith.addf %100, %102 : vector<2x8xf32>
    %c0_60 = arith.constant 0 : index
    %c72 = arith.constant 72 : index
    %104 = vector.load %arg2[%c0_60, %c72] : memref<8x212xf32, #tpu.memory_space<vmem>>, vector<8x16xf32>
    %cst_61 = arith.constant dense<0.000000e+00> : vector<20x16xf32>
    %105 = tpu.matmul %61, %104, %cst_61 {dimension_numbers = #tpu.dot_dimension_numbers<[1], [0], [0], [1], [0, 0, 1, 1], [], []>} : vector<20x8xf32>, vector<8x16xf32>, vector<20x16xf32> -> vector<20x16xf32>
    %c0_62 = arith.constant 0 : index
    %c72_63 = arith.constant 72 : index
    %106 = vector.load %arg4[%c0_62, %c72_63] : memref<1x236xf32, #tpu.memory_space<vmem>>, vector<1x16xf32>
    %107 = vector.broadcast %106 : vector<1x16xf32> to vector<20x16xf32>
    %108 = arith.addf %105, %107 : vector<20x16xf32>
    %109 = vector.extract_strided_slice %108 {offsets = [0, 0], sizes = [20, 8], strides = [1, 1]} : vector<20x16xf32> to vector<20x8xf32>
    %110 = vector.extract_strided_slice %108 {offsets = [0, 8], sizes = [20, 8], strides = [1, 1]} : vector<20x16xf32> to vector<20x8xf32>
    %c0_64 = arith.constant 0 : index
    %c0_65 = arith.constant 0 : index
    %111 = vector.load %arg7[%c0_64, %c0_65] : memref<80x88xf32, #tpu.memory_space<vmem>>, vector<80x8xf32>
    %c0_66 = arith.constant 0 : index
    %c8_67 = arith.constant 8 : index
    %112 = vector.load %arg7[%c0_66, %c8_67] : memref<80x88xf32, #tpu.memory_space<vmem>>, vector<80x80xf32>
    %c0_68 = arith.constant 0 : index
    %c8_69 = arith.constant 8 : index
    %113 = vector.load %arg6[%c0_68, %c8_69] : memref<2x88xf32, #tpu.memory_space<vmem>>, vector<2x80xf32>
    %114 = tpu.concatenate %109, %109, %109, %109 in 0 : vector<20x8xf32>, vector<20x8xf32>, vector<20x8xf32>, vector<20x8xf32> -> vector<80x8xf32>
    %115 = arith.mulf %114, %111 : vector<80x8xf32>
    %116 = tpu.concatenate %110, %110, %110, %110 in 0 : vector<20x8xf32>, vector<20x8xf32>, vector<20x8xf32>, vector<20x8xf32> -> vector<80x8xf32>
    %117 = arith.mulf %116, %111 : vector<80x8xf32>
    %cst_70 = arith.constant dense<0.000000e+00> : vector<2x80xf32>
    %118 = tpu.matmul %103, %115, %cst_70 {dimension_numbers = #tpu.dot_dimension_numbers<[1], [1], [0], [0], [0, 0, 1, 0], [], []>} : vector<2x8xf32>, vector<80x8xf32>, vector<2x80xf32> -> vector<2x80xf32>
    %cst_71 = arith.constant 1.000000e+30 : f32
    %119 = vector.broadcast %cst_71 : f32 to vector<2x80xf32>
    %120 = arith.mulf %113, %119 : vector<2x80xf32>
    %121 = arith.subf %118, %120 : vector<2x80xf32>
    %cst_72 = arith.constant dense<0xFF800000> : vector<2xf32>
    %122 = vector.multi_reduction <maximumf>, %121, %cst_72 [1] : vector<2x80xf32> to vector<2xf32>
    %123 = vector.shape_cast %122 : vector<2xf32> to vector<2x1xf32>
    %124 = vector.broadcast %123 : vector<2x1xf32> to vector<2x80xf32>
    %125 = arith.subf %121, %124 : vector<2x80xf32>
    %126 = math.exp %125 : vector<2x80xf32>
    %cst_73 = arith.constant dense<0.000000e+00> : vector<2x80xf32>
    %127 = tpu.matmul %126, %112, %cst_73 {dimension_numbers = #tpu.dot_dimension_numbers<[1], [0], [0], [1], [0, 0, 1, 1], [], []>} : vector<2x80xf32>, vector<80x80xf32>, vector<2x80xf32> -> vector<2x80xf32>
    %128 = arith.addf %127, %113 : vector<2x80xf32>
    %cst_74 = arith.constant 1.000000e-30 : f32
    %129 = vector.broadcast %cst_74 : f32 to vector<2x80xf32>
    %130 = arith.addf %128, %129 : vector<2x80xf32>
    %131 = tpu.reciprocal %130 {approx = true} : vector<2x80xf32> -> vector<2x80xf32>
    %132 = arith.mulf %126, %131 : vector<2x80xf32>
    %cst_75 = arith.constant dense<0.000000e+00> : vector<2x8xf32>
    %133 = tpu.matmul %132, %117, %cst_75 {dimension_numbers = #tpu.dot_dimension_numbers<[1], [0], [0], [1], [0, 0, 1, 1], [], []>} : vector<2x80xf32>, vector<80x8xf32>, vector<2x8xf32> -> vector<2x8xf32>
    %c0_76 = arith.constant 0 : index
    %c88 = arith.constant 88 : index
    %134 = vector.load %arg2[%c0_76, %c88] : memref<8x212xf32, #tpu.memory_space<vmem>>, vector<8x8xf32>
    %cst_77 = arith.constant dense<0.000000e+00> : vector<2x8xf32>
    %135 = tpu.matmul %133, %134, %cst_77 {dimension_numbers = #tpu.dot_dimension_numbers<[1], [0], [0], [1], [0, 0, 1, 1], [], []>} : vector<2x8xf32>, vector<8x8xf32>, vector<2x8xf32> -> vector<2x8xf32>
    %c0_78 = arith.constant 0 : index
    %c88_79 = arith.constant 88 : index
    %136 = vector.load %arg4[%c0_78, %c88_79] : memref<1x236xf32, #tpu.memory_space<vmem>>, vector<1x8xf32>
    %137 = vector.broadcast %136 : vector<1x8xf32> to vector<2x8xf32>
    %138 = arith.addf %135, %137 : vector<2x8xf32>
    %139 = arith.addf %98, %138 : vector<2x8xf32>
    %c0_80 = arith.constant 0 : index
    %c176 = arith.constant 176 : index
    %140 = vector.load %arg2[%c0_80, %c176] : memref<8x212xf32, #tpu.memory_space<vmem>>, vector<8x16xf32>
    %c0_81 = arith.constant 0 : index
    %c176_82 = arith.constant 176 : index
    %141 = vector.load %arg4[%c0_81, %c176_82] : memref<1x236xf32, #tpu.memory_space<vmem>>, vector<1x16xf32>
    %c0_83 = arith.constant 0 : index
    %c8_84 = arith.constant 8 : index
    %142 = vector.load %arg3[%c0_83, %c8_84] : memref<16x24xf32, #tpu.memory_space<vmem>>, vector<16x8xf32>
    %c0_85 = arith.constant 0 : index
    %c216 = arith.constant 216 : index
    %143 = vector.load %arg4[%c0_85, %c216] : memref<1x236xf32, #tpu.memory_space<vmem>>, vector<1x8xf32>
    %cst_86 = arith.constant dense<0.000000e+00> : vector<2x16xf32>
    %144 = tpu.matmul %139, %140, %cst_86 {dimension_numbers = #tpu.dot_dimension_numbers<[1], [0], [0], [1], [0, 0, 1, 1], [], []>} : vector<2x8xf32>, vector<8x16xf32>, vector<2x16xf32> -> vector<2x16xf32>
    %145 = vector.broadcast %141 : vector<1x16xf32> to vector<2x16xf32>
    %146 = arith.addf %144, %145 : vector<2x16xf32>
    %cst_87 = arith.constant 0.000000e+00 : f32
    %147 = vector.broadcast %cst_87 : f32 to vector<2x16xf32>
    %148 = arith.cmpf oge, %146, %147 : vector<2x16xf32>
    %cst_88 = arith.constant 0.00999999977 : f32
    %149 = vector.broadcast %cst_88 : f32 to vector<2x16xf32>
    %150 = arith.mulf %149, %146 : vector<2x16xf32>
    %151 = arith.select %148, %146, %150 : vector<2x16xi1>, vector<2x16xf32>
    %cst_89 = arith.constant dense<0.000000e+00> : vector<2x8xf32>
    %152 = tpu.matmul %151, %142, %cst_89 {dimension_numbers = #tpu.dot_dimension_numbers<[1], [0], [0], [1], [0, 0, 1, 1], [], []>} : vector<2x16xf32>, vector<16x8xf32>, vector<2x8xf32> -> vector<2x8xf32>
    %153 = vector.broadcast %143 : vector<1x8xf32> to vector<2x8xf32>
    %154 = arith.addf %152, %153 : vector<2x8xf32>
    %155 = arith.addf %139, %154 : vector<2x8xf32>
    %c0_90 = arith.constant 0 : index
    %c208_91 = arith.constant 208 : index
    %156 = vector.load %arg2[%c0_90, %c208_91] : memref<8x212xf32, #tpu.memory_space<vmem>>, vector<8x4xf32>
    %cst_92 = arith.constant dense<0.000000e+00> : vector<2x4xf32>
    %157 = tpu.matmul %155, %156, %cst_92 {dimension_numbers = #tpu.dot_dimension_numbers<[1], [0], [0], [1], [0, 0, 1, 1], [], []>} : vector<2x8xf32>, vector<8x4xf32>, vector<2x4xf32> -> vector<2x4xf32>
    %c0_93 = arith.constant 0 : index
    %c232 = arith.constant 232 : index
    %158 = vector.load %arg4[%c0_93, %c232] : memref<1x236xf32, #tpu.memory_space<vmem>>, vector<1x4xf32>
    %159 = vector.broadcast %158 : vector<1x4xf32> to vector<2x4xf32>
    %160 = arith.addf %157, %159 : vector<2x4xf32>
    %cst_94 = arith.constant 0.000000e+00 : f32
    %161 = vector.broadcast %cst_94 : f32 to vector<2x4xf32>
    %162 = arith.subf %161, %160 : vector<2x4xf32>
    %163 = math.exp %162 : vector<2x4xf32>
    %cst_95 = arith.constant 1.000000e+00 : f32
    %164 = vector.broadcast %cst_95 : f32 to vector<2x4xf32>
    %165 = arith.addf %164, %163 : vector<2x4xf32>
    %cst_96 = arith.constant 1.000000e+00 : f32
    %166 = vector.broadcast %cst_96 : f32 to vector<2x4xf32>
    %167 = arith.divf %166, %165 : vector<2x4xf32>
    %168 = tpu.concatenate %167, %167, %167, %167, %167, %167, %167, %167, %167, %167 in 0 : vector<2x4xf32>, vector<2x4xf32>, vector<2x4xf32>, vector<2x4xf32>, vector<2x4xf32>, vector<2x4xf32>, vector<2x4xf32>, vector<2x4xf32>, vector<2x4xf32>, vector<2x4xf32> -> vector<20x4xf32>
    %169 = arith.subf %168, %1 : vector<20x4xf32>
    %170 = arith.mulf %169, %169 : vector<20x4xf32>
    %cst_97 = arith.constant 2.000000e+00 : f32
    %171 = vector.broadcast %cst_97 : f32 to vector<20x4xf32>
    %172 = arith.mulf %170, %171 : vector<20x4xf32>
    %173 = tpu.concatenate %4, %172 in 1 : vector<20x4xf32>, vector<20x4xf32> -> vector<20x8xf32>
    %174 = arith.addf %173, %0 : vector<20x8xf32>
    %c0_98 = arith.constant 0 : index
    %c0_99 = arith.constant 0 : index
    %175 = vector.load %arg2[%c0_98, %c0_99] : memref<8x212xf32, #tpu.memory_space<vmem>>, vector<8x24xf32>
    %cst_100 = arith.constant dense<0.000000e+00> : vector<20x24xf32>
    %176 = tpu.matmul %174, %175, %cst_100 {dimension_numbers = #tpu.dot_dimension_numbers<[1], [0], [0], [1], [0, 0, 1, 1], [], []>} : vector<20x8xf32>, vector<8x24xf32>, vector<20x24xf32> -> vector<20x24xf32>
    %c0_101 = arith.constant 0 : index
    %c0_102 = arith.constant 0 : index
    %177 = vector.load %arg4[%c0_101, %c0_102] : memref<1x236xf32, #tpu.memory_space<vmem>>, vector<1x24xf32>
    %178 = vector.broadcast %177 : vector<1x24xf32> to vector<20x24xf32>
    %179 = arith.addf %176, %178 : vector<20x24xf32>
    %180 = vector.extract_strided_slice %179 {offsets = [0, 0], sizes = [20, 8], strides = [1, 1]} : vector<20x24xf32> to vector<20x8xf32>
    %181 = vector.extract_strided_slice %179 {offsets = [0, 8], sizes = [20, 8], strides = [1, 1]} : vector<20x24xf32> to vector<20x8xf32>
    %182 = vector.extract_strided_slice %179 {offsets = [0, 16], sizes = [20, 8], strides = [1, 1]} : vector<20x24xf32> to vector<20x8xf32>
    %c0_103 = arith.constant 0 : index
    %c0_104 = arith.constant 0 : index
    %183 = vector.load %arg7[%c0_103, %c0_104] : memref<80x88xf32, #tpu.memory_space<vmem>>, vector<80x8xf32>
    %c0_105 = arith.constant 0 : index
    %c8_106 = arith.constant 8 : index
    %184 = vector.load %arg7[%c0_105, %c8_106] : memref<80x88xf32, #tpu.memory_space<vmem>>, vector<80x80xf32>
    %c0_107 = arith.constant 0 : index
    %c8_108 = arith.constant 8 : index
    %185 = vector.load %arg5[%c0_107, %c8_108] : memref<20x88xf32, #tpu.memory_space<vmem>>, vector<20x80xf32>
    %186 = tpu.concatenate %181, %181, %181, %181 in 0 : vector<20x8xf32>, vector<20x8xf32>, vector<20x8xf32>, vector<20x8xf32> -> vector<80x8xf32>
    %187 = arith.mulf %186, %183 : vector<80x8xf32>
    %188 = tpu.concatenate %182, %182, %182, %182 in 0 : vector<20x8xf32>, vector<20x8xf32>, vector<20x8xf32>, vector<20x8xf32> -> vector<80x8xf32>
    %189 = arith.mulf %188, %183 : vector<80x8xf32>
    %cst_109 = arith.constant dense<0.000000e+00> : vector<20x80xf32>
    %190 = tpu.matmul %180, %187, %cst_109 {dimension_numbers = #tpu.dot_dimension_numbers<[1], [1], [0], [0], [0, 0, 1, 0], [], []>} : vector<20x8xf32>, vector<80x8xf32>, vector<20x80xf32> -> vector<20x80xf32>
    %cst_110 = arith.constant 1.000000e+30 : f32
    %191 = vector.broadcast %cst_110 : f32 to vector<20x80xf32>
    %192 = arith.mulf %185, %191 : vector<20x80xf32>
    %193 = arith.subf %190, %192 : vector<20x80xf32>
    %cst_111 = arith.constant dense<0xFF800000> : vector<20xf32>
    %194 = vector.multi_reduction <maximumf>, %193, %cst_111 [1] : vector<20x80xf32> to vector<20xf32>
    %195 = vector.shape_cast %194 : vector<20xf32> to vector<20x1xf32>
    %196 = vector.broadcast %195 : vector<20x1xf32> to vector<20x80xf32>
    %197 = arith.subf %193, %196 : vector<20x80xf32>
    %198 = math.exp %197 : vector<20x80xf32>
    %cst_112 = arith.constant dense<0.000000e+00> : vector<20x80xf32>
    %199 = tpu.matmul %198, %184, %cst_112 {dimension_numbers = #tpu.dot_dimension_numbers<[1], [0], [0], [1], [0, 0, 1, 1], [], []>} : vector<20x80xf32>, vector<80x80xf32>, vector<20x80xf32> -> vector<20x80xf32>
    %200 = arith.addf %199, %185 : vector<20x80xf32>
    %cst_113 = arith.constant 1.000000e-30 : f32
    %201 = vector.broadcast %cst_113 : f32 to vector<20x80xf32>
    %202 = arith.addf %200, %201 : vector<20x80xf32>
    %203 = tpu.reciprocal %202 {approx = true} : vector<20x80xf32> -> vector<20x80xf32>
    %204 = arith.mulf %198, %203 : vector<20x80xf32>
    %cst_114 = arith.constant dense<0.000000e+00> : vector<20x8xf32>
    %205 = tpu.matmul %204, %189, %cst_114 {dimension_numbers = #tpu.dot_dimension_numbers<[1], [0], [0], [1], [0, 0, 1, 1], [], []>} : vector<20x80xf32>, vector<80x8xf32>, vector<20x8xf32> -> vector<20x8xf32>
    %c0_115 = arith.constant 0 : index
    %c24_116 = arith.constant 24 : index
    %206 = vector.load %arg2[%c0_115, %c24_116] : memref<8x212xf32, #tpu.memory_space<vmem>>, vector<8x8xf32>
    %cst_117 = arith.constant dense<0.000000e+00> : vector<20x8xf32>
    %207 = tpu.matmul %205, %206, %cst_117 {dimension_numbers = #tpu.dot_dimension_numbers<[1], [0], [0], [1], [0, 0, 1, 1], [], []>} : vector<20x8xf32>, vector<8x8xf32>, vector<20x8xf32> -> vector<20x8xf32>
    %c0_118 = arith.constant 0 : index
    %c24_119 = arith.constant 24 : index
    %208 = vector.load %arg4[%c0_118, %c24_119] : memref<1x236xf32, #tpu.memory_space<vmem>>, vector<1x8xf32>
    %209 = vector.broadcast %208 : vector<1x8xf32> to vector<20x8xf32>
    %210 = arith.addf %207, %209 : vector<20x8xf32>
    %211 = arith.addf %174, %210 : vector<20x8xf32>
    %c0_120 = arith.constant 0 : index
    %c160_121 = arith.constant 160 : index
    %212 = vector.load %arg2[%c0_120, %c160_121] : memref<8x212xf32, #tpu.memory_space<vmem>>, vector<8x16xf32>
    %c0_122 = arith.constant 0 : index
    %c160_123 = arith.constant 160 : index
    %213 = vector.load %arg4[%c0_122, %c160_123] : memref<1x236xf32, #tpu.memory_space<vmem>>, vector<1x16xf32>
    %c0_124 = arith.constant 0 : index
    %c0_125 = arith.constant 0 : index
    %214 = vector.load %arg3[%c0_124, %c0_125] : memref<16x24xf32, #tpu.memory_space<vmem>>, vector<16x8xf32>
    %c0_126 = arith.constant 0 : index
    %c208_127 = arith.constant 208 : index
    %215 = vector.load %arg4[%c0_126, %c208_127] : memref<1x236xf32, #tpu.memory_space<vmem>>, vector<1x8xf32>
    %cst_128 = arith.constant dense<0.000000e+00> : vector<20x16xf32>
    %216 = tpu.matmul %211, %212, %cst_128 {dimension_numbers = #tpu.dot_dimension_numbers<[1], [0], [0], [1], [0, 0, 1, 1], [], []>} : vector<20x8xf32>, vector<8x16xf32>, vector<20x16xf32> -> vector<20x16xf32>
    %217 = vector.broadcast %213 : vector<1x16xf32> to vector<20x16xf32>
    %218 = arith.addf %216, %217 : vector<20x16xf32>
    %cst_129 = arith.constant 0.000000e+00 : f32
    %219 = vector.broadcast %cst_129 : f32 to vector<20x16xf32>
    %220 = arith.cmpf oge, %218, %219 : vector<20x16xf32>
    %cst_130 = arith.constant 0.00999999977 : f32
    %221 = vector.broadcast %cst_130 : f32 to vector<20x16xf32>
    %222 = arith.mulf %221, %218 : vector<20x16xf32>
    %223 = arith.select %220, %218, %222 : vector<20x16xi1>, vector<20x16xf32>
    %cst_131 = arith.constant dense<0.000000e+00> : vector<20x8xf32>
    %224 = tpu.matmul %223, %214, %cst_131 {dimension_numbers = #tpu.dot_dimension_numbers<[1], [0], [0], [1], [0, 0, 1, 1], [], []>} : vector<20x16xf32>, vector<16x8xf32>, vector<20x8xf32> -> vector<20x8xf32>
    %225 = vector.broadcast %215 : vector<1x8xf32> to vector<20x8xf32>
    %226 = arith.addf %224, %225 : vector<20x8xf32>
    %227 = arith.addf %211, %226 : vector<20x8xf32>
    %c0_132 = arith.constant 0 : index
    %c96 = arith.constant 96 : index
    %228 = vector.load %arg2[%c0_132, %c96] : memref<8x212xf32, #tpu.memory_space<vmem>>, vector<8x24xf32>
    %cst_133 = arith.constant dense<0.000000e+00> : vector<2x24xf32>
    %229 = tpu.matmul %5, %228, %cst_133 {dimension_numbers = #tpu.dot_dimension_numbers<[1], [0], [0], [1], [0, 0, 1, 1], [], []>} : vector<2x8xf32>, vector<8x24xf32>, vector<2x24xf32> -> vector<2x24xf32>
    %c0_134 = arith.constant 0 : index
    %c96_135 = arith.constant 96 : index
    %230 = vector.load %arg4[%c0_134, %c96_135] : memref<1x236xf32, #tpu.memory_space<vmem>>, vector<1x24xf32>
    %231 = vector.broadcast %230 : vector<1x24xf32> to vector<2x24xf32>
    %232 = arith.addf %229, %231 : vector<2x24xf32>
    %233 = vector.extract_strided_slice %232 {offsets = [0, 0], sizes = [2, 8], strides = [1, 1]} : vector<2x24xf32> to vector<2x8xf32>
    %234 = vector.extract_strided_slice %232 {offsets = [0, 8], sizes = [2, 8], strides = [1, 1]} : vector<2x24xf32> to vector<2x8xf32>
    %235 = vector.extract_strided_slice %232 {offsets = [0, 16], sizes = [2, 8], strides = [1, 1]} : vector<2x24xf32> to vector<2x8xf32>
    %c0_136 = arith.constant 0 : index
    %c0_137 = arith.constant 0 : index
    %236 = vector.load %arg8[%c0_136, %c0_137] : memref<8x16xf32, #tpu.memory_space<vmem>>, vector<8x8xf32>
    %c0_138 = arith.constant 0 : index
    %c8_139 = arith.constant 8 : index
    %237 = vector.load %arg8[%c0_138, %c8_139] : memref<8x16xf32, #tpu.memory_space<vmem>>, vector<8x8xf32>
    %c0_140 = arith.constant 0 : index
    %c0_141 = arith.constant 0 : index
    %238 = vector.load %arg6[%c0_140, %c0_141] : memref<2x88xf32, #tpu.memory_space<vmem>>, vector<2x8xf32>
    %239 = tpu.concatenate %234, %234, %234, %234 in 0 : vector<2x8xf32>, vector<2x8xf32>, vector<2x8xf32>, vector<2x8xf32> -> vector<8x8xf32>
    %240 = arith.mulf %239, %236 : vector<8x8xf32>
    %241 = tpu.concatenate %235, %235, %235, %235 in 0 : vector<2x8xf32>, vector<2x8xf32>, vector<2x8xf32>, vector<2x8xf32> -> vector<8x8xf32>
    %242 = arith.mulf %241, %236 : vector<8x8xf32>
    %cst_142 = arith.constant dense<0.000000e+00> : vector<2x8xf32>
    %243 = tpu.matmul %233, %240, %cst_142 {dimension_numbers = #tpu.dot_dimension_numbers<[1], [1], [0], [0], [0, 0, 1, 0], [], []>} : vector<2x8xf32>, vector<8x8xf32>, vector<2x8xf32> -> vector<2x8xf32>
    %cst_143 = arith.constant 1.000000e+30 : f32
    %244 = vector.broadcast %cst_143 : f32 to vector<2x8xf32>
    %245 = arith.mulf %238, %244 : vector<2x8xf32>
    %246 = arith.subf %243, %245 : vector<2x8xf32>
    %cst_144 = arith.constant dense<0xFF800000> : vector<2xf32>
    %247 = vector.multi_reduction <maximumf>, %246, %cst_144 [1] : vector<2x8xf32> to vector<2xf32>
    %248 = vector.shape_cast %247 : vector<2xf32> to vector<2x1xf32>
    %249 = vector.broadcast %248 : vector<2x1xf32> to vector<2x8xf32>
    %250 = arith.subf %246, %249 : vector<2x8xf32>
    %251 = math.exp %250 : vector<2x8xf32>
    %cst_145 = arith.constant dense<0.000000e+00> : vector<2x8xf32>
    %252 = tpu.matmul %251, %237, %cst_145 {dimension_numbers = #tpu.dot_dimension_numbers<[1], [0], [0], [1], [0, 0, 1, 1], [], []>} : vector<2x8xf32>, vector<8x8xf32>, vector<2x8xf32> -> vector<2x8xf32>
    %253 = arith.addf %252, %238 : vector<2x8xf32>
    %cst_146 = arith.constant 1.000000e-30 : f32
    %254 = vector.broadcast %cst_146 : f32 to vector<2x8xf32>
    %255 = arith.addf %253, %254 : vector<2x8xf32>
    %256 = tpu.reciprocal %255 {approx = true} : vector<2x8xf32> -> vector<2x8xf32>
    %257 = arith.mulf %251, %256 : vector<2x8xf32>
    %cst_147 = arith.constant dense<0.000000e+00> : vector<2x8xf32>
    %258 = tpu.matmul %257, %242, %cst_147 {dimension_numbers = #tpu.dot_dimension_numbers<[1], [0], [0], [1], [0, 0, 1, 1], [], []>} : vector<2x8xf32>, vector<8x8xf32>, vector<2x8xf32> -> vector<2x8xf32>
    %c0_148 = arith.constant 0 : index
    %c120 = arith.constant 120 : index
    %259 = vector.load %arg2[%c0_148, %c120] : memref<8x212xf32, #tpu.memory_space<vmem>>, vector<8x8xf32>
    %cst_149 = arith.constant dense<0.000000e+00> : vector<2x8xf32>
    %260 = tpu.matmul %258, %259, %cst_149 {dimension_numbers = #tpu.dot_dimension_numbers<[1], [0], [0], [1], [0, 0, 1, 1], [], []>} : vector<2x8xf32>, vector<8x8xf32>, vector<2x8xf32> -> vector<2x8xf32>
    %c0_150 = arith.constant 0 : index
    %c120_151 = arith.constant 120 : index
    %261 = vector.load %arg4[%c0_150, %c120_151] : memref<1x236xf32, #tpu.memory_space<vmem>>, vector<1x8xf32>
    %262 = vector.broadcast %261 : vector<1x8xf32> to vector<2x8xf32>
    %263 = arith.addf %260, %262 : vector<2x8xf32>
    %264 = arith.addf %5, %263 : vector<2x8xf32>
    %c0_152 = arith.constant 0 : index
    %c128 = arith.constant 128 : index
    %265 = vector.load %arg2[%c0_152, %c128] : memref<8x212xf32, #tpu.memory_space<vmem>>, vector<8x8xf32>
    %cst_153 = arith.constant dense<0.000000e+00> : vector<2x8xf32>
    %266 = tpu.matmul %264, %265, %cst_153 {dimension_numbers = #tpu.dot_dimension_numbers<[1], [0], [0], [1], [0, 0, 1, 1], [], []>} : vector<2x8xf32>, vector<8x8xf32>, vector<2x8xf32> -> vector<2x8xf32>
    %c0_154 = arith.constant 0 : index
    %c128_155 = arith.constant 128 : index
    %267 = vector.load %arg4[%c0_154, %c128_155] : memref<1x236xf32, #tpu.memory_space<vmem>>, vector<1x8xf32>
    %268 = vector.broadcast %267 : vector<1x8xf32> to vector<2x8xf32>
    %269 = arith.addf %266, %268 : vector<2x8xf32>
    %c0_156 = arith.constant 0 : index
    %c136 = arith.constant 136 : index
    %270 = vector.load %arg2[%c0_156, %c136] : memref<8x212xf32, #tpu.memory_space<vmem>>, vector<8x16xf32>
    %cst_157 = arith.constant dense<0.000000e+00> : vector<20x16xf32>
    %271 = tpu.matmul %227, %270, %cst_157 {dimension_numbers = #tpu.dot_dimension_numbers<[1], [0], [0], [1], [0, 0, 1, 1], [], []>} : vector<20x8xf32>, vector<8x16xf32>, vector<20x16xf32> -> vector<20x16xf32>
    %c0_158 = arith.constant 0 : index
    %c136_159 = arith.constant 136 : index
    %272 = vector.load %arg4[%c0_158, %c136_159] : memref<1x236xf32, #tpu.memory_space<vmem>>, vector<1x16xf32>
    %273 = vector.broadcast %272 : vector<1x16xf32> to vector<20x16xf32>
    %274 = arith.addf %271, %273 : vector<20x16xf32>
    %275 = vector.extract_strided_slice %274 {offsets = [0, 0], sizes = [20, 8], strides = [1, 1]} : vector<20x16xf32> to vector<20x8xf32>
    %276 = vector.extract_strided_slice %274 {offsets = [0, 8], sizes = [20, 8], strides = [1, 1]} : vector<20x16xf32> to vector<20x8xf32>
    %c0_160 = arith.constant 0 : index
    %c0_161 = arith.constant 0 : index
    %277 = vector.load %arg7[%c0_160, %c0_161] : memref<80x88xf32, #tpu.memory_space<vmem>>, vector<80x8xf32>
    %c0_162 = arith.constant 0 : index
    %c8_163 = arith.constant 8 : index
    %278 = vector.load %arg7[%c0_162, %c8_163] : memref<80x88xf32, #tpu.memory_space<vmem>>, vector<80x80xf32>
    %c0_164 = arith.constant 0 : index
    %c8_165 = arith.constant 8 : index
    %279 = vector.load %arg6[%c0_164, %c8_165] : memref<2x88xf32, #tpu.memory_space<vmem>>, vector<2x80xf32>
    %280 = tpu.concatenate %275, %275, %275, %275 in 0 : vector<20x8xf32>, vector<20x8xf32>, vector<20x8xf32>, vector<20x8xf32> -> vector<80x8xf32>
    %281 = arith.mulf %280, %277 : vector<80x8xf32>
    %282 = tpu.concatenate %276, %276, %276, %276 in 0 : vector<20x8xf32>, vector<20x8xf32>, vector<20x8xf32>, vector<20x8xf32> -> vector<80x8xf32>
    %283 = arith.mulf %282, %277 : vector<80x8xf32>
    %cst_166 = arith.constant dense<0.000000e+00> : vector<2x80xf32>
    %284 = tpu.matmul %269, %281, %cst_166 {dimension_numbers = #tpu.dot_dimension_numbers<[1], [1], [0], [0], [0, 0, 1, 0], [], []>} : vector<2x8xf32>, vector<80x8xf32>, vector<2x80xf32> -> vector<2x80xf32>
    %cst_167 = arith.constant 1.000000e+30 : f32
    %285 = vector.broadcast %cst_167 : f32 to vector<2x80xf32>
    %286 = arith.mulf %279, %285 : vector<2x80xf32>
    %287 = arith.subf %284, %286 : vector<2x80xf32>
    %cst_168 = arith.constant dense<0xFF800000> : vector<2xf32>
    %288 = vector.multi_reduction <maximumf>, %287, %cst_168 [1] : vector<2x80xf32> to vector<2xf32>
    %289 = vector.shape_cast %288 : vector<2xf32> to vector<2x1xf32>
    %290 = vector.broadcast %289 : vector<2x1xf32> to vector<2x80xf32>
    %291 = arith.subf %287, %290 : vector<2x80xf32>
    %292 = math.exp %291 : vector<2x80xf32>
    %cst_169 = arith.constant dense<0.000000e+00> : vector<2x80xf32>
    %293 = tpu.matmul %292, %278, %cst_169 {dimension_numbers = #tpu.dot_dimension_numbers<[1], [0], [0], [1], [0, 0, 1, 1], [], []>} : vector<2x80xf32>, vector<80x80xf32>, vector<2x80xf32> -> vector<2x80xf32>
    %294 = arith.addf %293, %279 : vector<2x80xf32>
    %cst_170 = arith.constant 1.000000e-30 : f32
    %295 = vector.broadcast %cst_170 : f32 to vector<2x80xf32>
    %296 = arith.addf %294, %295 : vector<2x80xf32>
    %297 = tpu.reciprocal %296 {approx = true} : vector<2x80xf32> -> vector<2x80xf32>
    %298 = arith.mulf %292, %297 : vector<2x80xf32>
    %cst_171 = arith.constant dense<0.000000e+00> : vector<2x8xf32>
    %299 = tpu.matmul %298, %283, %cst_171 {dimension_numbers = #tpu.dot_dimension_numbers<[1], [0], [0], [1], [0, 0, 1, 1], [], []>} : vector<2x80xf32>, vector<80x8xf32>, vector<2x8xf32> -> vector<2x8xf32>
    %c0_172 = arith.constant 0 : index
    %c152 = arith.constant 152 : index
    %300 = vector.load %arg2[%c0_172, %c152] : memref<8x212xf32, #tpu.memory_space<vmem>>, vector<8x8xf32>
    %cst_173 = arith.constant dense<0.000000e+00> : vector<2x8xf32>
    %301 = tpu.matmul %299, %300, %cst_173 {dimension_numbers = #tpu.dot_dimension_numbers<[1], [0], [0], [1], [0, 0, 1, 1], [], []>} : vector<2x8xf32>, vector<8x8xf32>, vector<2x8xf32> -> vector<2x8xf32>
    %c0_174 = arith.constant 0 : index
    %c152_175 = arith.constant 152 : index
    %302 = vector.load %arg4[%c0_174, %c152_175] : memref<1x236xf32, #tpu.memory_space<vmem>>, vector<1x8xf32>
    %303 = vector.broadcast %302 : vector<1x8xf32> to vector<2x8xf32>
    %304 = arith.addf %301, %303 : vector<2x8xf32>
    %305 = arith.addf %264, %304 : vector<2x8xf32>
    %c0_176 = arith.constant 0 : index
    %c192 = arith.constant 192 : index
    %306 = vector.load %arg2[%c0_176, %c192] : memref<8x212xf32, #tpu.memory_space<vmem>>, vector<8x16xf32>
    %c0_177 = arith.constant 0 : index
    %c192_178 = arith.constant 192 : index
    %307 = vector.load %arg4[%c0_177, %c192_178] : memref<1x236xf32, #tpu.memory_space<vmem>>, vector<1x16xf32>
    %c0_179 = arith.constant 0 : index
    %c16 = arith.constant 16 : index
    %308 = vector.load %arg3[%c0_179, %c16] : memref<16x24xf32, #tpu.memory_space<vmem>>, vector<16x8xf32>
    %c0_180 = arith.constant 0 : index
    %c224 = arith.constant 224 : index
    %309 = vector.load %arg4[%c0_180, %c224] : memref<1x236xf32, #tpu.memory_space<vmem>>, vector<1x8xf32>
    %cst_181 = arith.constant dense<0.000000e+00> : vector<2x16xf32>
    %310 = tpu.matmul %305, %306, %cst_181 {dimension_numbers = #tpu.dot_dimension_numbers<[1], [0], [0], [1], [0, 0, 1, 1], [], []>} : vector<2x8xf32>, vector<8x16xf32>, vector<2x16xf32> -> vector<2x16xf32>
    %311 = vector.broadcast %307 : vector<1x16xf32> to vector<2x16xf32>
    %312 = arith.addf %310, %311 : vector<2x16xf32>
    %cst_182 = arith.constant 0.000000e+00 : f32
    %313 = vector.broadcast %cst_182 : f32 to vector<2x16xf32>
    %314 = arith.cmpf oge, %312, %313 : vector<2x16xf32>
    %cst_183 = arith.constant 0.00999999977 : f32
    %315 = vector.broadcast %cst_183 : f32 to vector<2x16xf32>
    %316 = arith.mulf %315, %312 : vector<2x16xf32>
    %317 = arith.select %314, %312, %316 : vector<2x16xi1>, vector<2x16xf32>
    %cst_184 = arith.constant dense<0.000000e+00> : vector<2x8xf32>
    %318 = tpu.matmul %317, %308, %cst_184 {dimension_numbers = #tpu.dot_dimension_numbers<[1], [0], [0], [1], [0, 0, 1, 1], [], []>} : vector<2x16xf32>, vector<16x8xf32>, vector<2x8xf32> -> vector<2x8xf32>
    %319 = vector.broadcast %309 : vector<1x8xf32> to vector<2x8xf32>
    %320 = arith.addf %318, %319 : vector<2x8xf32>
    %321 = arith.addf %305, %320 : vector<2x8xf32>
    %c0_185 = arith.constant 0 : index
    %c208_186 = arith.constant 208 : index
    %322 = vector.load %arg2[%c0_185, %c208_186] : memref<8x212xf32, #tpu.memory_space<vmem>>, vector<8x4xf32>
    %cst_187 = arith.constant dense<0.000000e+00> : vector<2x4xf32>
    %323 = tpu.matmul %321, %322, %cst_187 {dimension_numbers = #tpu.dot_dimension_numbers<[1], [0], [0], [1], [0, 0, 1, 1], [], []>} : vector<2x8xf32>, vector<8x4xf32>, vector<2x4xf32> -> vector<2x4xf32>
    %c0_188 = arith.constant 0 : index
    %c232_189 = arith.constant 232 : index
    %324 = vector.load %arg4[%c0_188, %c232_189] : memref<1x236xf32, #tpu.memory_space<vmem>>, vector<1x4xf32>
    %325 = vector.broadcast %324 : vector<1x4xf32> to vector<2x4xf32>
    %326 = arith.addf %323, %325 : vector<2x4xf32>
    %cst_190 = arith.constant 0.000000e+00 : f32
    %327 = vector.broadcast %cst_190 : f32 to vector<2x4xf32>
    %328 = arith.subf %327, %326 : vector<2x4xf32>
    %329 = math.exp %328 : vector<2x4xf32>
    %cst_191 = arith.constant 1.000000e+00 : f32
    %330 = vector.broadcast %cst_191 : f32 to vector<2x4xf32>
    %331 = arith.addf %330, %329 : vector<2x4xf32>
    %cst_192 = arith.constant 1.000000e+00 : f32
    %332 = vector.broadcast %cst_192 : f32 to vector<2x4xf32>
    %333 = arith.divf %332, %331 : vector<2x4xf32>
    %c0_193 = arith.constant 0 : index
    %c0_194 = arith.constant 0 : index
    %334 = vector.load %arg9[%c0_193, %c0_194] : memref<2x4xf32, #tpu.memory_space<vmem>>, vector<2x4xf32>
    tpu.vector_store %arg9[%c0_193, %c0_194], %167 {strides = array<i32>} : memref<2x4xf32, #tpu.memory_space<vmem>>, vector<2x4xf32>,
    %c0_195 = arith.constant 0 : index
    %c0_196 = arith.constant 0 : index
    %335 = vector.load %arg10[%c0_195, %c0_196] : memref<2x4xf32, #tpu.memory_space<vmem>>, vector<2x4xf32>
    tpu.vector_store %arg10[%c0_195, %c0_196], %333 {strides = array<i32>} : memref<2x4xf32, #tpu.memory_space<vmem>>, vector<2x4xf32>,
    return
  }
}

</mosaic_0001>

<llo_original>
// kernel: _lambda_.1
$region0: #{_lambda_.1}
  #allocation0 [shape = 'u32[]', space=smem, size = 0x4, offset = 0x4, fixed_abs, tag = 'smem constant byte address 0x4 - core index']
  #allocation1 [shape = 'u32[144,128]{1,0:T(1,128)}', space=vmem, size = 0x12000, scoped, tag = 'internal scratch']
  %s0 = inlined_call_operand.vmem [shape: f32[20,4], index: 0, kind: input, shape index: {}]
  %s1 = inlined_call_operand.vmem [shape: f32[2,4], index: 1, kind: input, shape index: {}]
  %s2 = inlined_call_operand.hbm [shape: f32[8,212], index: 2, kind: input, shape index: {}]
  %s3 = inlined_call_operand.vmem [shape: f32[16,24], index: 3, kind: input, shape index: {}]
  %s4 = inlined_call_operand.vmem [shape: f32[1,236], index: 4, kind: input, shape index: {}]
  %s5 = inlined_call_operand.hbm [shape: f32[20,88], index: 5, kind: input, shape index: {}]
  %s6 = inlined_call_operand.hbm [shape: f32[2,88], index: 6, kind: input, shape index: {}]
  %s7 = inlined_call_operand.vmem [shape: f32[80,88], index: 7, kind: input, shape index: {}]
  %s8 = inlined_call_operand.hbm [shape: f32[8,16], index: 8, kind: input, shape index: {}]
  %s9 = inlined_call_operand.hbm [shape: f32[2,4], index: 9, kind: output, shape index: {0}]
  %s10 = inlined_call_operand.hbm [shape: f32[2,4], index: 10, kind: output, shape index: {1}]
  %11 = xla_tuple %s9, %s10
  %s12 = sld [smem:[#allocation0]]
  $region70: #{_lambda_.1} parent=0
    _
  %s14 = ssub.s32 1, %s12
  %s15 = scalar_select 0, %s14, %s12
  $region1: #{_lambda_.1} parent=0
    #allocation2 [shape = 'u8[8192]{0}', space=vmem, size = 0x2000, scoped, tag = 'input window, operand 2, single buffered']
    #allocation3 [shape = 's32[1]{0}', space=sflag, size = 0x4, scoped, tag = 'scoped memory for _lambda_.1']
    #allocation4 [shape = 's32[1]{0}', space=sflag, size = 0x4, scoped, tag = 'scoped memory for _lambda_.1']
    #allocation5 [shape = 'u8[12288]{0}', space=vmem, size = 0x3000, scoped, tag = 'input window, operand 5, single buffered']
    #allocation6 [shape = 's32[1]{0}', space=sflag, size = 0x4, scoped, tag = 'scoped memory for _lambda_.1']
    #allocation7 [shape = 'u8[1024]{0}', space=vmem, size = 0x400, scoped, tag = 'input window, operand 6, single buffered']
    #allocation8 [shape = 'u8[4096]{0}', space=vmem, size = 0x1000, scoped, tag = 'input window, operand 8, single buffered']
    #allocation9 [shape = 's32[1]{0}', space=sflag, size = 0x4, scoped, tag = 'scoped memory for _lambda_.1']
    #allocation10 [shape = 'u8[1024]{0}', space=vmem, size = 0x400, scoped, tag = 'output window, operand 0, single buffered']
    #allocation11 [shape = 'u8[1024]{0}', space=vmem, size = 0x400, scoped, tag = 'output window, operand 1, single buffered']
    #allocation12 [shape = 's32[1]{0}', space=sflag, size = 0x4, scoped, tag = 'scoped memory for _lambda_.1']
    %16 = vsyncpa [#allocation3], 0
    %17 = vsyncpa [#allocation6], 0
    %18 = vsyncpa [#allocation9], 0
    %19 = vsyncpa [#allocation4], 0
    %20 = vsyncpa [#allocation12], 0
    // Predicated region
    $region2: #{_lambda_.1} parent=1 // pred_check
      _
    $region3: #{_lambda_.1} parent=1 // pred_check_branch
      %22 = sbr.rel (0) target = $region5
    $region4: #{_lambda_.1} parent=1 // pred_region
      _
    $region5: #{_lambda_.1} parent=1 // pred_fallthru
      _
    // Predicated region
    $region6: #{_lambda_.1} parent=1 // pred_check
      _
    $region7: #{_lambda_.1} parent=1 // pred_check_branch
      %24 = sbr.rel (0) target = $region9
    $region8: #{_lambda_.1} parent=1 // pred_region
      _
    $region9: #{_lambda_.1} parent=1 // pred_fallthru
      _
    // Predicated region
    $region10: #{_lambda_.1} parent=1 // pred_check
      _
    $region11: #{_lambda_.1} parent=1 // pred_check_branch
      %26 = sbr.rel (0) target = $region13
    $region12: #{_lambda_.1} parent=1 // pred_region
      %s28 = ssub.s32 256, 256
      %29 = vsyncadd [#allocation3], %s28
      %s31 = sshll.u32 [#allocation2], 4
      %s32 = int_to_ptr.vmem [resolvable:$true] %s31
      %34 = dma.hbm_to_vmem [thread:$0]  %s2, 256, %s32, [#allocation3]
    $region13: #{_lambda_.1} parent=1 // pred_fallthru
      _
    // Predicated region
    $region14: #{_lambda_.1} parent=1 // pred_check
      _
    $region15: #{_lambda_.1} parent=1 // pred_check_branch
      %36 = sbr.rel (0) target = $region17
    $region16: #{_lambda_.1} parent=1 // pred_region
      _
    $region17: #{_lambda_.1} parent=1 // pred_fallthru
      _
    // Predicated region
    $region18: #{_lambda_.1} parent=1 // pred_check
      _
    $region19: #{_lambda_.1} parent=1 // pred_check_branch
      %38 = sbr.rel (0) target = $region21
    $region20: #{_lambda_.1} parent=1 // pred_region
      _
    $region21: #{_lambda_.1} parent=1 // pred_fallthru
      _
    // Predicated region
    $region22: #{_lambda_.1} parent=1 // pred_check
      _
    $region23: #{_lambda_.1} parent=1 // pred_check_branch
      %40 = sbr.rel (0) target = $region25
    $region24: #{_lambda_.1} parent=1 // pred_region
      %s42 = ssub.s32 384, 384
      %43 = vsyncadd [#allocation6], %s42
      %s44 = sshll.u32 [#allocation5], 4
      %s45 = int_to_ptr.vmem [resolvable:$true] %s44
      %50 = dma.hbm_to_vmem [thread:$0]  %s5, 384, %s45, [#allocation6], 128, 128, 8
    $region25: #{_lambda_.1} parent=1 // pred_fallthru
      _
    // Predicated region
    $region26: #{_lambda_.1} parent=1 // pred_check
      _
    $region27: #{_lambda_.1} parent=1 // pred_check_branch
      %52 = sbr.rel (0) target = $region29
    $region28: #{_lambda_.1} parent=1 // pred_region
      %s54 = ssub.s32 32, 32
      %55 = vsyncadd [#allocation6], %s54
      %s57 = sshll.u32 [#allocation7], 4
      %s58 = int_to_ptr.vmem [resolvable:$true] %s57
      %60 = dma.hbm_to_vmem [thread:$0]  %s6, 32, %s58, [#allocation6]
    $region29: #{_lambda_.1} parent=1 // pred_fallthru
      _
    // Predicated region
    $region30: #{_lambda_.1} parent=1 // pred_check
      _
    $region31: #{_lambda_.1} parent=1 // pred_check_branch
      %62 = sbr.rel (0) target = $region33
    $region32: #{_lambda_.1} parent=1 // pred_region
      _
    $region33: #{_lambda_.1} parent=1 // pred_fallthru
      _
    // Predicated region
    $region34: #{_lambda_.1} parent=1 // pred_check
      _
    $region35: #{_lambda_.1} parent=1 // pred_check_branch
      %64 = sbr.rel (0) target = $region37
    $region36: #{_lambda_.1} parent=1 // pred_region
      %s66 = ssub.s32 128, 128
      %67 = vsyncadd [#allocation9], %s66
      %s69 = sshll.u32 [#allocation8], 4
      %s70 = int_to_ptr.vmem [resolvable:$true] %s69
      %72 = dma.hbm_to_vmem [thread:$0]  %s8, 128, %s70, [#allocation9]
    $region37: #{_lambda_.1} parent=1 // pred_fallthru
      _
    // Predicated region
    $region38: #{_lambda_.1} parent=1 // pred_check
      _
    $region39: #{_lambda_.1} parent=1 // pred_check_branch
      %74 = sbr.rel (0) target = $region41
    $region40: #{_lambda_.1} parent=1 // pred_region
      %75 = dma.done [#allocation3], 256
    $region41: #{_lambda_.1} parent=1 // pred_fallthru
      _
    // Predicated region
    $region42: #{_lambda_.1} parent=1 // pred_check
      _
    $region43: #{_lambda_.1} parent=1 // pred_check_branch
      %77 = sbr.rel (0) target = $region45
    $region44: #{_lambda_.1} parent=1 // pred_region
      %78 = dma.done [#allocation6], 384
    $region45: #{_lambda_.1} parent=1 // pred_fallthru
      _
    // Predicated region
    $region46: #{_lambda_.1} parent=1 // pred_check
      _
    $region47: #{_lambda_.1} parent=1 // pred_check_branch
      %80 = sbr.rel (0) target = $region49
    $region48: #{_lambda_.1} parent=1 // pred_region
      %81 = dma.done [#allocation6], 32
    $region49: #{_lambda_.1} parent=1 // pred_fallthru
      _
    // Predicated region
    $region50: #{_lambda_.1} parent=1 // pred_check
      _
    $region51: #{_lambda_.1} parent=1 // pred_check_branch
      %83 = sbr.rel (0) target = $region53
    $region52: #{_lambda_.1} parent=1 // pred_region
      %84 = dma.done [#allocation9], 128
    $region53: #{_lambda_.1} parent=1 // pred_fallthru
      _
    %v85 = vld [vmem:[#allocation5] sm:$0xff]
    %v86 = vld [vmem:[#allocation5 + $0x8] sm:$0xff]
    %v87 = vld [vmem:[#allocation5 + $0x10] sm:$0xf]
    %v88 = vld [vmem:[%s0] sm:$0xff]
    %v89 = vld [vmem:[%s0 + $0x8] sm:$0xff]
    %v90 = vld [vmem:[%s0 + $0x10] sm:$0xf]
    %v91 = vld [vmem:[%s1] sm:$0x3]
    %v92 = vmul.f32 %v88, 2.0
    %v93 = vmul.f32 %v89, 2.0
    %v94 = vmul.f32 %v90, 2.0
    %96 = vrot.lane.b32.xlu0 %v91, 4
    %v97 = vpop.permute.xlu0 %96
    %vm99 = vcmask 31744
    %v100 = vsel %vm99, %v91, %v97
    %v101 = vsel %vm99, %v92, 0.0
    %v102 = vsel %vm99, %v93, 0.0
    %v103 = vsel %vm99, %v94, 0.0
    %v104 = vadd.f32 %v101, %v85
    %v105 = vadd.f32 %v102, %v86
    %v106 = vadd.f32 %v103, %v87
    %v107 = vld [vmem:[#allocation2] sm:$0xff]
    %v108 = vld [vmem:[%s4] sm:$0x1]
    %v110 = vlaneseq
    %v111 = vshrl.u32 %v110, 7
    %v112 = vsub.s32 0, %v111
    %v113 = vrot.slane %v108, %v112
    %vm115 = vcmask 64512
    %v117 = vsel %vm115, %v104, 0
    %v120 = vsel %vm115, %v105, 0
    %v123 = vsel %vm115, %v106, 0
    %125 = vmatprep.subr.mxu0 0.0
    %126 = vmatpush1.msra.mxu0 %v107
    %127 = vmatprep.subr.mxu0 0.0
    %128 = vmatpush1.msra.mxu0 0.0
    %129 = vmatprep.subr.mxu0 0.0
    %130 = vmatpush1.msra.mxu0 0.0
    %131 = vmatprep.subr.mxu0 0.0
    %132 = vmatpush1.msra.mxu0 0.0
    %133 = vmatprep.subr.mxu0 0.0
    %134 = vmatpush1.msra.mxu0 0.0
    %135 = vmatprep.subr.mxu0 0.0
    %136 = vmatpush1.msra.mxu0 0.0
    %137 = vmatprep.subr.mxu0 0.0
    %138 = vmatpush1.msra.mxu0 0.0
    %139 = vmatprep.subr.mxu0 0.0
    %140 = vmatpush1.msra.mxu0 0.0
    %141 = vmatprep.subr.mxu0 0.0
    %142 = vmatpush1.msra.mxu0 0.0
    %143 = vmatprep.subr.mxu0 0.0
    %144 = vmatpush1.msra.mxu0 0.0
    %145 = vmatprep.subr.mxu0 0.0
    %146 = vmatpush1.msra.mxu0 0.0
    %147 = vmatprep.subr.mxu0 0.0
    %148 = vmatpush1.msra.mxu0 0.0
    %149 = vmatprep.subr.mxu0 0.0
    %150 = vmatpush1.msra.mxu0 0.0
    %151 = vmatprep.subr.mxu0 0.0
    %152 = vmatpush1.msra.mxu0 0.0
    %153 = vmatprep.subr.mxu0 0.0
    %154 = vmatpush1.msra.mxu0 0.0
    %155 = vmatprep.subr.mxu0 0.0
    %156 = vmatpush1.msra.mxu0 0.0
    %157 = vmatprep.subr.mxu0 0.0
    %158 = vmatpush1.msra.mxu0 0.0
    %159 = vmatprep.subr.mxu0 0.0
    %160 = vmatpush1.msra.mxu0 0.0
    %161 = vmatprep.subr.mxu0 0.0
    %162 = vmatpush1.msra.mxu0 0.0
    %163 = vmatprep.subr.mxu0 0.0
    %164 = vmatpush1.msra.mxu0 0.0
    %165 = vmatprep.subr.mxu0 0.0
    %166 = vmatpush1.msra.mxu0 0.0
    %167 = vmatprep.subr.mxu0 0.0
    %168 = vmatpush1.msra.mxu0 0.0
    %169 = vmatprep.subr.mxu0 0.0
    %170 = vmatpush1.msra.mxu0 0.0
    %171 = vmatprep.subr.mxu0 0.0
    %172 = vmatpush1.msra.mxu0 0.0
    %173 = vmatprep.subr.mxu0 0.0
    %174 = vmatpush1.msra.mxu0 0.0
    %175 = vmatprep.subr.mxu0 0.0
    %176 = vmatpush1.msra.mxu0 0.0
    %177 = vmatprep.subr.mxu0 0.0
    %178 = vmatpush1.msra.mxu0 0.0
    %179 = vmatprep.subr.mxu0 0.0
    %180 = vmatpush1.msra.mxu0 0.0
    %181 = vmatprep.subr.mxu0 0.0
    %182 = vmatpush1.msra.mxu0 0.0
    %183 = vmatprep.subr.mxu0 0.0
    %184 = vmatpush1.msra.mxu0 0.0
    %185 = vmatprep.subr.mxu0 0.0
    %186 = vmatpush1.msra.mxu0 0.0
    %187 = vmatprep.subr.mxu0 0.0
    %188 = vmatpush1.msra.mxu0 0.0
    %189 = vmatprep.mubr.f32.mxu0 0.0
    %190 = vmatmul.mubr.f32.gmra.mrb[0].mxu0 %v117
    %v191 = vpop.f32.mrb[0].mxu0
    %v192 = vadd.f32 %v113, %v191
    %v193 = vpop.f32.mrb[0].mxu0
    %194 = vmatprep.mubr.f32.mxu0 0.0
    %195 = vmatmul.mubr.f32.gmra.mrb[0].mxu0 %v120
    %v196 = vpop.f32.mrb[0].mxu0
    %v197 = vadd.f32 %v113, %v196
    %v198 = vpop.f32.mrb[0].mxu0
    %199 = vmatprep.mubr.f32.mxu0 0.0
    %200 = vmatmul.mubr.f32.gmra.mrb[0].mxu0 %v123
    %v201 = vpop.f32.mrb[0].mxu0
    %v202 = vadd.f32 %v113, %v201
    %v203 = vpop.f32.mrb[0].mxu0
    %204 = vdwg.mxu0
    %v205 = vld [vmem:[%s7] sm:$0xff]
    %v206 = vld [vmem:[%s7 + $0x8] sm:$0xff]
    %v207 = vld [vmem:[%s7 + $0x10] sm:$0xff]
    %v208 = vld [vmem:[%s7 + $0x18] sm:$0xff]
    %v209 = vld [vmem:[%s7 + $0x20] sm:$0xff]
    %v210 = vld [vmem:[%s7 + $0x28] sm:$0xff]
    %v211 = vld [vmem:[%s7 + $0x30] sm:$0xff]
    %v212 = vld [vmem:[%s7 + $0x38] sm:$0xff]
    %v213 = vld [vmem:[%s7 + $0x40] sm:$0xff]
    %v214 = vld [vmem:[%s7 + $0x48] sm:$0xff]
    %vm218 = vcmask 1043456
    %v219 = vrot.slane %v192, 4
    %v220 = vrot.slane %v197, 4
    %v221 = vsel %vm218, %v219, %v220
    %v222 = vrot.slane %v202, 4
    %v223 = vsel %vm218, %v220, %v222
    %v227 = vsel %vm218, %v202, %v219
    %238 = vrot.lane.b32.xlu0 %v205, 8
    %v239 = vpop.permute.xlu0 %238
    %240 = vrot.lane.b32.xlu0 %v206, 8
    %v241 = vpop.permute.xlu0 %240
    %242 = vrot.lane.b32.xlu0 %v207, 8
    %v243 = vpop.permute.xlu0 %242
    %244 = vrot.lane.b32.xlu0 %v208, 8
    %v245 = vpop.permute.xlu0 %244
    %246 = vrot.lane.b32.xlu0 %v209, 8
    %v247 = vpop.permute.xlu0 %246
    %248 = vrot.lane.b32.xlu0 %v210, 8
    %v249 = vpop.permute.xlu0 %248
    %250 = vrot.lane.b32.xlu0 %v211, 8
    %v251 = vpop.permute.xlu0 %250
    %252 = vrot.lane.b32.xlu0 %v212, 8
    %v253 = vpop.permute.xlu0 %252
    %254 = vrot.lane.b32.xlu0 %v213, 8
    %v255 = vpop.permute.xlu0 %254
    %256 = vrot.lane.b32.xlu0 %v214, 8
    %v257 = vpop.permute.xlu0 %256
    %v268 = vmul.f32 %v192, %v239
    %v269 = vmul.f32 %v197, %v241
    %v270 = vmul.f32 %v227, %v243
    %v271 = vmul.f32 %v221, %v245
    %v272 = vmul.f32 %v223, %v247
    %v273 = vmul.f32 %v192, %v249
    %v274 = vmul.f32 %v197, %v251
    %v275 = vmul.f32 %v227, %v253
    %v276 = vmul.f32 %v221, %v255
    %v277 = vmul.f32 %v223, %v257
    %278 = vrot.lane.b32.xlu0 %v205, 16
    %v279 = vpop.permute.xlu0 %278
    %280 = vrot.lane.b32.xlu0 %v206, 16
    %v281 = vpop.permute.xlu0 %280
    %282 = vrot.lane.b32.xlu0 %v207, 16
    %v283 = vpop.permute.xlu0 %282
    %284 = vrot.lane.b32.xlu0 %v208, 16
    %v285 = vpop.permute.xlu0 %284
    %286 = vrot.lane.b32.xlu0 %v209, 16
    %v287 = vpop.permute.xlu0 %286
    %288 = vrot.lane.b32.xlu0 %v210, 16
    %v289 = vpop.permute.xlu0 %288
    %290 = vrot.lane.b32.xlu0 %v211, 16
    %v291 = vpop.permute.xlu0 %290
    %292 = vrot.lane.b32.xlu0 %v212, 16
    %v293 = vpop.permute.xlu0 %292
    %294 = vrot.lane.b32.xlu0 %v213, 16
    %v295 = vpop.permute.xlu0 %294
    %296 = vrot.lane.b32.xlu0 %v214, 16
    %v297 = vpop.permute.xlu0 %296
    %v308 = vmul.f32 %v192, %v279
    %v309 = vmul.f32 %v197, %v281
    %v310 = vmul.f32 %v227, %v283
    %v311 = vmul.f32 %v221, %v285
    %v312 = vmul.f32 %v223, %v287
    %v313 = vmul.f32 %v192, %v289
    %v314 = vmul.f32 %v197, %v291
    %v315 = vmul.f32 %v227, %v293
    %v316 = vmul.f32 %v221, %v295
    %v317 = vmul.f32 %v223, %v297
    %328 = vrot.lane.b32.xlu0 %v268, 120
    %v329 = vpop.permute.xlu0 %328
    %330 = vrot.lane.b32.xlu0 %v269, 120
    %v331 = vpop.permute.xlu0 %330
    %332 = vrot.lane.b32.xlu0 %v270, 120
    %v333 = vpop.permute.xlu0 %332
    %334 = vrot.lane.b32.xlu0 %v271, 120
    %v335 = vpop.permute.xlu0 %334
    %336 = vrot.lane.b32.xlu0 %v272, 120
    %v337 = vpop.permute.xlu0 %336
    %338 = vrot.lane.b32.xlu0 %v273, 120
    %v339 = vpop.permute.xlu0 %338
    %340 = vrot.lane.b32.xlu0 %v274, 120
    %v341 = vpop.permute.xlu0 %340
    %342 = vrot.lane.b32.xlu0 %v275, 120
    %v343 = vpop.permute.xlu0 %342
    %344 = vrot.lane.b32.xlu0 %v276, 120
    %v345 = vpop.permute.xlu0 %344
    %346 = vrot.lane.b32.xlu0 %v277, 120
    %v347 = vpop.permute.xlu0 %346
    %v348 = vsel %vm115, %v192, 0
    %v350 = vsel %vm115, %v197, 0
    %v352 = vsel %vm115, %v202, 0
    %v354 = vsel %vm115, %v329, 0
    %v356 = vsel %vm115, %v331, 0
    %v358 = vsel %vm115, %v333, 0
    %v360 = vsel %vm115, %v335, 0
    %v362 = vsel %vm115, %v337, 0
    %v364 = vsel %vm115, %v339, 0
    %v366 = vsel %vm115, %v341, 0
    %v368 = vsel %vm115, %v343, 0
    %v370 = vsel %vm115, %v345, 0
    %v372 = vsel %vm115, %v347, 0
    %374 = vmatprep.subr.mxu0 0.0
    %375 = vmatpush1.xpose.msra.mxu0 %v354
    %376 = vmatprep.subr.mxu0 0.0
    %377 = vmatpush1.xpose.msra.mxu0 %v356
    %378 = vmatprep.subr.mxu0 0.0
    %379 = vmatpush1.xpose.msra.mxu0 %v358
    %380 = vmatprep.subr.mxu0 0.0
    %381 = vmatpush1.xpose.msra.mxu0 %v360
    %382 = vmatprep.subr.mxu0 0.0
    %383 = vmatpush1.xpose.msra.mxu0 %v362
    %384 = vmatprep.subr.mxu0 0.0
    %385 = vmatpush1.xpose.msra.mxu0 %v364
    %386 = vmatprep.subr.mxu0 0.0
    %387 = vmatpush1.xpose.msra.mxu0 %v366
    %388 = vmatprep.subr.mxu0 0.0
    %389 = vmatpush1.xpose.msra.mxu0 %v368
    %390 = vmatprep.subr.mxu0 0.0
    %391 = vmatpush1.xpose.msra.mxu0 %v370
    %392 = vmatprep.subr.mxu0 0.0
    %393 = vmatpush1.xpose.msra.mxu0 %v372
    %394 = vmatprep.subr.mxu0 0.0
    %395 = vmatpush1.xpose.msra.mxu0 0.0
    %396 = vmatprep.subr.mxu0 0.0
    %397 = vmatpush1.xpose.msra.mxu0 0.0
    %398 = vmatprep.subr.mxu0 0.0
    %399 = vmatpush1.xpose.msra.mxu0 0.0
    %400 = vmatprep.subr.mxu0 0.0
    %401 = vmatpush1.xpose.msra.mxu0 0.0
    %402 = vmatprep.subr.mxu0 0.0
    %403 = vmatpush1.xpose.msra.mxu0 0.0
    %404 = vmatprep.subr.mxu0 0.0
    %405 = vmatpush1.xpose.msra.mxu0 0.0
    %406 = vmatprep.subr.mxu0 0.0
    %407 = vmatpush1.xpose.msra.mxu0 0.0
    %408 = vmatprep.subr.mxu0 0.0
    %409 = vmatpush1.xpose.msra.mxu0 0.0
    %410 = vmatprep.subr.mxu0 0.0
    %411 = vmatpush1.xpose.msra.mxu0 0.0
    %412 = vmatprep.subr.mxu0 0.0
    %413 = vmatpush1.xpose.msra.mxu0 0.0
    %414 = vmatprep.subr.mxu0 0.0
    %415 = vmatpush1.xpose.msra.mxu0 0.0
    %416 = vmatprep.subr.mxu0 0.0
    %417 = vmatpush1.xpose.msra.mxu0 0.0
    %418 = vmatprep.subr.mxu0 0.0
    %419 = vmatpush1.xpose.msra.mxu0 0.0
    %420 = vmatprep.subr.mxu0 0.0
    %421 = vmatpush1.xpose.msra.mxu0 0.0
    %422 = vmatprep.subr.mxu0 0.0
    %423 = vmatpush1.xpose.msra.mxu0 0.0
    %424 = vmatprep.subr.mxu0 0.0
    %425 = vmatpush1.xpose.msra.mxu0 0.0
    %426 = vmatprep.subr.mxu0 0.0
    %427 = vmatpush1.xpose.msra.mxu0 0.0
    %428 = vmatprep.subr.mxu0 0.0
    %429 = vmatpush1.xpose.msra.mxu0 0.0
    %430 = vmatprep.subr.mxu0 0.0
    %431 = vmatpush1.xpose.msra.mxu0 0.0
    %432 = vmatprep.subr.mxu0 0.0
    %433 = vmatpush1.xpose.msra.mxu0 0.0
    %434 = vmatprep.subr.mxu0 0.0
    %435 = vmatpush1.xpose.msra.mxu0 0.0
    %436 = vmatprep.subr.mxu0 0.0
    %437 = vmatpush1.xpose.msra.mxu0 0.0
    %438 = vmatprep.mubr.f32.mxu0 0.0
    %439 = vmatmul.mubr.f32.gmra.mrb[0].mxu0 %v348
    %v440 = vpop.f32.mrb[0].mxu0
    %v441 = vadd.f32 0.0, %v440
    %v442 = vpop.f32.mrb[0].mxu0
    %443 = vmatprep.mubr.f32.mxu0 0.0
    %444 = vmatmul.mubr.f32.gmra.mrb[0].mxu0 %v350
    %v445 = vpop.f32.mrb[0].mxu0
    %v446 = vadd.f32 0.0, %v445
    %v447 = vpop.f32.mrb[0].mxu0
    %448 = vmatprep.mubr.f32.mxu0 0.0
    %449 = vmatmul.mubr.f32.gmra.mrb[0].mxu0 %v352
    %v450 = vpop.f32.mrb[0].mxu0
    %v451 = vadd.f32 0.0, %v450
    %v452 = vpop.f32.mrb[0].mxu0
    %453 = vdwg.mxu0
    %v454 = vmul.f32 %v85, 1e+30
    %v455 = vmul.f32 %v86, 1e+30
    %v456 = vmul.f32 %v87, 1e+30
    %460 = vrot.lane.b32.xlu0 %v454, 120
    %v461 = vpop.permute.xlu0 %460
    %462 = vrot.lane.b32.xlu0 %v455, 120
    %v463 = vpop.permute.xlu0 %462
    %464 = vrot.lane.b32.xlu0 %v456, 120
    %v465 = vpop.permute.xlu0 %464
    %v469 = vsub.f32 %v441, %v461
    %v470 = vsub.f32 %v446, %v463
    %v471 = vsub.f32 %v451, %v465
    %vm472 = vcmask 654336
    %v473 = vsel %vm472, %v469, -inf
    %474 = vmax.xlane.f32.xlu0 %v473
    %v475 = vpop.xlane.xlu0 %474
    %v476 = vsel %vm472, %v470, -inf
    %477 = vmax.xlane.f32.xlu0 %v476
    %v478 = vpop.xlane.xlu0 %477
    %vm479 = vcmask 650240
    %v480 = vsel %vm479, %v471, -inf
    %481 = vmax.xlane.f32.xlu0 %v480
    %v482 = vpop.xlane.xlu0 %481
    %v483 = vsub.f32 %v469, %v475
    %v484 = vsub.f32 %v470, %v478
    %v485 = vsub.f32 %v471, %v482
    %v486 = vmul.f32 %v483, 1.442695
    %v487 = vpow.pop %v486
    %v488 = vmul.f32 %v484, 1.442695
    %v489 = vpow.pop %v488
    %v490 = vmul.f32 %v485, 1.442695
    %v491 = vpow.pop %v490
    %492 = vrot.lane.b32.xlu0 %v205, 120
    %v493 = vpop.permute.xlu0 %492
    %494 = vrot.lane.b32.xlu0 %v206, 120
    %v495 = vpop.permute.xlu0 %494
    %496 = vrot.lane.b32.xlu0 %v207, 120
    %v497 = vpop.permute.xlu0 %496
    %498 = vrot.lane.b32.xlu0 %v208, 120
    %v499 = vpop.permute.xlu0 %498
    %500 = vrot.lane.b32.xlu0 %v209, 120
    %v501 = vpop.permute.xlu0 %500
    %502 = vrot.lane.b32.xlu0 %v210, 120
    %v503 = vpop.permute.xlu0 %502
    %504 = vrot.lane.b32.xlu0 %v211, 120
    %v505 = vpop.permute.xlu0 %504
    %506 = vrot.lane.b32.xlu0 %v212, 120
    %v507 = vpop.permute.xlu0 %506
    %508 = vrot.lane.b32.xlu0 %v213, 120
    %v509 = vpop.permute.xlu0 %508
    %510 = vrot.lane.b32.xlu0 %v214, 120
    %v511 = vpop.permute.xlu0 %510
    %525 = vrot.lane.b32.xlu0 %v85, 120
    %v526 = vpop.permute.xlu0 %525
    %527 = vrot.lane.b32.xlu0 %v86, 120
    %v528 = vpop.permute.xlu0 %527
    %529 = vrot.lane.b32.xlu0 %v87, 120
    %v530 = vpop.permute.xlu0 %529
    %v535 = vsel %vm472, %v487, 0
    %v538 = vsel %vm472, %v489, 0
    %v541 = vsel %vm472, %v491, 0
    %543 = vmatprep.subr.mxu0 0.0
    %544 = vmatpush1.msra.mxu0 %v493
    %545 = vmatprep.subr.mxu0 0.0
    %546 = vmatpush1.msra.mxu0 %v495
    %547 = vmatprep.subr.mxu0 0.0
    %548 = vmatpush1.msra.mxu0 %v497
    %549 = vmatprep.subr.mxu0 0.0
    %550 = vmatpush1.msra.mxu0 %v499
    %551 = vmatprep.subr.mxu0 0.0
    %552 = vmatpush1.msra.mxu0 %v501
    %553 = vmatprep.subr.mxu0 0.0
    %554 = vmatpush1.msra.mxu0 %v503
    %555 = vmatprep.subr.mxu0 0.0
    %556 = vmatpush1.msra.mxu0 %v505
    %557 = vmatprep.subr.mxu0 0.0
    %558 = vmatpush1.msra.mxu0 %v507
    %559 = vmatprep.subr.mxu0 0.0
    %560 = vmatpush1.msra.mxu0 %v509
    %561 = vmatprep.subr.mxu0 0.0
    %562 = vmatpush1.msra.mxu0 %v511
    %563 = vmatprep.subr.mxu0 0.0
    %564 = vmatpush1.msra.mxu0 0.0
    %565 = vmatprep.subr.mxu0 0.0
    %566 = vmatpush1.msra.mxu0 0.0
    %567 = vmatprep.subr.mxu0 0.0
    %568 = vmatpush1.msra.mxu0 0.0
    %569 = vmatprep.subr.mxu0 0.0
    %570 = vmatpush1.msra.mxu0 0.0
    %571 = vmatprep.subr.mxu0 0.0
    %572 = vmatpush1.msra.mxu0 0.0
    %573 = vmatprep.subr.mxu0 0.0
    %574 = vmatpush1.msra.mxu0 0.0
    %575 = vmatprep.subr.mxu0 0.0
    %576 = vmatpush1.msra.mxu0 0.0
    %577 = vmatprep.subr.mxu0 0.0
    %578 = vmatpush1.msra.mxu0 0.0
    %579 = vmatprep.subr.mxu0 0.0
    %580 = vmatpush1.msra.mxu0 0.0
    %581 = vmatprep.subr.mxu0 0.0
    %582 = vmatpush1.msra.mxu0 0.0
    %583 = vmatprep.subr.mxu0 0.0
    %584 = vmatpush1.msra.mxu0 0.0
    %585 = vmatprep.subr.mxu0 0.0
    %586 = vmatpush1.msra.mxu0 0.0
    %587 = vmatprep.subr.mxu0 0.0
    %588 = vmatpush1.msra.mxu0 0.0
    %589 = vmatprep.subr.mxu0 0.0
    %590 = vmatpush1.msra.mxu0 0.0
    %591 = vmatprep.subr.mxu0 0.0
    %592 = vmatpush1.msra.mxu0 0.0
    %593 = vmatprep.subr.mxu0 0.0
    %594 = vmatpush1.msra.mxu0 0.0
    %595 = vmatprep.subr.mxu0 0.0
    %596 = vmatpush1.msra.mxu0 0.0
    %597 = vmatprep.subr.mxu0 0.0
    %598 = vmatpush1.msra.mxu0 0.0
    %599 = vmatprep.subr.mxu0 0.0
    %600 = vmatpush1.msra.mxu0 0.0
    %601 = vmatprep.subr.mxu0 0.0
    %602 = vmatpush1.msra.mxu0 0.0
    %603 = vmatprep.subr.mxu0 0.0
    %604 = vmatpush1.msra.mxu0 0.0
    %605 = vmatprep.subr.mxu0 0.0
    %606 = vmatpush1.msra.mxu0 0.0
    %607 = vmatprep.mubr.f32.mxu0 0.0
    %608 = vmatmul.mubr.f32.gmra.mrb[0].mxu0 %v535
    %v609 = vpop.f32.mrb[0].mxu0
    %v610 = vadd.f32 %v526, %v609
    %v611 = vpop.f32.mrb[0].mxu0
    %612 = vmatprep.mubr.f32.mxu0 0.0
    %613 = vmatmul.mubr.f32.gmra.mrb[0].mxu0 %v538
    %v614 = vpop.f32.mrb[0].mxu0
    %v615 = vadd.f32 %v528, %v614
    %v616 = vpop.f32.mrb[0].mxu0
    %617 = vmatprep.mubr.f32.mxu0 0.0
    %618 = vmatmul.mubr.f32.gmra.mrb[0].mxu0 %v541
    %v619 = vpop.f32.mrb[0].mxu0
    %v620 = vadd.f32 %v530, %v619
    %v621 = vpop.f32.mrb[0].mxu0
    %622 = vdwg.mxu0
    %v623 = vadd.f32 %v610, 1e-30
    %v624 = vadd.f32 %v615, 1e-30
    %v625 = vadd.f32 %v620, 1e-30
    %v626 = vrcp.pop %v623
    %v627 = vrcp.pop %v624
    %v628 = vrcp.pop %v625
    %v629 = vmul.f32 %v487, %v626
    %v630 = vmul.f32 %v489, %v627
    %v631 = vmul.f32 %v491, %v628
    %642 = vrot.lane.b32.xlu0 %v308, 112
    %v643 = vpop.permute.xlu0 %642
    %644 = vrot.lane.b32.xlu0 %v309, 112
    %v645 = vpop.permute.xlu0 %644
    %646 = vrot.lane.b32.xlu0 %v310, 112
    %v647 = vpop.permute.xlu0 %646
    %648 = vrot.lane.b32.xlu0 %v311, 112
    %v649 = vpop.permute.xlu0 %648
    %650 = vrot.lane.b32.xlu0 %v312, 112
    %v651 = vpop.permute.xlu0 %650
    %652 = vrot.lane.b32.xlu0 %v313, 112
    %v653 = vpop.permute.xlu0 %652
    %654 = vrot.lane.b32.xlu0 %v314, 112
    %v655 = vpop.permute.xlu0 %654
    %656 = vrot.lane.b32.xlu0 %v315, 112
    %v657 = vpop.permute.xlu0 %656
    %658 = vrot.lane.b32.xlu0 %v316, 112
    %v659 = vpop.permute.xlu0 %658
    %660 = vrot.lane.b32.xlu0 %v317, 112
    %v661 = vpop.permute.xlu0 %660
    %v673 = vsel %vm472, %v629, 0
    %v676 = vsel %vm472, %v630, 0
    %v679 = vsel %vm472, %v631, 0
    %681 = vmatprep.subr.mxu0 0.0
    %682 = vmatpush1.msra.mxu0 %v643
    %683 = vmatprep.subr.mxu0 0.0
    %684 = vmatpush1.msra.mxu0 %v645
    %685 = vmatprep.subr.mxu0 0.0
    %686 = vmatpush1.msra.mxu0 %v647
    %687 = vmatprep.subr.mxu0 0.0
    %688 = vmatpush1.msra.mxu0 %v649
    %689 = vmatprep.subr.mxu0 0.0
    %690 = vmatpush1.msra.mxu0 %v651
    %691 = vmatprep.subr.mxu0 0.0
    %692 = vmatpush1.msra.mxu0 %v653
    %693 = vmatprep.subr.mxu0 0.0
    %694 = vmatpush1.msra.mxu0 %v655
    %695 = vmatprep.subr.mxu0 0.0
    %696 = vmatpush1.msra.mxu0 %v657
    %697 = vmatprep.subr.mxu0 0.0
    %698 = vmatpush1.msra.mxu0 %v659
    %699 = vmatprep.subr.mxu0 0.0
    %700 = vmatpush1.msra.mxu0 %v661
    %701 = vmatprep.subr.mxu0 0.0
    %702 = vmatpush1.msra.mxu0 0.0
    %703 = vmatprep.subr.mxu0 0.0
    %704 = vmatpush1.msra.mxu0 0.0
    %705 = vmatprep.subr.mxu0 0.0
    %706 = vmatpush1.msra.mxu0 0.0
    %707 = vmatprep.subr.mxu0 0.0
    %708 = vmatpush1.msra.mxu0 0.0
    %709 = vmatprep.subr.mxu0 0.0
    %710 = vmatpush1.msra.mxu0 0.0
    %711 = vmatprep.subr.mxu0 0.0
    %712 = vmatpush1.msra.mxu0 0.0
    %713 = vmatprep.subr.mxu0 0.0
    %714 = vmatpush1.msra.mxu0 0.0
    %715 = vmatprep.subr.mxu0 0.0
    %716 = vmatpush1.msra.mxu0 0.0
    %717 = vmatprep.subr.mxu0 0.0
    %718 = vmatpush1.msra.mxu0 0.0
    %719 = vmatprep.subr.mxu0 0.0
    %720 = vmatpush1.msra.mxu0 0.0
    %721 = vmatprep.subr.mxu0 0.0
    %722 = vmatpush1.msra.mxu0 0.0
    %723 = vmatprep.subr.mxu0 0.0
    %724 = vmatpush1.msra.mxu0 0.0
    %725 = vmatprep.subr.mxu0 0.0
    %726 = vmatpush1.msra.mxu0 0.0
    %727 = vmatprep.subr.mxu0 0.0
    %728 = vmatpush1.msra.mxu0 0.0
    %729 = vmatprep.subr.mxu0 0.0
    %730 = vmatpush1.msra.mxu0 0.0
    %731 = vmatprep.subr.mxu0 0.0
    %732 = vmatpush1.msra.mxu0 0.0
    %733 = vmatprep.subr.mxu0 0.0
    %734 = vmatpush1.msra.mxu0 0.0
    %735 = vmatprep.subr.mxu0 0.0
    %736 = vmatpush1.msra.mxu0 0.0
    %737 = vmatprep.subr.mxu0 0.0
    %738 = vmatpush1.msra.mxu0 0.0
    %739 = vmatprep.subr.mxu0 0.0
    %740 = vmatpush1.msra.mxu0 0.0
    %741 = vmatprep.subr.mxu0 0.0
    %742 = vmatpush1.msra.mxu0 0.0
    %743 = vmatprep.subr.mxu0 0.0
    %744 = vmatpush1.msra.mxu0 0.0
    %745 = vmatprep.mubr.f32.mxu0 0.0
    %746 = vmatmul.mubr.f32.gmra.mrb[0].mxu0 %v673
    %v747 = vpop.f32.mrb[0].mxu0
    %v748 = vadd.f32 0.0, %v747
    %v749 = vpop.f32.mrb[0].mxu0
    %750 = vmatprep.mubr.f32.mxu0 0.0
    %751 = vmatmul.mubr.f32.gmra.mrb[0].mxu0 %v676
    %v752 = vpop.f32.mrb[0].mxu0
    %v753 = vadd.f32 0.0, %v752
    %v754 = vpop.f32.mrb[0].mxu0
    %755 = vmatprep.mubr.f32.mxu0 0.0
    %756 = vmatmul.mubr.f32.gmra.mrb[0].mxu0 %v679
    %v757 = vpop.f32.mrb[0].mxu0
    %v758 = vadd.f32 0.0, %v757
    %v759 = vpop.f32.mrb[0].mxu0
    %760 = vdwg.mxu0
    %762 = vrot.lane.b32.xlu0 %v107, 104
    %v763 = vpop.permute.xlu0 %762
    %765 = vrot.lane.b32.xlu0 %v113, 104
    %v766 = vpop.permute.xlu0 %765
    %v769 = vsel %vm115, %v748, 0
    %v772 = vsel %vm115, %v753, 0
    %v775 = vsel %vm115, %v758, 0
    %777 = vmatprep.subr.mxu0 0.0
    %778 = vmatpush1.msra.mxu0 %v763
    %779 = vmatprep.subr.mxu0 0.0
    %780 = vmatpush1.msra.mxu0 0.0
    %781 = vmatprep.subr.mxu0 0.0
    %782 = vmatpush1.msra.mxu0 0.0
    %783 = vmatprep.subr.mxu0 0.0
    %784 = vmatpush1.msra.mxu0 0.0
    %785 = vmatprep.subr.mxu0 0.0
    %786 = vmatpush1.msra.mxu0 0.0
    %787 = vmatprep.subr.mxu0 0.0
    %788 = vmatpush1.msra.mxu0 0.0
    %789 = vmatprep.subr.mxu0 0.0
    %790 = vmatpush1.msra.mxu0 0.0
    %791 = vmatprep.subr.mxu0 0.0
    %792 = vmatpush1.msra.mxu0 0.0
    %793 = vmatprep.subr.mxu0 0.0
    %794 = vmatpush1.msra.mxu0 0.0
    %795 = vmatprep.subr.mxu0 0.0
    %796 = vmatpush1.msra.mxu0 0.0
    %797 = vmatprep.subr.mxu0 0.0
    %798 = vmatpush1.msra.mxu0 0.0
    %799 = vmatprep.subr.mxu0 0.0
    %800 = vmatpush1.msra.mxu0 0.0
    %801 = vmatprep.subr.mxu0 0.0
    %802 = vmatpush1.msra.mxu0 0.0
    %803 = vmatprep.subr.mxu0 0.0
    %804 = vmatpush1.msra.mxu0 0.0
    %805 = vmatprep.subr.mxu0 0.0
    %806 = vmatpush1.msra.mxu0 0.0
    %807 = vmatprep.subr.mxu0 0.0
    %808 = vmatpush1.msra.mxu0 0.0
    %809 = vmatprep.subr.mxu0 0.0
    %810 = vmatpush1.msra.mxu0 0.0
    %811 = vmatprep.subr.mxu0 0.0
    %812 = vmatpush1.msra.mxu0 0.0
    %813 = vmatprep.subr.mxu0 0.0
    %814 = vmatpush1.msra.mxu0 0.0
    %815 = vmatprep.subr.mxu0 0.0
    %816 = vmatpush1.msra.mxu0 0.0
    %817 = vmatprep.subr.mxu0 0.0
    %818 = vmatpush1.msra.mxu0 0.0
    %819 = vmatprep.subr.mxu0 0.0
    %820 = vmatpush1.msra.mxu0 0.0
    %821 = vmatprep.subr.mxu0 0.0
    %822 = vmatpush1.msra.mxu0 0.0
    %823 = vmatprep.subr.mxu0 0.0
    %824 = vmatpush1.msra.mxu0 0.0
    %825 = vmatprep.subr.mxu0 0.0
    %826 = vmatpush1.msra.mxu0 0.0
    %827 = vmatprep.subr.mxu0 0.0
    %828 = vmatpush1.msra.mxu0 0.0
    %829 = vmatprep.subr.mxu0 0.0
    %830 = vmatpush1.msra.mxu0 0.0
    %831 = vmatprep.subr.mxu0 0.0
    %832 = vmatpush1.msra.mxu0 0.0
    %833 = vmatprep.subr.mxu0 0.0
    %834 = vmatpush1.msra.mxu0 0.0
    %835 = vmatprep.subr.mxu0 0.0
    %836 = vmatpush1.msra.mxu0 0.0
    %837 = vmatprep.subr.mxu0 0.0
    %838 = vmatpush1.msra.mxu0 0.0
    %839 = vmatprep.subr.mxu0 0.0
    %840 = vmatpush1.msra.mxu0 0.0
    %841 = vmatprep.mubr.f32.mxu0 0.0
    %842 = vmatmul.mubr.f32.gmra.mrb[0].mxu0 %v769
    %v843 = vpop.f32.mrb[0].mxu0
    %v844 = vadd.f32 %v766, %v843
    %v845 = vpop.f32.mrb[0].mxu0
    %846 = vmatprep.mubr.f32.mxu0 0.0
    %847 = vmatmul.mubr.f32.gmra.mrb[0].mxu0 %v772
    %v848 = vpop.f32.mrb[0].mxu0
    %v849 = vadd.f32 %v766, %v848
    %v850 = vpop.f32.mrb[0].mxu0
    %851 = vmatprep.mubr.f32.mxu0 0.0
    %852 = vmatmul.mubr.f32.gmra.mrb[0].mxu0 %v775
    %v853 = vpop.f32.mrb[0].mxu0
    %v854 = vadd.f32 %v766, %v853
    %v855 = vpop.f32.mrb[0].mxu0
    %856 = vdwg.mxu0
    %v857 = vadd.f32 %v104, %v844
    %v858 = vadd.f32 %v105, %v849
    %v859 = vadd.f32 %v106, %v854
    %v860 = vld [vmem:[#allocation2 + $0x8] sm:$0xff]
    %v861 = vld [vmem:[%s4 + $0x1] sm:$0x1]
    %v862 = vld [vmem:[%s3] sm:$0xff]
    %v863 = vld [vmem:[%s3 + $0x8] sm:$0xff]
    %v865 = vlaneseq
    %v866 = vshrl.u32 %v865, 7
    %v867 = vsub.s32 0, %v866
    %v868 = vrot.slane %v861, %v867
    %870 = vrot.lane.b32.xlu0 %v860, 96
    %v871 = vpop.permute.xlu0 %870
    %873 = vrot.lane.b32.xlu0 %v868, 96
    %v874 = vpop.permute.xlu0 %873
    %v877 = vsel %vm115, %v857, 0
    %v880 = vsel %vm115, %v858, 0
    %v883 = vsel %vm115, %v859, 0
    %885 = vmatprep.subr.mxu0 0.0
    %886 = vmatpush1.msra.mxu0 %v871
    %887 = vmatprep.subr.mxu0 0.0
    %888 = vmatpush1.msra.mxu0 0.0
    %889 = vmatprep.subr.mxu0 0.0
    %890 = vmatpush1.msra.mxu0 0.0
    %891 = vmatprep.subr.mxu0 0.0
    %892 = vmatpush1.msra.mxu0 0.0
    %893 = vmatprep.subr.mxu0 0.0
    %894 = vmatpush1.msra.mxu0 0.0
    %895 = vmatprep.subr.mxu0 0.0
    %896 = vmatpush1.msra.mxu0 0.0
    %897 = vmatprep.subr.mxu0 0.0
    %898 = vmatpush1.msra.mxu0 0.0
    %899 = vmatprep.subr.mxu0 0.0
    %900 = vmatpush1.msra.mxu0 0.0
    %901 = vmatprep.subr.mxu0 0.0
    %902 = vmatpush1.msra.mxu0 0.0
    %903 = vmatprep.subr.mxu0 0.0
    %904 = vmatpush1.msra.mxu0 0.0
    %905 = vmatprep.subr.mxu0 0.0
    %906 = vmatpush1.msra.mxu0 0.0
    %907 = vmatprep.subr.mxu0 0.0
    %908 = vmatpush1.msra.mxu0 0.0
    %909 = vmatprep.subr.mxu0 0.0
    %910 = vmatpush1.msra.mxu0 0.0
    %911 = vmatprep.subr.mxu0 0.0
    %912 = vmatpush1.msra.mxu0 0.0
    %913 = vmatprep.subr.mxu0 0.0
    %914 = vmatpush1.msra.mxu0 0.0
    %915 = vmatprep.subr.mxu0 0.0
    %916 = vmatpush1.msra.mxu0 0.0
    %917 = vmatprep.subr.mxu0 0.0
    %918 = vmatpush1.msra.mxu0 0.0
    %919 = vmatprep.subr.mxu0 0.0
    %920 = vmatpush1.msra.mxu0 0.0
    %921 = vmatprep.subr.mxu0 0.0
    %922 = vmatpush1.msra.mxu0 0.0
    %923 = vmatprep.subr.mxu0 0.0
    %924 = vmatpush1.msra.mxu0 0.0
    %925 = vmatprep.subr.mxu0 0.0
    %926 = vmatpush1.msra.mxu0 0.0
    %927 = vmatprep.subr.mxu0 0.0
    %928 = vmatpush1.msra.mxu0 0.0
    %929 = vmatprep.subr.mxu0 0.0
    %930 = vmatpush1.msra.mxu0 0.0
    %931 = vmatprep.subr.mxu0 0.0
    %932 = vmatpush1.msra.mxu0 0.0
    %933 = vmatprep.subr.mxu0 0.0
    %934 = vmatpush1.msra.mxu0 0.0
    %935 = vmatprep.subr.mxu0 0.0
    %936 = vmatpush1.msra.mxu0 0.0
    %937 = vmatprep.subr.mxu0 0.0
    %938 = vmatpush1.msra.mxu0 0.0
    %939 = vmatprep.subr.mxu0 0.0
    %940 = vmatpush1.msra.mxu0 0.0
    %941 = vmatprep.subr.mxu0 0.0
    %942 = vmatpush1.msra.mxu0 0.0
    %943 = vmatprep.subr.mxu0 0.0
    %944 = vmatpush1.msra.mxu0 0.0
    %945 = vmatprep.subr.mxu0 0.0
    %946 = vmatpush1.msra.mxu0 0.0
    %947 = vmatprep.subr.mxu0 0.0
    %948 = vmatpush1.msra.mxu0 0.0
    %949 = vmatprep.mubr.f32.mxu0 0.0
    %950 = vmatmul.mubr.f32.gmra.mrb[0].mxu0 %v877
    %v951 = vpop.f32.mrb[0].mxu0
    %v952 = vadd.f32 %v874, %v951
    %v953 = vpop.f32.mrb[0].mxu0
    %954 = vmatprep.mubr.f32.mxu0 0.0
    %955 = vmatmul.mubr.f32.gmra.mrb[0].mxu0 %v880
    %v956 = vpop.f32.mrb[0].mxu0
    %v957 = vadd.f32 %v874, %v956
    %v958 = vpop.f32.mrb[0].mxu0
    %959 = vmatprep.mubr.f32.mxu0 0.0
    %960 = vmatmul.mubr.f32.gmra.mrb[0].mxu0 %v883
    %v961 = vpop.f32.mrb[0].mxu0
    %v962 = vadd.f32 %v874, %v961
    %v963 = vpop.f32.mrb[0].mxu0
    %964 = vdwg.mxu0
    %vm965 = vcmp.ge.f32.partialorder %v952, 0.0
    %vm966 = vcmp.ge.f32.partialorder %v957, 0.0
    %vm967 = vcmp.ge.f32.partialorder %v962, 0.0
    %v968 = vmul.f32 %v952, 0.01
    %v969 = vmul.f32 %v957, 0.01
    %v970 = vmul.f32 %v962, 0.01
    %v971 = vsel %vm965, %v952, %v968
    %v972 = vsel %vm966, %v957, %v969
    %v973 = vsel %vm967, %v962, %v970
    %974 = vrot.lane.b32.xlu0 %v868, 48
    %v975 = vpop.permute.xlu0 %974
    %vm977 = vcmask 130048
    %v979 = vsel %vm977, %v971, 0
    %v982 = vsel %vm977, %v972, 0
    %v985 = vsel %vm977, %v973, 0
    %987 = vmatprep.subr.mxu0 0.0
    %988 = vmatpush1.msra.mxu0 %v862
    %989 = vmatprep.subr.mxu0 0.0
    %990 = vmatpush1.msra.mxu0 %v863
    %991 = vmatprep.subr.mxu0 0.0
    %992 = vmatpush1.msra.mxu0 0.0
    %993 = vmatprep.subr.mxu0 0.0
    %994 = vmatpush1.msra.mxu0 0.0
    %995 = vmatprep.subr.mxu0 0.0
    %996 = vmatpush1.msra.mxu0 0.0
    %997 = vmatprep.subr.mxu0 0.0
    %998 = vmatpush1.msra.mxu0 0.0
    %999 = vmatprep.subr.mxu0 0.0
    %1000 = vmatpush1.msra.mxu0 0.0
    %1001 = vmatprep.subr.mxu0 0.0
    %1002 = vmatpush1.msra.mxu0 0.0
    %1003 = vmatprep.subr.mxu0 0.0
    %1004 = vmatpush1.msra.mxu0 0.0
    %1005 = vmatprep.subr.mxu0 0.0
    %1006 = vmatpush1.msra.mxu0 0.0
    %1007 = vmatprep.subr.mxu0 0.0
    %1008 = vmatpush1.msra.mxu0 0.0
    %1009 = vmatprep.subr.mxu0 0.0
    %1010 = vmatpush1.msra.mxu0 0.0
    %1011 = vmatprep.subr.mxu0 0.0
    %1012 = vmatpush1.msra.mxu0 0.0
    %1013 = vmatprep.subr.mxu0 0.0
    %1014 = vmatpush1.msra.mxu0 0.0
    %1015 = vmatprep.subr.mxu0 0.0
    %1016 = vmatpush1.msra.mxu0 0.0
    %1017 = vmatprep.subr.mxu0 0.0
    %1018 = vmatpush1.msra.mxu0 0.0
    %1019 = vmatprep.subr.mxu0 0.0
    %1020 = vmatpush1.msra.mxu0 0.0
    %1021 = vmatprep.subr.mxu0 0.0
    %1022 = vmatpush1.msra.mxu0 0.0
    %1023 = vmatprep.subr.mxu0 0.0
    %1024 = vmatpush1.msra.mxu0 0.0
    %1025 = vmatprep.subr.mxu0 0.0
    %1026 = vmatpush1.msra.mxu0 0.0
    %1027 = vmatprep.subr.mxu0 0.0
    %1028 = vmatpush1.msra.mxu0 0.0
    %1029 = vmatprep.subr.mxu0 0.0
    %1030 = vmatpush1.msra.mxu0 0.0
    %1031 = vmatprep.subr.mxu0 0.0
    %1032 = vmatpush1.msra.mxu0 0.0
    %1033 = vmatprep.subr.mxu0 0.0
    %1034 = vmatpush1.msra.mxu0 0.0
    %1035 = vmatprep.subr.mxu0 0.0
    %1036 = vmatpush1.msra.mxu0 0.0
    %1037 = vmatprep.subr.mxu0 0.0
    %1038 = vmatpush1.msra.mxu0 0.0
    %1039 = vmatprep.subr.mxu0 0.0
    %1040 = vmatpush1.msra.mxu0 0.0
    %1041 = vmatprep.subr.mxu0 0.0
    %1042 = vmatpush1.msra.mxu0 0.0
    %1043 = vmatprep.subr.mxu0 0.0
    %1044 = vmatpush1.msra.mxu0 0.0
    %1045 = vmatprep.subr.mxu0 0.0
    %1046 = vmatpush1.msra.mxu0 0.0
    %1047 = vmatprep.subr.mxu0 0.0
    %1048 = vmatpush1.msra.mxu0 0.0
    %1049 = vmatprep.subr.mxu0 0.0
    %1050 = vmatpush1.msra.mxu0 0.0
    %1051 = vmatprep.mubr.f32.mxu0 0.0
    %1052 = vmatmul.mubr.f32.gmra.mrb[0].mxu0 %v979
    %v1053 = vpop.f32.mrb[0].mxu0
    %v1054 = vadd.f32 %v975, %v1053
    %v1055 = vpop.f32.mrb[0].mxu0
    %1056 = vmatprep.mubr.f32.mxu0 0.0
    %1057 = vmatmul.mubr.f32.gmra.mrb[0].mxu0 %v982
    %v1058 = vpop.f32.mrb[0].mxu0
    %v1059 = vadd.f32 %v975, %v1058
    %v1060 = vpop.f32.mrb[0].mxu0
    %1061 = vmatprep.mubr.f32.mxu0 0.0
    %1062 = vmatmul.mubr.f32.gmra.mrb[0].mxu0 %v985
    %v1063 = vpop.f32.mrb[0].mxu0
    %v1064 = vadd.f32 %v975, %v1063
    %v1065 = vpop.f32.mrb[0].mxu0
    %1066 = vdwg.mxu0
    %v1067 = vadd.f32 %v857, %v1054
    %v1068 = vadd.f32 %v858, %v1059
    %v1069 = vadd.f32 %v859, %v1064
    %1070 = vrot.lane.b32.xlu0 %v107, 96
    %v1071 = vpop.permute.xlu0 %1070
    %1073 = vrot.lane.b32.xlu0 %v113, 96
    %v1074 = vpop.permute.xlu0 %1073
    %v1077 = vsel %vm115, %v100, 0
    %1079 = vmatprep.subr.mxu0 0.0
    %1080 = vmatpush1.msra.mxu0 %v1071
    %1081 = vmatprep.subr.mxu0 0.0
    %1082 = vmatpush1.msra.mxu0 0.0
    %1083 = vmatprep.subr.mxu0 0.0
    %1084 = vmatpush1.msra.mxu0 0.0
    %1085 = vmatprep.subr.mxu0 0.0
    %1086 = vmatpush1.msra.mxu0 0.0
    %1087 = vmatprep.subr.mxu0 0.0
    %1088 = vmatpush1.msra.mxu0 0.0
    %1089 = vmatprep.subr.mxu0 0.0
    %1090 = vmatpush1.msra.mxu0 0.0
    %1091 = vmatprep.subr.mxu0 0.0
    %1092 = vmatpush1.msra.mxu0 0.0
    %1093 = vmatprep.subr.mxu0 0.0
    %1094 = vmatpush1.msra.mxu0 0.0
    %1095 = vmatprep.subr.mxu0 0.0
    %1096 = vmatpush1.msra.mxu0 0.0
    %1097 = vmatprep.subr.mxu0 0.0
    %1098 = vmatpush1.msra.mxu0 0.0
    %1099 = vmatprep.subr.mxu0 0.0
    %1100 = vmatpush1.msra.mxu0 0.0
    %1101 = vmatprep.subr.mxu0 0.0
    %1102 = vmatpush1.msra.mxu0 0.0
    %1103 = vmatprep.subr.mxu0 0.0
    %1104 = vmatpush1.msra.mxu0 0.0
    %1105 = vmatprep.subr.mxu0 0.0
    %1106 = vmatpush1.msra.mxu0 0.0
    %1107 = vmatprep.subr.mxu0 0.0
    %1108 = vmatpush1.msra.mxu0 0.0
    %1109 = vmatprep.subr.mxu0 0.0
    %1110 = vmatpush1.msra.mxu0 0.0
    %1111 = vmatprep.subr.mxu0 0.0
    %1112 = vmatpush1.msra.mxu0 0.0
    %1113 = vmatprep.subr.mxu0 0.0
    %1114 = vmatpush1.msra.mxu0 0.0
    %1115 = vmatprep.subr.mxu0 0.0
    %1116 = vmatpush1.msra.mxu0 0.0
    %1117 = vmatprep.subr.mxu0 0.0
    %1118 = vmatpush1.msra.mxu0 0.0
    %1119 = vmatprep.subr.mxu0 0.0
    %1120 = vmatpush1.msra.mxu0 0.0
    %1121 = vmatprep.subr.mxu0 0.0
    %1122 = vmatpush1.msra.mxu0 0.0
    %1123 = vmatprep.subr.mxu0 0.0
    %1124 = vmatpush1.msra.mxu0 0.0
    %1125 = vmatprep.subr.mxu0 0.0
    %1126 = vmatpush1.msra.mxu0 0.0
    %1127 = vmatprep.subr.mxu0 0.0
    %1128 = vmatpush1.msra.mxu0 0.0
    %1129 = vmatprep.subr.mxu0 0.0
    %1130 = vmatpush1.msra.mxu0 0.0
    %1131 = vmatprep.subr.mxu0 0.0
    %1132 = vmatpush1.msra.mxu0 0.0
    %1133 = vmatprep.subr.mxu0 0.0
    %1134 = vmatpush1.msra.mxu0 0.0
    %1135 = vmatprep.subr.mxu0 0.0
    %1136 = vmatpush1.msra.mxu0 0.0
    %1137 = vmatprep.subr.mxu0 0.0
    %1138 = vmatpush1.msra.mxu0 0.0
    %1139 = vmatprep.subr.mxu0 0.0
    %1140 = vmatpush1.msra.mxu0 0.0
    %1141 = vmatprep.subr.mxu0 0.0
    %1142 = vmatpush1.msra.mxu0 0.0
    %1143 = vmatprep.mubr.f32.mxu0 0.0
    %1144 = vmatmul.mubr.f32.gmra.mrb[0].mxu0 %v1077
    %v1145 = vpop.f32.mrb[0].mxu0
    %v1146 = vadd.f32 %v1074, %v1145
    %v1147 = vpop.f32.mrb[0].mxu0
    %1148 = vdwg.mxu0
    %v1149 = vld [vmem:[#allocation8] sm:$0xff]
    %v1150 = vld [vmem:[#allocation7] sm:$0x3]
    %v1152 = vrot.slane %v1146, 6
    %v1154 = vrot.slane %v1146, 4
    %v1156 = vrot.slane %v1146, 2
    %vm1158 = vcmask 1041408
    %v1159 = vsel %vm1158, %v1146, %v1152
    %v1160 = vsel %vm218, %v1159, %v1154
    %vm1161 = vcmask 1045504
    %v1162 = vsel %vm1161, %v1160, %v1156
    %1164 = vrot.lane.b32.xlu0 %v1149, 8
    %v1165 = vpop.permute.xlu0 %1164
    %v1167 = vmul.f32 %v1162, %v1165
    %1168 = vrot.lane.b32.xlu0 %v1149, 16
    %v1169 = vpop.permute.xlu0 %1168
    %v1171 = vmul.f32 %v1162, %v1169
    %1173 = vrot.lane.b32.xlu0 %v1167, 120
    %v1174 = vpop.permute.xlu0 %1173
    %v1175 = vsel %vm115, %v1146, 0
    %v1177 = vsel %vm115, %v1174, 0
    %1179 = vmatprep.subr.mxu0 0.0
    %1180 = vmatpush1.xpose.msra.mxu0 %v1177
    %1181 = vmatprep.subr.mxu0 0.0
    %1182 = vmatpush1.xpose.msra.mxu0 0.0
    %1183 = vmatprep.subr.mxu0 0.0
    %1184 = vmatpush1.xpose.msra.mxu0 0.0
    %1185 = vmatprep.subr.mxu0 0.0
    %1186 = vmatpush1.xpose.msra.mxu0 0.0
    %1187 = vmatprep.subr.mxu0 0.0
    %1188 = vmatpush1.xpose.msra.mxu0 0.0
    %1189 = vmatprep.subr.mxu0 0.0
    %1190 = vmatpush1.xpose.msra.mxu0 0.0
    %1191 = vmatprep.subr.mxu0 0.0
    %1192 = vmatpush1.xpose.msra.mxu0 0.0
    %1193 = vmatprep.subr.mxu0 0.0
    %1194 = vmatpush1.xpose.msra.mxu0 0.0
    %1195 = vmatprep.subr.mxu0 0.0
    %1196 = vmatpush1.xpose.msra.mxu0 0.0
    %1197 = vmatprep.subr.mxu0 0.0
    %1198 = vmatpush1.xpose.msra.mxu0 0.0
    %1199 = vmatprep.subr.mxu0 0.0
    %1200 = vmatpush1.xpose.msra.mxu0 0.0
    %1201 = vmatprep.subr.mxu0 0.0
    %1202 = vmatpush1.xpose.msra.mxu0 0.0
    %1203 = vmatprep.subr.mxu0 0.0
    %1204 = vmatpush1.xpose.msra.mxu0 0.0
    %1205 = vmatprep.subr.mxu0 0.0
    %1206 = vmatpush1.xpose.msra.mxu0 0.0
    %1207 = vmatprep.subr.mxu0 0.0
    %1208 = vmatpush1.xpose.msra.mxu0 0.0
    %1209 = vmatprep.subr.mxu0 0.0
    %1210 = vmatpush1.xpose.msra.mxu0 0.0
    %1211 = vmatprep.subr.mxu0 0.0
    %1212 = vmatpush1.xpose.msra.mxu0 0.0
    %1213 = vmatprep.subr.mxu0 0.0
    %1214 = vmatpush1.xpose.msra.mxu0 0.0
    %1215 = vmatprep.subr.mxu0 0.0
    %1216 = vmatpush1.xpose.msra.mxu0 0.0
    %1217 = vmatprep.subr.mxu0 0.0
    %1218 = vmatpush1.xpose.msra.mxu0 0.0
    %1219 = vmatprep.subr.mxu0 0.0
    %1220 = vmatpush1.xpose.msra.mxu0 0.0
    %1221 = vmatprep.subr.mxu0 0.0
    %1222 = vmatpush1.xpose.msra.mxu0 0.0
    %1223 = vmatprep.subr.mxu0 0.0
    %1224 = vmatpush1.xpose.msra.mxu0 0.0
    %1225 = vmatprep.subr.mxu0 0.0
    %1226 = vmatpush1.xpose.msra.mxu0 0.0
    %1227 = vmatprep.subr.mxu0 0.0
    %1228 = vmatpush1.xpose.msra.mxu0 0.0
    %1229 = vmatprep.subr.mxu0 0.0
    %1230 = vmatpush1.xpose.msra.mxu0 0.0
    %1231 = vmatprep.subr.mxu0 0.0
    %1232 = vmatpush1.xpose.msra.mxu0 0.0
    %1233 = vmatprep.subr.mxu0 0.0
    %1234 = vmatpush1.xpose.msra.mxu0 0.0
    %1235 = vmatprep.subr.mxu0 0.0
    %1236 = vmatpush1.xpose.msra.mxu0 0.0
    %1237 = vmatprep.subr.mxu0 0.0
    %1238 = vmatpush1.xpose.msra.mxu0 0.0
    %1239 = vmatprep.subr.mxu0 0.0
    %1240 = vmatpush1.xpose.msra.mxu0 0.0
    %1241 = vmatprep.subr.mxu0 0.0
    %1242 = vmatpush1.xpose.msra.mxu0 0.0
    %1243 = vmatprep.mubr.f32.mxu0 0.0
    %1244 = vmatmul.mubr.f32.gmra.mrb[0].mxu0 %v1175
    %v1245 = vpop.f32.mrb[0].mxu0
    %v1246 = vadd.f32 0.0, %v1245
    %v1247 = vpop.f32.mrb[0].mxu0
    %1248 = vdwg.mxu0
    %v1249 = vmul.f32 %v1150, 1e+30
    %v1250 = vsub.f32 %v1246, %v1249
    %vm1251 = vcmask 58368
    %v1252 = vsel %vm1251, %v1250, -inf
    %1253 = vmax.xlane.f32.xlu0 %v1252
    %v1254 = vpop.xlane.xlu0 %1253
    %v1255 = vsub.f32 %v1250, %v1254
    %v1256 = vmul.f32 %v1255, 1.442695
    %v1257 = vpow.pop %v1256
    %1258 = vrot.lane.b32.xlu0 %v1149, 120
    %v1259 = vpop.permute.xlu0 %1258
    %v1262 = vsel %vm115, %v1257, 0
    %1264 = vmatprep.subr.mxu0 0.0
    %1265 = vmatpush1.msra.mxu0 %v1259
    %1266 = vmatprep.subr.mxu0 0.0
    %1267 = vmatpush1.msra.mxu0 0.0
    %1268 = vmatprep.subr.mxu0 0.0
    %1269 = vmatpush1.msra.mxu0 0.0
    %1270 = vmatprep.subr.mxu0 0.0
    %1271 = vmatpush1.msra.mxu0 0.0
    %1272 = vmatprep.subr.mxu0 0.0
    %1273 = vmatpush1.msra.mxu0 0.0
    %1274 = vmatprep.subr.mxu0 0.0
    %1275 = vmatpush1.msra.mxu0 0.0
    %1276 = vmatprep.subr.mxu0 0.0
    %1277 = vmatpush1.msra.mxu0 0.0
    %1278 = vmatprep.subr.mxu0 0.0
    %1279 = vmatpush1.msra.mxu0 0.0
    %1280 = vmatprep.subr.mxu0 0.0
    %1281 = vmatpush1.msra.mxu0 0.0
    %1282 = vmatprep.subr.mxu0 0.0
    %1283 = vmatpush1.msra.mxu0 0.0
    %1284 = vmatprep.subr.mxu0 0.0
    %1285 = vmatpush1.msra.mxu0 0.0
    %1286 = vmatprep.subr.mxu0 0.0
    %1287 = vmatpush1.msra.mxu0 0.0
    %1288 = vmatprep.subr.mxu0 0.0
    %1289 = vmatpush1.msra.mxu0 0.0
    %1290 = vmatprep.subr.mxu0 0.0
    %1291 = vmatpush1.msra.mxu0 0.0
    %1292 = vmatprep.subr.mxu0 0.0
    %1293 = vmatpush1.msra.mxu0 0.0
    %1294 = vmatprep.subr.mxu0 0.0
    %1295 = vmatpush1.msra.mxu0 0.0
    %1296 = vmatprep.subr.mxu0 0.0
    %1297 = vmatpush1.msra.mxu0 0.0
    %1298 = vmatprep.subr.mxu0 0.0
    %1299 = vmatpush1.msra.mxu0 0.0
    %1300 = vmatprep.subr.mxu0 0.0
    %1301 = vmatpush1.msra.mxu0 0.0
    %1302 = vmatprep.subr.mxu0 0.0
    %1303 = vmatpush1.msra.mxu0 0.0
    %1304 = vmatprep.subr.mxu0 0.0
    %1305 = vmatpush1.msra.mxu0 0.0
    %1306 = vmatprep.subr.mxu0 0.0
    %1307 = vmatpush1.msra.mxu0 0.0
    %1308 = vmatprep.subr.mxu0 0.0
    %1309 = vmatpush1.msra.mxu0 0.0
    %1310 = vmatprep.subr.mxu0 0.0
    %1311 = vmatpush1.msra.mxu0 0.0
    %1312 = vmatprep.subr.mxu0 0.0
    %1313 = vmatpush1.msra.mxu0 0.0
    %1314 = vmatprep.subr.mxu0 0.0
    %1315 = vmatpush1.msra.mxu0 0.0
    %1316 = vmatprep.subr.mxu0 0.0
    %1317 = vmatpush1.msra.mxu0 0.0
    %1318 = vmatprep.subr.mxu0 0.0
    %1319 = vmatpush1.msra.mxu0 0.0
    %1320 = vmatprep.subr.mxu0 0.0
    %1321 = vmatpush1.msra.mxu0 0.0
    %1322 = vmatprep.subr.mxu0 0.0
    %1323 = vmatpush1.msra.mxu0 0.0
    %1324 = vmatprep.subr.mxu0 0.0
    %1325 = vmatpush1.msra.mxu0 0.0
    %1326 = vmatprep.subr.mxu0 0.0
    %1327 = vmatpush1.msra.mxu0 0.0
    %1328 = vmatprep.mubr.f32.mxu0 0.0
    %1329 = vmatmul.mubr.f32.gmra.mrb[0].mxu0 %v1262
    %v1330 = vpop.f32.mrb[0].mxu0
    %v1331 = vadd.f32 %v1150, %v1330
    %v1332 = vpop.f32.mrb[0].mxu0
    %1333 = vdwg.mxu0
    %v1334 = vadd.f32 %v1331, 1e-30
    %v1335 = vrcp.pop %v1334
    %v1336 = vmul.f32 %v1257, %v1335
    %1338 = vrot.lane.b32.xlu0 %v1171, 112
    %v1339 = vpop.permute.xlu0 %1338
    %v1342 = vsel %vm115, %v1336, 0
    %1344 = vmatprep.subr.mxu0 0.0
    %1345 = vmatpush1.msra.mxu0 %v1339
    %1346 = vmatprep.subr.mxu0 0.0
    %1347 = vmatpush1.msra.mxu0 0.0
    %1348 = vmatprep.subr.mxu0 0.0
    %1349 = vmatpush1.msra.mxu0 0.0
    %1350 = vmatprep.subr.mxu0 0.0
    %1351 = vmatpush1.msra.mxu0 0.0
    %1352 = vmatprep.subr.mxu0 0.0
    %1353 = vmatpush1.msra.mxu0 0.0
    %1354 = vmatprep.subr.mxu0 0.0
    %1355 = vmatpush1.msra.mxu0 0.0
    %1356 = vmatprep.subr.mxu0 0.0
    %1357 = vmatpush1.msra.mxu0 0.0
    %1358 = vmatprep.subr.mxu0 0.0
    %1359 = vmatpush1.msra.mxu0 0.0
    %1360 = vmatprep.subr.mxu0 0.0
    %1361 = vmatpush1.msra.mxu0 0.0
    %1362 = vmatprep.subr.mxu0 0.0
    %1363 = vmatpush1.msra.mxu0 0.0
    %1364 = vmatprep.subr.mxu0 0.0
    %1365 = vmatpush1.msra.mxu0 0.0
    %1366 = vmatprep.subr.mxu0 0.0
    %1367 = vmatpush1.msra.mxu0 0.0
    %1368 = vmatprep.subr.mxu0 0.0
    %1369 = vmatpush1.msra.mxu0 0.0
    %1370 = vmatprep.subr.mxu0 0.0
    %1371 = vmatpush1.msra.mxu0 0.0
    %1372 = vmatprep.subr.mxu0 0.0
    %1373 = vmatpush1.msra.mxu0 0.0
    %1374 = vmatprep.subr.mxu0 0.0
    %1375 = vmatpush1.msra.mxu0 0.0
    %1376 = vmatprep.subr.mxu0 0.0
    %1377 = vmatpush1.msra.mxu0 0.0
    %1378 = vmatprep.subr.mxu0 0.0
    %1379 = vmatpush1.msra.mxu0 0.0
    %1380 = vmatprep.subr.mxu0 0.0
    %1381 = vmatpush1.msra.mxu0 0.0
    %1382 = vmatprep.subr.mxu0 0.0
    %1383 = vmatpush1.msra.mxu0 0.0
    %1384 = vmatprep.subr.mxu0 0.0
    %1385 = vmatpush1.msra.mxu0 0.0
    %1386 = vmatprep.subr.mxu0 0.0
    %1387 = vmatpush1.msra.mxu0 0.0
    %1388 = vmatprep.subr.mxu0 0.0
    %1389 = vmatpush1.msra.mxu0 0.0
    %1390 = vmatprep.subr.mxu0 0.0
    %1391 = vmatpush1.msra.mxu0 0.0
    %1392 = vmatprep.subr.mxu0 0.0
    %1393 = vmatpush1.msra.mxu0 0.0
    %1394 = vmatprep.subr.mxu0 0.0
    %1395 = vmatpush1.msra.mxu0 0.0
    %1396 = vmatprep.subr.mxu0 0.0
    %1397 = vmatpush1.msra.mxu0 0.0
    %1398 = vmatprep.subr.mxu0 0.0
    %1399 = vmatpush1.msra.mxu0 0.0
    %1400 = vmatprep.subr.mxu0 0.0
    %1401 = vmatpush1.msra.mxu0 0.0
    %1402 = vmatprep.subr.mxu0 0.0
    %1403 = vmatpush1.msra.mxu0 0.0
    %1404 = vmatprep.subr.mxu0 0.0
    %1405 = vmatpush1.msra.mxu0 0.0
    %1406 = vmatprep.subr.mxu0 0.0
    %1407 = vmatpush1.msra.mxu0 0.0
    %1408 = vmatprep.mubr.f32.mxu0 0.0
    %1409 = vmatmul.mubr.f32.gmra.mrb[0].mxu0 %v1342
    %v1410 = vpop.f32.mrb[0].mxu0
    %v1411 = vadd.f32 0.0, %v1410
    %v1412 = vpop.f32.mrb[0].mxu0
    %1413 = vdwg.mxu0
    %1414 = vrot.lane.b32.xlu0 %v107, 72
    %v1415 = vpop.permute.xlu0 %1414
    %1417 = vrot.lane.b32.xlu0 %v113, 72
    %v1418 = vpop.permute.xlu0 %1417
    %v1421 = vsel %vm115, %v1411, 0
    %1423 = vmatprep.subr.mxu0 0.0
    %1424 = vmatpush1.msra.mxu0 %v1415
    %1425 = vmatprep.subr.mxu0 0.0
    %1426 = vmatpush1.msra.mxu0 0.0
    %1427 = vmatprep.subr.mxu0 0.0
    %1428 = vmatpush1.msra.mxu0 0.0
    %1429 = vmatprep.subr.mxu0 0.0
    %1430 = vmatpush1.msra.mxu0 0.0
    %1431 = vmatprep.subr.mxu0 0.0
    %1432 = vmatpush1.msra.mxu0 0.0
    %1433 = vmatprep.subr.mxu0 0.0
    %1434 = vmatpush1.msra.mxu0 0.0
    %1435 = vmatprep.subr.mxu0 0.0
    %1436 = vmatpush1.msra.mxu0 0.0
    %1437 = vmatprep.subr.mxu0 0.0
    %1438 = vmatpush1.msra.mxu0 0.0
    %1439 = vmatprep.subr.mxu0 0.0
    %1440 = vmatpush1.msra.mxu0 0.0
    %1441 = vmatprep.subr.mxu0 0.0
    %1442 = vmatpush1.msra.mxu0 0.0
    %1443 = vmatprep.subr.mxu0 0.0
    %1444 = vmatpush1.msra.mxu0 0.0
    %1445 = vmatprep.subr.mxu0 0.0
    %1446 = vmatpush1.msra.mxu0 0.0
    %1447 = vmatprep.subr.mxu0 0.0
    %1448 = vmatpush1.msra.mxu0 0.0
    %1449 = vmatprep.subr.mxu0 0.0
    %1450 = vmatpush1.msra.mxu0 0.0
    %1451 = vmatprep.subr.mxu0 0.0
    %1452 = vmatpush1.msra.mxu0 0.0
    %1453 = vmatprep.subr.mxu0 0.0
    %1454 = vmatpush1.msra.mxu0 0.0
    %1455 = vmatprep.subr.mxu0 0.0
    %1456 = vmatpush1.msra.mxu0 0.0
    %1457 = vmatprep.subr.mxu0 0.0
    %1458 = vmatpush1.msra.mxu0 0.0
    %1459 = vmatprep.subr.mxu0 0.0
    %1460 = vmatpush1.msra.mxu0 0.0
    %1461 = vmatprep.subr.mxu0 0.0
    %1462 = vmatpush1.msra.mxu0 0.0
    %1463 = vmatprep.subr.mxu0 0.0
    %1464 = vmatpush1.msra.mxu0 0.0
    %1465 = vmatprep.subr.mxu0 0.0
    %1466 = vmatpush1.msra.mxu0 0.0
    %1467 = vmatprep.subr.mxu0 0.0
    %1468 = vmatpush1.msra.mxu0 0.0
    %1469 = vmatprep.subr.mxu0 0.0
    %1470 = vmatpush1.msra.mxu0 0.0
    %1471 = vmatprep.subr.mxu0 0.0
    %1472 = vmatpush1.msra.mxu0 0.0
    %1473 = vmatprep.subr.mxu0 0.0
    %1474 = vmatpush1.msra.mxu0 0.0
    %1475 = vmatprep.subr.mxu0 0.0
    %1476 = vmatpush1.msra.mxu0 0.0
    %1477 = vmatprep.subr.mxu0 0.0
    %1478 = vmatpush1.msra.mxu0 0.0
    %1479 = vmatprep.subr.mxu0 0.0
    %1480 = vmatpush1.msra.mxu0 0.0
    %1481 = vmatprep.subr.mxu0 0.0
    %1482 = vmatpush1.msra.mxu0 0.0
    %1483 = vmatprep.subr.mxu0 0.0
    %1484 = vmatpush1.msra.mxu0 0.0
    %1485 = vmatprep.subr.mxu0 0.0
    %1486 = vmatpush1.msra.mxu0 0.0
    %1487 = vmatprep.mubr.f32.mxu0 0.0
    %1488 = vmatmul.mubr.f32.gmra.mrb[0].mxu0 %v1421
    %v1489 = vpop.f32.mrb[0].mxu0
    %v1490 = vadd.f32 %v1418, %v1489
    %v1491 = vpop.f32.mrb[0].mxu0
    %1492 = vdwg.mxu0
    %v1493 = vadd.f32 %v100, %v1490
    %1494 = vrot.lane.b32.xlu0 %v107, 64
    %v1495 = vpop.permute.xlu0 %1494
    %1497 = vrot.lane.b32.xlu0 %v113, 64
    %v1498 = vpop.permute.xlu0 %1497
    %v1501 = vsel %vm115, %v1493, 0
    %1503 = vmatprep.subr.mxu0 0.0
    %1504 = vmatpush1.msra.mxu0 %v1495
    %1505 = vmatprep.subr.mxu0 0.0
    %1506 = vmatpush1.msra.mxu0 0.0
    %1507 = vmatprep.subr.mxu0 0.0
    %1508 = vmatpush1.msra.mxu0 0.0
    %1509 = vmatprep.subr.mxu0 0.0
    %1510 = vmatpush1.msra.mxu0 0.0
    %1511 = vmatprep.subr.mxu0 0.0
    %1512 = vmatpush1.msra.mxu0 0.0
    %1513 = vmatprep.subr.mxu0 0.0
    %1514 = vmatpush1.msra.mxu0 0.0
    %1515 = vmatprep.subr.mxu0 0.0
    %1516 = vmatpush1.msra.mxu0 0.0
    %1517 = vmatprep.subr.mxu0 0.0
    %1518 = vmatpush1.msra.mxu0 0.0
    %1519 = vmatprep.subr.mxu0 0.0
    %1520 = vmatpush1.msra.mxu0 0.0
    %1521 = vmatprep.subr.mxu0 0.0
    %1522 = vmatpush1.msra.mxu0 0.0
    %1523 = vmatprep.subr.mxu0 0.0
    %1524 = vmatpush1.msra.mxu0 0.0
    %1525 = vmatprep.subr.mxu0 0.0
    %1526 = vmatpush1.msra.mxu0 0.0
    %1527 = vmatprep.subr.mxu0 0.0
    %1528 = vmatpush1.msra.mxu0 0.0
    %1529 = vmatprep.subr.mxu0 0.0
    %1530 = vmatpush1.msra.mxu0 0.0
    %1531 = vmatprep.subr.mxu0 0.0
    %1532 = vmatpush1.msra.mxu0 0.0
    %1533 = vmatprep.subr.mxu0 0.0
    %1534 = vmatpush1.msra.mxu0 0.0
    %1535 = vmatprep.subr.mxu0 0.0
    %1536 = vmatpush1.msra.mxu0 0.0
    %1537 = vmatprep.subr.mxu0 0.0
    %1538 = vmatpush1.msra.mxu0 0.0
    %1539 = vmatprep.subr.mxu0 0.0
    %1540 = vmatpush1.msra.mxu0 0.0
    %1541 = vmatprep.subr.mxu0 0.0
    %1542 = vmatpush1.msra.mxu0 0.0
    %1543 = vmatprep.subr.mxu0 0.0
    %1544 = vmatpush1.msra.mxu0 0.0
    %1545 = vmatprep.subr.mxu0 0.0
    %1546 = vmatpush1.msra.mxu0 0.0
    %1547 = vmatprep.subr.mxu0 0.0
    %1548 = vmatpush1.msra.mxu0 0.0
    %1549 = vmatprep.subr.mxu0 0.0
    %1550 = vmatpush1.msra.mxu0 0.0
    %1551 = vmatprep.subr.mxu0 0.0
    %1552 = vmatpush1.msra.mxu0 0.0
    %1553 = vmatprep.subr.mxu0 0.0
    %1554 = vmatpush1.msra.mxu0 0.0
    %1555 = vmatprep.subr.mxu0 0.0
    %1556 = vmatpush1.msra.mxu0 0.0
    %1557 = vmatprep.subr.mxu0 0.0
    %1558 = vmatpush1.msra.mxu0 0.0
    %1559 = vmatprep.subr.mxu0 0.0
    %1560 = vmatpush1.msra.mxu0 0.0
    %1561 = vmatprep.subr.mxu0 0.0
    %1562 = vmatpush1.msra.mxu0 0.0
    %1563 = vmatprep.subr.mxu0 0.0
    %1564 = vmatpush1.msra.mxu0 0.0
    %1565 = vmatprep.subr.mxu0 0.0
    %1566 = vmatpush1.msra.mxu0 0.0
    %1567 = vmatprep.mubr.f32.mxu0 0.0
    %1568 = vmatmul.mubr.f32.gmra.mrb[0].mxu0 %v1501
    %v1569 = vpop.f32.mrb[0].mxu0
    %v1570 = vadd.f32 %v1498, %v1569
    %v1571 = vpop.f32.mrb[0].mxu0
    %1572 = vdwg.mxu0
    %1573 = vrot.lane.b32.xlu0 %v107, 56
    %v1574 = vpop.permute.xlu0 %1573
    %1576 = vrot.lane.b32.xlu0 %v113, 56
    %v1577 = vpop.permute.xlu0 %1576
    %v1580 = vsel %vm115, %v1067, 0
    %v1583 = vsel %vm115, %v1068, 0
    %v1586 = vsel %vm115, %v1069, 0
    %1588 = vmatprep.subr.mxu0 0.0
    %1589 = vmatpush1.msra.mxu0 %v1574
    %1590 = vmatprep.subr.mxu0 0.0
    %1591 = vmatpush1.msra.mxu0 0.0
    %1592 = vmatprep.subr.mxu0 0.0
    %1593 = vmatpush1.msra.mxu0 0.0
    %1594 = vmatprep.subr.mxu0 0.0
    %1595 = vmatpush1.msra.mxu0 0.0
    %1596 = vmatprep.subr.mxu0 0.0
    %1597 = vmatpush1.msra.mxu0 0.0
    %1598 = vmatprep.subr.mxu0 0.0
    %1599 = vmatpush1.msra.mxu0 0.0
    %1600 = vmatprep.subr.mxu0 0.0
    %1601 = vmatpush1.msra.mxu0 0.0
    %1602 = vmatprep.subr.mxu0 0.0
    %1603 = vmatpush1.msra.mxu0 0.0
    %1604 = vmatprep.subr.mxu0 0.0
    %1605 = vmatpush1.msra.mxu0 0.0
    %1606 = vmatprep.subr.mxu0 0.0
    %1607 = vmatpush1.msra.mxu0 0.0
    %1608 = vmatprep.subr.mxu0 0.0
    %1609 = vmatpush1.msra.mxu0 0.0
    %1610 = vmatprep.subr.mxu0 0.0
    %1611 = vmatpush1.msra.mxu0 0.0
    %1612 = vmatprep.subr.mxu0 0.0
    %1613 = vmatpush1.msra.mxu0 0.0
    %1614 = vmatprep.subr.mxu0 0.0
    %1615 = vmatpush1.msra.mxu0 0.0
    %1616 = vmatprep.subr.mxu0 0.0
    %1617 = vmatpush1.msra.mxu0 0.0
    %1618 = vmatprep.subr.mxu0 0.0
    %1619 = vmatpush1.msra.mxu0 0.0
    %1620 = vmatprep.subr.mxu0 0.0
    %1621 = vmatpush1.msra.mxu0 0.0
    %1622 = vmatprep.subr.mxu0 0.0
    %1623 = vmatpush1.msra.mxu0 0.0
    %1624 = vmatprep.subr.mxu0 0.0
    %1625 = vmatpush1.msra.mxu0 0.0
    %1626 = vmatprep.subr.mxu0 0.0
    %1627 = vmatpush1.msra.mxu0 0.0
    %1628 = vmatprep.subr.mxu0 0.0
    %1629 = vmatpush1.msra.mxu0 0.0
    %1630 = vmatprep.subr.mxu0 0.0
    %1631 = vmatpush1.msra.mxu0 0.0
    %1632 = vmatprep.subr.mxu0 0.0
    %1633 = vmatpush1.msra.mxu0 0.0
    %1634 = vmatprep.subr.mxu0 0.0
    %1635 = vmatpush1.msra.mxu0 0.0
    %1636 = vmatprep.subr.mxu0 0.0
    %1637 = vmatpush1.msra.mxu0 0.0
    %1638 = vmatprep.subr.mxu0 0.0
    %1639 = vmatpush1.msra.mxu0 0.0
    %1640 = vmatprep.subr.mxu0 0.0
    %1641 = vmatpush1.msra.mxu0 0.0
    %1642 = vmatprep.subr.mxu0 0.0
    %1643 = vmatpush1.msra.mxu0 0.0
    %1644 = vmatprep.subr.mxu0 0.0
    %1645 = vmatpush1.msra.mxu0 0.0
    %1646 = vmatprep.subr.mxu0 0.0
    %1647 = vmatpush1.msra.mxu0 0.0
    %1648 = vmatprep.subr.mxu0 0.0
    %1649 = vmatpush1.msra.mxu0 0.0
    %1650 = vmatprep.subr.mxu0 0.0
    %1651 = vmatpush1.msra.mxu0 0.0
    %1652 = vmatprep.mubr.f32.mxu0 0.0
    %1653 = vmatmul.mubr.f32.gmra.mrb[0].mxu0 %v1580
    %v1654 = vpop.f32.mrb[0].mxu0
    %v1655 = vadd.f32 %v1577, %v1654
    %v1656 = vpop.f32.mrb[0].mxu0
    %1657 = vmatprep.mubr.f32.mxu0 0.0
    %1658 = vmatmul.mubr.f32.gmra.mrb[0].mxu0 %v1583
    %v1659 = vpop.f32.mrb[0].mxu0
    %v1660 = vadd.f32 %v1577, %v1659
    %v1661 = vpop.f32.mrb[0].mxu0
    %1662 = vmatprep.mubr.f32.mxu0 0.0
    %1663 = vmatmul.mubr.f32.gmra.mrb[0].mxu0 %v1586
    %v1664 = vpop.f32.mrb[0].mxu0
    %v1665 = vadd.f32 %v1577, %v1664
    %v1666 = vpop.f32.mrb[0].mxu0
    %1667 = vdwg.mxu0
    %v1671 = vrot.slane %v1655, 4
    %v1672 = vrot.slane %v1660, 4
    %v1673 = vsel %vm218, %v1671, %v1672
    %v1674 = vrot.slane %v1665, 4
    %v1675 = vsel %vm218, %v1672, %v1674
    %v1679 = vsel %vm218, %v1665, %v1671
    %v1680 = vmul.f32 %v1655, %v205
    %v1681 = vmul.f32 %v1660, %v206
    %v1682 = vmul.f32 %v1679, %v207
    %v1683 = vmul.f32 %v1673, %v208
    %v1684 = vmul.f32 %v1675, %v209
    %v1685 = vmul.f32 %v1655, %v210
    %v1686 = vmul.f32 %v1660, %v211
    %v1687 = vmul.f32 %v1679, %v212
    %v1688 = vmul.f32 %v1673, %v213
    %v1689 = vmul.f32 %v1675, %v214
    %v1690 = vmul.f32 %v1655, %v239
    %v1691 = vmul.f32 %v1660, %v241
    %v1692 = vmul.f32 %v1679, %v243
    %v1693 = vmul.f32 %v1673, %v245
    %v1694 = vmul.f32 %v1675, %v247
    %v1695 = vmul.f32 %v1655, %v249
    %v1696 = vmul.f32 %v1660, %v251
    %v1697 = vmul.f32 %v1679, %v253
    %v1698 = vmul.f32 %v1673, %v255
    %v1699 = vmul.f32 %v1675, %v257
    %v1701 = vsel %vm115, %v1570, 0
    %v1704 = vsel %vm115, %v1680, 0
    %v1707 = vsel %vm115, %v1681, 0
    %v1710 = vsel %vm115, %v1682, 0
    %v1713 = vsel %vm115, %v1683, 0
    %v1716 = vsel %vm115, %v1684, 0
    %v1719 = vsel %vm115, %v1685, 0
    %v1722 = vsel %vm115, %v1686, 0
    %v1725 = vsel %vm115, %v1687, 0
    %v1728 = vsel %vm115, %v1688, 0
    %v1731 = vsel %vm115, %v1689, 0
    %1733 = vmatprep.subr.mxu0 0.0
    %1734 = vmatpush1.xpose.msra.mxu0 %v1704
    %1735 = vmatprep.subr.mxu0 0.0
    %1736 = vmatpush1.xpose.msra.mxu0 %v1707
    %1737 = vmatprep.subr.mxu0 0.0
    %1738 = vmatpush1.xpose.msra.mxu0 %v1710
    %1739 = vmatprep.subr.mxu0 0.0
    %1740 = vmatpush1.xpose.msra.mxu0 %v1713
    %1741 = vmatprep.subr.mxu0 0.0
    %1742 = vmatpush1.xpose.msra.mxu0 %v1716
    %1743 = vmatprep.subr.mxu0 0.0
    %1744 = vmatpush1.xpose.msra.mxu0 %v1719
    %1745 = vmatprep.subr.mxu0 0.0
    %1746 = vmatpush1.xpose.msra.mxu0 %v1722
    %1747 = vmatprep.subr.mxu0 0.0
    %1748 = vmatpush1.xpose.msra.mxu0 %v1725
    %1749 = vmatprep.subr.mxu0 0.0
    %1750 = vmatpush1.xpose.msra.mxu0 %v1728
    %1751 = vmatprep.subr.mxu0 0.0
    %1752 = vmatpush1.xpose.msra.mxu0 %v1731
    %1753 = vmatprep.subr.mxu0 0.0
    %1754 = vmatpush1.xpose.msra.mxu0 0.0
    %1755 = vmatprep.subr.mxu0 0.0
    %1756 = vmatpush1.xpose.msra.mxu0 0.0
    %1757 = vmatprep.subr.mxu0 0.0
    %1758 = vmatpush1.xpose.msra.mxu0 0.0
    %1759 = vmatprep.subr.mxu0 0.0
    %1760 = vmatpush1.xpose.msra.mxu0 0.0
    %1761 = vmatprep.subr.mxu0 0.0
    %1762 = vmatpush1.xpose.msra.mxu0 0.0
    %1763 = vmatprep.subr.mxu0 0.0
    %1764 = vmatpush1.xpose.msra.mxu0 0.0
    %1765 = vmatprep.subr.mxu0 0.0
    %1766 = vmatpush1.xpose.msra.mxu0 0.0
    %1767 = vmatprep.subr.mxu0 0.0
    %1768 = vmatpush1.xpose.msra.mxu0 0.0
    %1769 = vmatprep.subr.mxu0 0.0
    %1770 = vmatpush1.xpose.msra.mxu0 0.0
    %1771 = vmatprep.subr.mxu0 0.0
    %1772 = vmatpush1.xpose.msra.mxu0 0.0
    %1773 = vmatprep.subr.mxu0 0.0
    %1774 = vmatpush1.xpose.msra.mxu0 0.0
    %1775 = vmatprep.subr.mxu0 0.0
    %1776 = vmatpush1.xpose.msra.mxu0 0.0
    %1777 = vmatprep.subr.mxu0 0.0
    %1778 = vmatpush1.xpose.msra.mxu0 0.0
    %1779 = vmatprep.subr.mxu0 0.0
    %1780 = vmatpush1.xpose.msra.mxu0 0.0
    %1781 = vmatprep.subr.mxu0 0.0
    %1782 = vmatpush1.xpose.msra.mxu0 0.0
    %1783 = vmatprep.subr.mxu0 0.0
    %1784 = vmatpush1.xpose.msra.mxu0 0.0
    %1785 = vmatprep.subr.mxu0 0.0
    %1786 = vmatpush1.xpose.msra.mxu0 0.0
    %1787 = vmatprep.subr.mxu0 0.0
    %1788 = vmatpush1.xpose.msra.mxu0 0.0
    %1789 = vmatprep.subr.mxu0 0.0
    %1790 = vmatpush1.xpose.msra.mxu0 0.0
    %1791 = vmatprep.subr.mxu0 0.0
    %1792 = vmatpush1.xpose.msra.mxu0 0.0
    %1793 = vmatprep.subr.mxu0 0.0
    %1794 = vmatpush1.xpose.msra.mxu0 0.0
    %1795 = vmatprep.subr.mxu0 0.0
    %1796 = vmatpush1.xpose.msra.mxu0 0.0
    %1797 = vmatprep.mubr.f32.mxu0 0.0
    %1798 = vmatmul.mubr.f32.gmra.mrb[0].mxu0 %v1701
    %v1799 = vpop.f32.mrb[0].mxu0
    %v1800 = vadd.f32 0.0, %v1799
    %v1801 = vpop.f32.mrb[0].mxu0
    %1802 = vdwg.mxu0
    %1804 = vrot.lane.b32.xlu0 %v1249, 120
    %v1805 = vpop.permute.xlu0 %1804
    %v1807 = vsub.f32 %v1800, %v1805
    %vm1808 = vcmask 648192
    %v1809 = vsel %vm1808, %v1807, -inf
    %1810 = vmax.xlane.f32.xlu0 %v1809
    %v1811 = vpop.xlane.xlu0 %1810
    %v1812 = vsub.f32 %v1807, %v1811
    %v1813 = vmul.f32 %v1812, 1.442695
    %v1814 = vpow.pop %v1813
    %1816 = vrot.lane.b32.xlu0 %v1150, 120
    %v1817 = vpop.permute.xlu0 %1816
    %v1820 = vsel %vm472, %v1814, 0
    %1822 = vmatprep.subr.mxu0 0.0
    %1823 = vmatpush1.msra.mxu0 %v493
    %1824 = vmatprep.subr.mxu0 0.0
    %1825 = vmatpush1.msra.mxu0 %v495
    %1826 = vmatprep.subr.mxu0 0.0
    %1827 = vmatpush1.msra.mxu0 %v497
    %1828 = vmatprep.subr.mxu0 0.0
    %1829 = vmatpush1.msra.mxu0 %v499
    %1830 = vmatprep.subr.mxu0 0.0
    %1831 = vmatpush1.msra.mxu0 %v501
    %1832 = vmatprep.subr.mxu0 0.0
    %1833 = vmatpush1.msra.mxu0 %v503
    %1834 = vmatprep.subr.mxu0 0.0
    %1835 = vmatpush1.msra.mxu0 %v505
    %1836 = vmatprep.subr.mxu0 0.0
    %1837 = vmatpush1.msra.mxu0 %v507
    %1838 = vmatprep.subr.mxu0 0.0
    %1839 = vmatpush1.msra.mxu0 %v509
    %1840 = vmatprep.subr.mxu0 0.0
    %1841 = vmatpush1.msra.mxu0 %v511
    %1842 = vmatprep.subr.mxu0 0.0
    %1843 = vmatpush1.msra.mxu0 0.0
    %1844 = vmatprep.subr.mxu0 0.0
    %1845 = vmatpush1.msra.mxu0 0.0
    %1846 = vmatprep.subr.mxu0 0.0
    %1847 = vmatpush1.msra.mxu0 0.0
    %1848 = vmatprep.subr.mxu0 0.0
    %1849 = vmatpush1.msra.mxu0 0.0
    %1850 = vmatprep.subr.mxu0 0.0
    %1851 = vmatpush1.msra.mxu0 0.0
    %1852 = vmatprep.subr.mxu0 0.0
    %1853 = vmatpush1.msra.mxu0 0.0
    %1854 = vmatprep.subr.mxu0 0.0
    %1855 = vmatpush1.msra.mxu0 0.0
    %1856 = vmatprep.subr.mxu0 0.0
    %1857 = vmatpush1.msra.mxu0 0.0
    %1858 = vmatprep.subr.mxu0 0.0
    %1859 = vmatpush1.msra.mxu0 0.0
    %1860 = vmatprep.subr.mxu0 0.0
    %1861 = vmatpush1.msra.mxu0 0.0
    %1862 = vmatprep.subr.mxu0 0.0
    %1863 = vmatpush1.msra.mxu0 0.0
    %1864 = vmatprep.subr.mxu0 0.0
    %1865 = vmatpush1.msra.mxu0 0.0
    %1866 = vmatprep.subr.mxu0 0.0
    %1867 = vmatpush1.msra.mxu0 0.0
    %1868 = vmatprep.subr.mxu0 0.0
    %1869 = vmatpush1.msra.mxu0 0.0
    %1870 = vmatprep.subr.mxu0 0.0
    %1871 = vmatpush1.msra.mxu0 0.0
    %1872 = vmatprep.subr.mxu0 0.0
    %1873 = vmatpush1.msra.mxu0 0.0
    %1874 = vmatprep.subr.mxu0 0.0
    %1875 = vmatpush1.msra.mxu0 0.0
    %1876 = vmatprep.subr.mxu0 0.0
    %1877 = vmatpush1.msra.mxu0 0.0
    %1878 = vmatprep.subr.mxu0 0.0
    %1879 = vmatpush1.msra.mxu0 0.0
    %1880 = vmatprep.subr.mxu0 0.0
    %1881 = vmatpush1.msra.mxu0 0.0
    %1882 = vmatprep.subr.mxu0 0.0
    %1883 = vmatpush1.msra.mxu0 0.0
    %1884 = vmatprep.subr.mxu0 0.0
    %1885 = vmatpush1.msra.mxu0 0.0
    %1886 = vmatprep.mubr.f32.mxu0 0.0
    %1887 = vmatmul.mubr.f32.gmra.mrb[0].mxu0 %v1820
    %v1888 = vpop.f32.mrb[0].mxu0
    %v1889 = vadd.f32 %v1817, %v1888
    %v1890 = vpop.f32.mrb[0].mxu0
    %1891 = vdwg.mxu0
    %v1892 = vadd.f32 %v1889, 1e-30
    %v1893 = vrcp.pop %v1892
    %v1894 = vmul.f32 %v1814, %v1893
    %1905 = vrot.lane.b32.xlu0 %v1690, 120
    %v1906 = vpop.permute.xlu0 %1905
    %1907 = vrot.lane.b32.xlu0 %v1691, 120
    %v1908 = vpop.permute.xlu0 %1907
    %1909 = vrot.lane.b32.xlu0 %v1692, 120
    %v1910 = vpop.permute.xlu0 %1909
    %1911 = vrot.lane.b32.xlu0 %v1693, 120
    %v1912 = vpop.permute.xlu0 %1911
    %1913 = vrot.lane.b32.xlu0 %v1694, 120
    %v1914 = vpop.permute.xlu0 %1913
    %1915 = vrot.lane.b32.xlu0 %v1695, 120
    %v1916 = vpop.permute.xlu0 %1915
    %1917 = vrot.lane.b32.xlu0 %v1696, 120
    %v1918 = vpop.permute.xlu0 %1917
    %1919 = vrot.lane.b32.xlu0 %v1697, 120
    %v1920 = vpop.permute.xlu0 %1919
    %1921 = vrot.lane.b32.xlu0 %v1698, 120
    %v1922 = vpop.permute.xlu0 %1921
    %1923 = vrot.lane.b32.xlu0 %v1699, 120
    %v1924 = vpop.permute.xlu0 %1923
    %v1936 = vsel %vm472, %v1894, 0
    %1938 = vmatprep.subr.mxu0 0.0
    %1939 = vmatpush1.msra.mxu0 %v1906
    %1940 = vmatprep.subr.mxu0 0.0
    %1941 = vmatpush1.msra.mxu0 %v1908
    %1942 = vmatprep.subr.mxu0 0.0
    %1943 = vmatpush1.msra.mxu0 %v1910
    %1944 = vmatprep.subr.mxu0 0.0
    %1945 = vmatpush1.msra.mxu0 %v1912
    %1946 = vmatprep.subr.mxu0 0.0
    %1947 = vmatpush1.msra.mxu0 %v1914
    %1948 = vmatprep.subr.mxu0 0.0
    %1949 = vmatpush1.msra.mxu0 %v1916
    %1950 = vmatprep.subr.mxu0 0.0
    %1951 = vmatpush1.msra.mxu0 %v1918
    %1952 = vmatprep.subr.mxu0 0.0
    %1953 = vmatpush1.msra.mxu0 %v1920
    %1954 = vmatprep.subr.mxu0 0.0
    %1955 = vmatpush1.msra.mxu0 %v1922
    %1956 = vmatprep.subr.mxu0 0.0
    %1957 = vmatpush1.msra.mxu0 %v1924
    %1958 = vmatprep.subr.mxu0 0.0
    %1959 = vmatpush1.msra.mxu0 0.0
    %1960 = vmatprep.subr.mxu0 0.0
    %1961 = vmatpush1.msra.mxu0 0.0
    %1962 = vmatprep.subr.mxu0 0.0
    %1963 = vmatpush1.msra.mxu0 0.0
    %1964 = vmatprep.subr.mxu0 0.0
    %1965 = vmatpush1.msra.mxu0 0.0
    %1966 = vmatprep.subr.mxu0 0.0
    %1967 = vmatpush1.msra.mxu0 0.0
    %1968 = vmatprep.subr.mxu0 0.0
    %1969 = vmatpush1.msra.mxu0 0.0
    %1970 = vmatprep.subr.mxu0 0.0
    %1971 = vmatpush1.msra.mxu0 0.0
    %1972 = vmatprep.subr.mxu0 0.0
    %1973 = vmatpush1.msra.mxu0 0.0
    %1974 = vmatprep.subr.mxu0 0.0
    %1975 = vmatpush1.msra.mxu0 0.0
    %1976 = vmatprep.subr.mxu0 0.0
    %1977 = vmatpush1.msra.mxu0 0.0
    %1978 = vmatprep.subr.mxu0 0.0
    %1979 = vmatpush1.msra.mxu0 0.0
    %1980 = vmatprep.subr.mxu0 0.0
    %1981 = vmatpush1.msra.mxu0 0.0
    %1982 = vmatprep.subr.mxu0 0.0
    %1983 = vmatpush1.msra.mxu0 0.0
    %1984 = vmatprep.subr.mxu0 0.0
    %1985 = vmatpush1.msra.mxu0 0.0
    %1986 = vmatprep.subr.mxu0 0.0
    %1987 = vmatpush1.msra.mxu0 0.0
    %1988 = vmatprep.subr.mxu0 0.0
    %1989 = vmatpush1.msra.mxu0 0.0
    %1990 = vmatprep.subr.mxu0 0.0
    %1991 = vmatpush1.msra.mxu0 0.0
    %1992 = vmatprep.subr.mxu0 0.0
    %1993 = vmatpush1.msra.mxu0 0.0
    %1994 = vmatprep.subr.mxu0 0.0
    %1995 = vmatpush1.msra.mxu0 0.0
    %1996 = vmatprep.subr.mxu0 0.0
    %1997 = vmatpush1.msra.mxu0 0.0
    %1998 = vmatprep.subr.mxu0 0.0
    %1999 = vmatpush1.msra.mxu0 0.0
    %2000 = vmatprep.subr.mxu0 0.0
    %2001 = vmatpush1.msra.mxu0 0.0
    %2002 = vmatprep.mubr.f32.mxu0 0.0
    %2003 = vmatmul.mubr.f32.gmra.mrb[0].mxu0 %v1936
    %v2004 = vpop.f32.mrb[0].mxu0
    %v2005 = vadd.f32 0.0, %v2004
    %v2006 = vpop.f32.mrb[0].mxu0
    %2007 = vdwg.mxu0
    %2008 = vrot.lane.b32.xlu0 %v107, 40
    %v2009 = vpop.permute.xlu0 %2008
    %2011 = vrot.lane.b32.xlu0 %v113, 40
    %v2012 = vpop.permute.xlu0 %2011
    %v2015 = vsel %vm115, %v2005, 0
    %2017 = vmatprep.subr.mxu0 0.0
    %2018 = vmatpush1.msra.mxu0 %v2009
    %2019 = vmatprep.subr.mxu0 0.0
    %2020 = vmatpush1.msra.mxu0 0.0
    %2021 = vmatprep.subr.mxu0 0.0
    %2022 = vmatpush1.msra.mxu0 0.0
    %2023 = vmatprep.subr.mxu0 0.0
    %2024 = vmatpush1.msra.mxu0 0.0
    %2025 = vmatprep.subr.mxu0 0.0
    %2026 = vmatpush1.msra.mxu0 0.0
    %2027 = vmatprep.subr.mxu0 0.0
    %2028 = vmatpush1.msra.mxu0 0.0
    %2029 = vmatprep.subr.mxu0 0.0
    %2030 = vmatpush1.msra.mxu0 0.0
    %2031 = vmatprep.subr.mxu0 0.0
    %2032 = vmatpush1.msra.mxu0 0.0
    %2033 = vmatprep.subr.mxu0 0.0
    %2034 = vmatpush1.msra.mxu0 0.0
    %2035 = vmatprep.subr.mxu0 0.0
    %2036 = vmatpush1.msra.mxu0 0.0
    %2037 = vmatprep.subr.mxu0 0.0
    %2038 = vmatpush1.msra.mxu0 0.0
    %2039 = vmatprep.subr.mxu0 0.0
    %2040 = vmatpush1.msra.mxu0 0.0
    %2041 = vmatprep.subr.mxu0 0.0
    %2042 = vmatpush1.msra.mxu0 0.0
    %2043 = vmatprep.subr.mxu0 0.0
    %2044 = vmatpush1.msra.mxu0 0.0
    %2045 = vmatprep.subr.mxu0 0.0
    %2046 = vmatpush1.msra.mxu0 0.0
    %2047 = vmatprep.subr.mxu0 0.0
    %2048 = vmatpush1.msra.mxu0 0.0
    %2049 = vmatprep.subr.mxu0 0.0
    %2050 = vmatpush1.msra.mxu0 0.0
    %2051 = vmatprep.subr.mxu0 0.0
    %2052 = vmatpush1.msra.mxu0 0.0
    %2053 = vmatprep.subr.mxu0 0.0
    %2054 = vmatpush1.msra.mxu0 0.0
    %2055 = vmatprep.subr.mxu0 0.0
    %2056 = vmatpush1.msra.mxu0 0.0
    %2057 = vmatprep.subr.mxu0 0.0
    %2058 = vmatpush1.msra.mxu0 0.0
    %2059 = vmatprep.subr.mxu0 0.0
    %2060 = vmatpush1.msra.mxu0 0.0
    %2061 = vmatprep.subr.mxu0 0.0
    %2062 = vmatpush1.msra.mxu0 0.0
    %2063 = vmatprep.subr.mxu0 0.0
    %2064 = vmatpush1.msra.mxu0 0.0
    %2065 = vmatprep.subr.mxu0 0.0
    %2066 = vmatpush1.msra.mxu0 0.0
    %2067 = vmatprep.subr.mxu0 0.0
    %2068 = vmatpush1.msra.mxu0 0.0
    %2069 = vmatprep.subr.mxu0 0.0
    %2070 = vmatpush1.msra.mxu0 0.0
    %2071 = vmatprep.subr.mxu0 0.0
    %2072 = vmatpush1.msra.mxu0 0.0
    %2073 = vmatprep.subr.mxu0 0.0
    %2074 = vmatpush1.msra.mxu0 0.0
    %2075 = vmatprep.subr.mxu0 0.0
    %2076 = vmatpush1.msra.mxu0 0.0
    %2077 = vmatprep.subr.mxu0 0.0
    %2078 = vmatpush1.msra.mxu0 0.0
    %2079 = vmatprep.subr.mxu0 0.0
    %2080 = vmatpush1.msra.mxu0 0.0
    %2081 = vmatprep.mubr.f32.mxu0 0.0
    %2082 = vmatmul.mubr.f32.gmra.mrb[0].mxu0 %v2015
    %v2083 = vpop.f32.mrb[0].mxu0
    %v2084 = vadd.f32 %v2012, %v2083
    %v2085 = vpop.f32.mrb[0].mxu0
    %2086 = vdwg.mxu0
    %v2087 = vadd.f32 %v1493, %v2084
    %2088 = vrot.lane.b32.xlu0 %v860, 80
    %v2089 = vpop.permute.xlu0 %2088
    %2091 = vrot.lane.b32.xlu0 %v868, 80
    %v2092 = vpop.permute.xlu0 %2091
    %v2095 = vsel %vm115, %v2087, 0
    %2097 = vmatprep.subr.mxu0 0.0
    %2098 = vmatpush1.msra.mxu0 %v2089
    %2099 = vmatprep.subr.mxu0 0.0
    %2100 = vmatpush1.msra.mxu0 0.0
    %2101 = vmatprep.subr.mxu0 0.0
    %2102 = vmatpush1.msra.mxu0 0.0
    %2103 = vmatprep.subr.mxu0 0.0
    %2104 = vmatpush1.msra.mxu0 0.0
    %2105 = vmatprep.subr.mxu0 0.0
    %2106 = vmatpush1.msra.mxu0 0.0
    %2107 = vmatprep.subr.mxu0 0.0
    %2108 = vmatpush1.msra.mxu0 0.0
    %2109 = vmatprep.subr.mxu0 0.0
    %2110 = vmatpush1.msra.mxu0 0.0
    %2111 = vmatprep.subr.mxu0 0.0
    %2112 = vmatpush1.msra.mxu0 0.0
    %2113 = vmatprep.subr.mxu0 0.0
    %2114 = vmatpush1.msra.mxu0 0.0
    %2115 = vmatprep.subr.mxu0 0.0
    %2116 = vmatpush1.msra.mxu0 0.0
    %2117 = vmatprep.subr.mxu0 0.0
    %2118 = vmatpush1.msra.mxu0 0.0
    %2119 = vmatprep.subr.mxu0 0.0
    %2120 = vmatpush1.msra.mxu0 0.0
    %2121 = vmatprep.subr.mxu0 0.0
    %2122 = vmatpush1.msra.mxu0 0.0
    %2123 = vmatprep.subr.mxu0 0.0
    %2124 = vmatpush1.msra.mxu0 0.0
    %2125 = vmatprep.subr.mxu0 0.0
    %2126 = vmatpush1.msra.mxu0 0.0
    %2127 = vmatprep.subr.mxu0 0.0
    %2128 = vmatpush1.msra.mxu0 0.0
    %2129 = vmatprep.subr.mxu0 0.0
    %2130 = vmatpush1.msra.mxu0 0.0
    %2131 = vmatprep.subr.mxu0 0.0
    %2132 = vmatpush1.msra.mxu0 0.0
    %2133 = vmatprep.subr.mxu0 0.0
    %2134 = vmatpush1.msra.mxu0 0.0
    %2135 = vmatprep.subr.mxu0 0.0
    %2136 = vmatpush1.msra.mxu0 0.0
    %2137 = vmatprep.subr.mxu0 0.0
    %2138 = vmatpush1.msra.mxu0 0.0
    %2139 = vmatprep.subr.mxu0 0.0
    %2140 = vmatpush1.msra.mxu0 0.0
    %2141 = vmatprep.subr.mxu0 0.0
    %2142 = vmatpush1.msra.mxu0 0.0
    %2143 = vmatprep.subr.mxu0 0.0
    %2144 = vmatpush1.msra.mxu0 0.0
    %2145 = vmatprep.subr.mxu0 0.0
    %2146 = vmatpush1.msra.mxu0 0.0
    %2147 = vmatprep.subr.mxu0 0.0
    %2148 = vmatpush1.msra.mxu0 0.0
    %2149 = vmatprep.subr.mxu0 0.0
    %2150 = vmatpush1.msra.mxu0 0.0
    %2151 = vmatprep.subr.mxu0 0.0
    %2152 = vmatpush1.msra.mxu0 0.0
    %2153 = vmatprep.subr.mxu0 0.0
    %2154 = vmatpush1.msra.mxu0 0.0
    %2155 = vmatprep.subr.mxu0 0.0
    %2156 = vmatpush1.msra.mxu0 0.0
    %2157 = vmatprep.subr.mxu0 0.0
    %2158 = vmatpush1.msra.mxu0 0.0
    %2159 = vmatprep.subr.mxu0 0.0
    %2160 = vmatpush1.msra.mxu0 0.0
    %2161 = vmatprep.mubr.f32.mxu0 0.0
    %2162 = vmatmul.mubr.f32.gmra.mrb[0].mxu0 %v2095
    %v2163 = vpop.f32.mrb[0].mxu0
    %v2164 = vadd.f32 %v2092, %v2163
    %v2165 = vpop.f32.mrb[0].mxu0
    %2166 = vdwg.mxu0
    %vm2167 = vcmp.ge.f32.partialorder %v2164, 0.0
    %v2168 = vmul.f32 %v2164, 0.01
    %v2169 = vsel %vm2167, %v2164, %v2168
    %2172 = vrot.lane.b32.xlu0 %v862, 120
    %v2173 = vpop.permute.xlu0 %2172
    %2174 = vrot.lane.b32.xlu0 %v863, 120
    %v2175 = vpop.permute.xlu0 %2174
    %2178 = vrot.lane.b32.xlu0 %v868, 40
    %v2179 = vpop.permute.xlu0 %2178
    %v2182 = vsel %vm977, %v2169, 0
    %2184 = vmatprep.subr.mxu0 0.0
    %2185 = vmatpush1.msra.mxu0 %v2173
    %2186 = vmatprep.subr.mxu0 0.0
    %2187 = vmatpush1.msra.mxu0 %v2175
    %2188 = vmatprep.subr.mxu0 0.0
    %2189 = vmatpush1.msra.mxu0 0.0
    %2190 = vmatprep.subr.mxu0 0.0
    %2191 = vmatpush1.msra.mxu0 0.0
    %2192 = vmatprep.subr.mxu0 0.0
    %2193 = vmatpush1.msra.mxu0 0.0
    %2194 = vmatprep.subr.mxu0 0.0
    %2195 = vmatpush1.msra.mxu0 0.0
    %2196 = vmatprep.subr.mxu0 0.0
    %2197 = vmatpush1.msra.mxu0 0.0
    %2198 = vmatprep.subr.mxu0 0.0
    %2199 = vmatpush1.msra.mxu0 0.0
    %2200 = vmatprep.subr.mxu0 0.0
    %2201 = vmatpush1.msra.mxu0 0.0
    %2202 = vmatprep.subr.mxu0 0.0
    %2203 = vmatpush1.msra.mxu0 0.0
    %2204 = vmatprep.subr.mxu0 0.0
    %2205 = vmatpush1.msra.mxu0 0.0
    %2206 = vmatprep.subr.mxu0 0.0
    %2207 = vmatpush1.msra.mxu0 0.0
    %2208 = vmatprep.subr.mxu0 0.0
    %2209 = vmatpush1.msra.mxu0 0.0
    %2210 = vmatprep.subr.mxu0 0.0
    %2211 = vmatpush1.msra.mxu0 0.0
    %2212 = vmatprep.subr.mxu0 0.0
    %2213 = vmatpush1.msra.mxu0 0.0
    %2214 = vmatprep.subr.mxu0 0.0
    %2215 = vmatpush1.msra.mxu0 0.0
    %2216 = vmatprep.subr.mxu0 0.0
    %2217 = vmatpush1.msra.mxu0 0.0
    %2218 = vmatprep.subr.mxu0 0.0
    %2219 = vmatpush1.msra.mxu0 0.0
    %2220 = vmatprep.subr.mxu0 0.0
    %2221 = vmatpush1.msra.mxu0 0.0
    %2222 = vmatprep.subr.mxu0 0.0
    %2223 = vmatpush1.msra.mxu0 0.0
    %2224 = vmatprep.subr.mxu0 0.0
    %2225 = vmatpush1.msra.mxu0 0.0
    %2226 = vmatprep.subr.mxu0 0.0
    %2227 = vmatpush1.msra.mxu0 0.0
    %2228 = vmatprep.subr.mxu0 0.0
    %2229 = vmatpush1.msra.mxu0 0.0
    %2230 = vmatprep.subr.mxu0 0.0
    %2231 = vmatpush1.msra.mxu0 0.0
    %2232 = vmatprep.subr.mxu0 0.0
    %2233 = vmatpush1.msra.mxu0 0.0
    %2234 = vmatprep.subr.mxu0 0.0
    %2235 = vmatpush1.msra.mxu0 0.0
    %2236 = vmatprep.subr.mxu0 0.0
    %2237 = vmatpush1.msra.mxu0 0.0
    %2238 = vmatprep.subr.mxu0 0.0
    %2239 = vmatpush1.msra.mxu0 0.0
    %2240 = vmatprep.subr.mxu0 0.0
    %2241 = vmatpush1.msra.mxu0 0.0
    %2242 = vmatprep.subr.mxu0 0.0
    %2243 = vmatpush1.msra.mxu0 0.0
    %2244 = vmatprep.subr.mxu0 0.0
    %2245 = vmatpush1.msra.mxu0 0.0
    %2246 = vmatprep.subr.mxu0 0.0
    %2247 = vmatpush1.msra.mxu0 0.0
    %2248 = vmatprep.mubr.f32.mxu0 0.0
    %2249 = vmatmul.mubr.f32.gmra.mrb[0].mxu0 %v2182
    %v2250 = vpop.f32.mrb[0].mxu0
    %v2251 = vadd.f32 %v2179, %v2250
    %v2252 = vpop.f32.mrb[0].mxu0
    %2253 = vdwg.mxu0
    %v2254 = vadd.f32 %v2087, %v2251
    %2255 = vrot.lane.b32.xlu0 %v860, 48
    %v2256 = vpop.permute.xlu0 %2255
    %2258 = vrot.lane.b32.xlu0 %v868, 24
    %v2259 = vpop.permute.xlu0 %2258
    %v2262 = vsel %vm115, %v2254, 0
    %2264 = vmatprep.subr.mxu0 0.0
    %2265 = vmatpush1.msra.mxu0 %v2256
    %2266 = vmatprep.subr.mxu0 0.0
    %2267 = vmatpush1.msra.mxu0 0.0
    %2268 = vmatprep.subr.mxu0 0.0
    %2269 = vmatpush1.msra.mxu0 0.0
    %2270 = vmatprep.subr.mxu0 0.0
    %2271 = vmatpush1.msra.mxu0 0.0
    %2272 = vmatprep.subr.mxu0 0.0
    %2273 = vmatpush1.msra.mxu0 0.0
    %2274 = vmatprep.subr.mxu0 0.0
    %2275 = vmatpush1.msra.mxu0 0.0
    %2276 = vmatprep.subr.mxu0 0.0
    %2277 = vmatpush1.msra.mxu0 0.0
    %2278 = vmatprep.subr.mxu0 0.0
    %2279 = vmatpush1.msra.mxu0 0.0
    %2280 = vmatprep.subr.mxu0 0.0
    %2281 = vmatpush1.msra.mxu0 0.0
    %2282 = vmatprep.subr.mxu0 0.0
    %2283 = vmatpush1.msra.mxu0 0.0
    %2284 = vmatprep.subr.mxu0 0.0
    %2285 = vmatpush1.msra.mxu0 0.0
    %2286 = vmatprep.subr.mxu0 0.0
    %2287 = vmatpush1.msra.mxu0 0.0
    %2288 = vmatprep.subr.mxu0 0.0
    %2289 = vmatpush1.msra.mxu0 0.0
    %2290 = vmatprep.subr.mxu0 0.0
    %2291 = vmatpush1.msra.mxu0 0.0
    %2292 = vmatprep.subr.mxu0 0.0
    %2293 = vmatpush1.msra.mxu0 0.0
    %2294 = vmatprep.subr.mxu0 0.0
    %2295 = vmatpush1.msra.mxu0 0.0
    %2296 = vmatprep.subr.mxu0 0.0
    %2297 = vmatpush1.msra.mxu0 0.0
    %2298 = vmatprep.subr.mxu0 0.0
    %2299 = vmatpush1.msra.mxu0 0.0
    %2300 = vmatprep.subr.mxu0 0.0
    %2301 = vmatpush1.msra.mxu0 0.0
    %2302 = vmatprep.subr.mxu0 0.0
    %2303 = vmatpush1.msra.mxu0 0.0
    %2304 = vmatprep.subr.mxu0 0.0
    %2305 = vmatpush1.msra.mxu0 0.0
    %2306 = vmatprep.subr.mxu0 0.0
    %2307 = vmatpush1.msra.mxu0 0.0
    %2308 = vmatprep.subr.mxu0 0.0
    %2309 = vmatpush1.msra.mxu0 0.0
    %2310 = vmatprep.subr.mxu0 0.0
    %2311 = vmatpush1.msra.mxu0 0.0
    %2312 = vmatprep.subr.mxu0 0.0
    %2313 = vmatpush1.msra.mxu0 0.0
    %2314 = vmatprep.subr.mxu0 0.0
    %2315 = vmatpush1.msra.mxu0 0.0
    %2316 = vmatprep.subr.mxu0 0.0
    %2317 = vmatpush1.msra.mxu0 0.0
    %2318 = vmatprep.subr.mxu0 0.0
    %2319 = vmatpush1.msra.mxu0 0.0
    %2320 = vmatprep.subr.mxu0 0.0
    %2321 = vmatpush1.msra.mxu0 0.0
    %2322 = vmatprep.subr.mxu0 0.0
    %2323 = vmatpush1.msra.mxu0 0.0
    %2324 = vmatprep.subr.mxu0 0.0
    %2325 = vmatpush1.msra.mxu0 0.0
    %2326 = vmatprep.subr.mxu0 0.0
    %2327 = vmatpush1.msra.mxu0 0.0
    %2328 = vmatprep.mubr.f32.mxu0 0.0
    %2329 = vmatmul.mubr.f32.gmra.mrb[0].mxu0 %v2262
    %v2330 = vpop.f32.mrb[0].mxu0
    %v2331 = vadd.f32 %v2259, %v2330
    %v2332 = vpop.f32.mrb[0].mxu0
    %2333 = vdwg.mxu0
    %v2334 = vsub.f32 0.0, %v2331
    %v2335 = vmul.f32 %v2334, 1.442695
    %v2336 = vpow.pop %v2335
    %v2337 = vadd.f32 %v2336, 1.0
    %v2338 = vrcp.pop %v2337
    %v2339 = vmul.f32 1.0, %v2338
    %v2341 = vrot.slane %v2339, 6
    %v2343 = vrot.slane %v2339, 4
    %v2345 = vrot.slane %v2339, 2
    %v2347 = vsel %vm1158, %v2339, %v2341
    %v2348 = vsel %vm218, %v2347, %v2343
    %v2349 = vsel %vm1161, %v2348, %v2345
    %v2350 = vsub.f32 %v2349, %v88
    %v2351 = vsub.f32 %v2349, %v89
    %v2352 = vsub.f32 %v2347, %v90
    %v2353 = vmul.f32 %v2350, %v2350
    %v2354 = vmul.f32 %v2351, %v2351
    %v2355 = vmul.f32 %v2352, %v2352
    %v2356 = vmul.f32 %v2353, 2.0
    %v2357 = vmul.f32 %v2354, 2.0
    %v2358 = vmul.f32 %v2355, 2.0
    %2362 = vrot.lane.b32.xlu0 %v2356, 4
    %v2363 = vpop.permute.xlu0 %2362
    %2364 = vrot.lane.b32.xlu0 %v2357, 4
    %v2365 = vpop.permute.xlu0 %2364
    %2366 = vrot.lane.b32.xlu0 %v2358, 4
    %v2367 = vpop.permute.xlu0 %2366
    %v2371 = vsel %vm99, %v92, %v2363
    %v2372 = vsel %vm99, %v93, %v2365
    %v2373 = vsel %vm99, %v94, %v2367
    %v2374 = vadd.f32 %v2371, %v85
    %v2375 = vadd.f32 %v2372, %v86
    %v2376 = vadd.f32 %v2373, %v87
    %v2378 = vsel %vm115, %v2374, 0
    %v2381 = vsel %vm115, %v2375, 0
    %v2384 = vsel %vm115, %v2376, 0
    %2386 = vmatprep.subr.mxu0 0.0
    %2387 = vmatpush1.msra.mxu0 %v107
    %2388 = vmatprep.subr.mxu0 0.0
    %2389 = vmatpush1.msra.mxu0 0.0
    %2390 = vmatprep.subr.mxu0 0.0
    %2391 = vmatpush1.msra.mxu0 0.0
    %2392 = vmatprep.subr.mxu0 0.0
    %2393 = vmatpush1.msra.mxu0 0.0
    %2394 = vmatprep.subr.mxu0 0.0
    %2395 = vmatpush1.msra.mxu0 0.0
    %2396 = vmatprep.subr.mxu0 0.0
    %2397 = vmatpush1.msra.mxu0 0.0
    %2398 = vmatprep.subr.mxu0 0.0
    %2399 = vmatpush1.msra.mxu0 0.0
    %2400 = vmatprep.subr.mxu0 0.0
    %2401 = vmatpush1.msra.mxu0 0.0
    %2402 = vmatprep.subr.mxu0 0.0
    %2403 = vmatpush1.msra.mxu0 0.0
    %2404 = vmatprep.subr.mxu0 0.0
    %2405 = vmatpush1.msra.mxu0 0.0
    %2406 = vmatprep.subr.mxu0 0.0
    %2407 = vmatpush1.msra.mxu0 0.0
    %2408 = vmatprep.subr.mxu0 0.0
    %2409 = vmatpush1.msra.mxu0 0.0
    %2410 = vmatprep.subr.mxu0 0.0
    %2411 = vmatpush1.msra.mxu0 0.0
    %2412 = vmatprep.subr.mxu0 0.0
    %2413 = vmatpush1.msra.mxu0 0.0
    %2414 = vmatprep.subr.mxu0 0.0
    %2415 = vmatpush1.msra.mxu0 0.0
    %2416 = vmatprep.subr.mxu0 0.0
    %2417 = vmatpush1.msra.mxu0 0.0
    %2418 = vmatprep.subr.mxu0 0.0
    %2419 = vmatpush1.msra.mxu0 0.0
    %2420 = vmatprep.subr.mxu0 0.0
    %2421 = vmatpush1.msra.mxu0 0.0
    %2422 = vmatprep.subr.mxu0 0.0
    %2423 = vmatpush1.msra.mxu0 0.0
    %2424 = vmatprep.subr.mxu0 0.0
    %2425 = vmatpush1.msra.mxu0 0.0
    %2426 = vmatprep.subr.mxu0 0.0
    %2427 = vmatpush1.msra.mxu0 0.0
    %2428 = vmatprep.subr.mxu0 0.0
    %2429 = vmatpush1.msra.mxu0 0.0
    %2430 = vmatprep.subr.mxu0 0.0
    %2431 = vmatpush1.msra.mxu0 0.0
    %2432 = vmatprep.subr.mxu0 0.0
    %2433 = vmatpush1.msra.mxu0 0.0
    %2434 = vmatprep.subr.mxu0 0.0
    %2435 = vmatpush1.msra.mxu0 0.0
    %2436 = vmatprep.subr.mxu0 0.0
    %2437 = vmatpush1.msra.mxu0 0.0
    %2438 = vmatprep.subr.mxu0 0.0
    %2439 = vmatpush1.msra.mxu0 0.0
    %2440 = vmatprep.subr.mxu0 0.0
    %2441 = vmatpush1.msra.mxu0 0.0
    %2442 = vmatprep.subr.mxu0 0.0
    %2443 = vmatpush1.msra.mxu0 0.0
    %2444 = vmatprep.subr.mxu0 0.0
    %2445 = vmatpush1.msra.mxu0 0.0
    %2446 = vmatprep.subr.mxu0 0.0
    %2447 = vmatpush1.msra.mxu0 0.0
    %2448 = vmatprep.subr.mxu0 0.0
    %2449 = vmatpush1.msra.mxu0 0.0
    %2450 = vmatprep.mubr.f32.mxu0 0.0
    %2451 = vmatmul.mubr.f32.gmra.mrb[0].mxu0 %v2378
    %v2452 = vpop.f32.mrb[0].mxu0
    %v2453 = vadd.f32 %v113, %v2452
    %v2454 = vpop.f32.mrb[0].mxu0
    %2455 = vmatprep.mubr.f32.mxu0 0.0
    %2456 = vmatmul.mubr.f32.gmra.mrb[0].mxu0 %v2381
    %v2457 = vpop.f32.mrb[0].mxu0
    %v2458 = vadd.f32 %v113, %v2457
    %v2459 = vpop.f32.mrb[0].mxu0
    %2460 = vmatprep.mubr.f32.mxu0 0.0
    %2461 = vmatmul.mubr.f32.gmra.mrb[0].mxu0 %v2384
    %v2462 = vpop.f32.mrb[0].mxu0
    %v2463 = vadd.f32 %v113, %v2462
    %v2464 = vpop.f32.mrb[0].mxu0
    %2465 = vdwg.mxu0
    %v2469 = vrot.slane %v2453, 4
    %v2470 = vrot.slane %v2458, 4
    %v2471 = vsel %vm218, %v2469, %v2470
    %v2472 = vrot.slane %v2463, 4
    %v2473 = vsel %vm218, %v2470, %v2472
    %v2477 = vsel %vm218, %v2463, %v2469
    %v2478 = vmul.f32 %v2453, %v239
    %v2479 = vmul.f32 %v2458, %v241
    %v2480 = vmul.f32 %v2477, %v243
    %v2481 = vmul.f32 %v2471, %v245
    %v2482 = vmul.f32 %v2473, %v247
    %v2483 = vmul.f32 %v2453, %v249
    %v2484 = vmul.f32 %v2458, %v251
    %v2485 = vmul.f32 %v2477, %v253
    %v2486 = vmul.f32 %v2471, %v255
    %v2487 = vmul.f32 %v2473, %v257
    %v2488 = vmul.f32 %v2453, %v279
    %v2489 = vmul.f32 %v2458, %v281
    %v2490 = vmul.f32 %v2477, %v283
    %v2491 = vmul.f32 %v2471, %v285
    %v2492 = vmul.f32 %v2473, %v287
    %v2493 = vmul.f32 %v2453, %v289
    %v2494 = vmul.f32 %v2458, %v291
    %v2495 = vmul.f32 %v2477, %v293
    %v2496 = vmul.f32 %v2471, %v295
    %v2497 = vmul.f32 %v2473, %v297
    %2508 = vrot.lane.b32.xlu0 %v2478, 120
    %v2509 = vpop.permute.xlu0 %2508
    %2510 = vrot.lane.b32.xlu0 %v2479, 120
    %v2511 = vpop.permute.xlu0 %2510
    %2512 = vrot.lane.b32.xlu0 %v2480, 120
    %v2513 = vpop.permute.xlu0 %2512
    %2514 = vrot.lane.b32.xlu0 %v2481, 120
    %v2515 = vpop.permute.xlu0 %2514
    %2516 = vrot.lane.b32.xlu0 %v2482, 120
    %v2517 = vpop.permute.xlu0 %2516
    %2518 = vrot.lane.b32.xlu0 %v2483, 120
    %v2519 = vpop.permute.xlu0 %2518
    %2520 = vrot.lane.b32.xlu0 %v2484, 120
    %v2521 = vpop.permute.xlu0 %2520
    %2522 = vrot.lane.b32.xlu0 %v2485, 120
    %v2523 = vpop.permute.xlu0 %2522
    %2524 = vrot.lane.b32.xlu0 %v2486, 120
    %v2525 = vpop.permute.xlu0 %2524
    %2526 = vrot.lane.b32.xlu0 %v2487, 120
    %v2527 = vpop.permute.xlu0 %2526
    %v2528 = vsel %vm115, %v2453, 0
    %v2530 = vsel %vm115, %v2458, 0
    %v2532 = vsel %vm115, %v2463, 0
    %v2534 = vsel %vm115, %v2509, 0
    %v2536 = vsel %vm115, %v2511, 0
    %v2538 = vsel %vm115, %v2513, 0
    %v2540 = vsel %vm115, %v2515, 0
    %v2542 = vsel %vm115, %v2517, 0
    %v2544 = vsel %vm115, %v2519, 0
    %v2546 = vsel %vm115, %v2521, 0
    %v2548 = vsel %vm115, %v2523, 0
    %v2550 = vsel %vm115, %v2525, 0
    %v2552 = vsel %vm115, %v2527, 0
    %2554 = vmatprep.subr.mxu0 0.0
    %2555 = vmatpush1.xpose.msra.mxu0 %v2534
    %2556 = vmatprep.subr.mxu0 0.0
    %2557 = vmatpush1.xpose.msra.mxu0 %v2536
    %2558 = vmatprep.subr.mxu0 0.0
    %2559 = vmatpush1.xpose.msra.mxu0 %v2538
    %2560 = vmatprep.subr.mxu0 0.0
    %2561 = vmatpush1.xpose.msra.mxu0 %v2540
    %2562 = vmatprep.subr.mxu0 0.0
    %2563 = vmatpush1.xpose.msra.mxu0 %v2542
    %2564 = vmatprep.subr.mxu0 0.0
    %2565 = vmatpush1.xpose.msra.mxu0 %v2544
    %2566 = vmatprep.subr.mxu0 0.0
    %2567 = vmatpush1.xpose.msra.mxu0 %v2546
    %2568 = vmatprep.subr.mxu0 0.0
    %2569 = vmatpush1.xpose.msra.mxu0 %v2548
    %2570 = vmatprep.subr.mxu0 0.0
    %2571 = vmatpush1.xpose.msra.mxu0 %v2550
    %2572 = vmatprep.subr.mxu0 0.0
    %2573 = vmatpush1.xpose.msra.mxu0 %v2552
    %2574 = vmatprep.subr.mxu0 0.0
    %2575 = vmatpush1.xpose.msra.mxu0 0.0
    %2576 = vmatprep.subr.mxu0 0.0
    %2577 = vmatpush1.xpose.msra.mxu0 0.0
    %2578 = vmatprep.subr.mxu0 0.0
    %2579 = vmatpush1.xpose.msra.mxu0 0.0
    %2580 = vmatprep.subr.mxu0 0.0
    %2581 = vmatpush1.xpose.msra.mxu0 0.0
    %2582 = vmatprep.subr.mxu0 0.0
    %2583 = vmatpush1.xpose.msra.mxu0 0.0
    %2584 = vmatprep.subr.mxu0 0.0
    %2585 = vmatpush1.xpose.msra.mxu0 0.0
    %2586 = vmatprep.subr.mxu0 0.0
    %2587 = vmatpush1.xpose.msra.mxu0 0.0
    %2588 = vmatprep.subr.mxu0 0.0
    %2589 = vmatpush1.xpose.msra.mxu0 0.0
    %2590 = vmatprep.subr.mxu0 0.0
    %2591 = vmatpush1.xpose.msra.mxu0 0.0
    %2592 = vmatprep.subr.mxu0 0.0
    %2593 = vmatpush1.xpose.msra.mxu0 0.0
    %2594 = vmatprep.subr.mxu0 0.0
    %2595 = vmatpush1.xpose.msra.mxu0 0.0
    %2596 = vmatprep.subr.mxu0 0.0
    %2597 = vmatpush1.xpose.msra.mxu0 0.0
    %2598 = vmatprep.subr.mxu0 0.0
    %2599 = vmatpush1.xpose.msra.mxu0 0.0
    %2600 = vmatprep.subr.mxu0 0.0
    %2601 = vmatpush1.xpose.msra.mxu0 0.0
    %2602 = vmatprep.subr.mxu0 0.0
    %2603 = vmatpush1.xpose.msra.mxu0 0.0
    %2604 = vmatprep.subr.mxu0 0.0
    %2605 = vmatpush1.xpose.msra.mxu0 0.0
    %2606 = vmatprep.subr.mxu0 0.0
    %2607 = vmatpush1.xpose.msra.mxu0 0.0
    %2608 = vmatprep.subr.mxu0 0.0
    %2609 = vmatpush1.xpose.msra.mxu0 0.0
    %2610 = vmatprep.subr.mxu0 0.0
    %2611 = vmatpush1.xpose.msra.mxu0 0.0
    %2612 = vmatprep.subr.mxu0 0.0
    %2613 = vmatpush1.xpose.msra.mxu0 0.0
    %2614 = vmatprep.subr.mxu0 0.0
    %2615 = vmatpush1.xpose.msra.mxu0 0.0
    %2616 = vmatprep.subr.mxu0 0.0
    %2617 = vmatpush1.xpose.msra.mxu0 0.0
    %2618 = vmatprep.mubr.f32.mxu0 0.0
    %2619 = vmatmul.mubr.f32.gmra.mrb[0].mxu0 %v2528
    %v2620 = vpop.f32.mrb[0].mxu0
    %v2621 = vadd.f32 0.0, %v2620
    %v2622 = vpop.f32.mrb[0].mxu0
    %2623 = vmatprep.mubr.f32.mxu0 0.0
    %2624 = vmatmul.mubr.f32.gmra.mrb[0].mxu0 %v2530
    %v2625 = vpop.f32.mrb[0].mxu0
    %v2626 = vadd.f32 0.0, %v2625
    %v2627 = vpop.f32.mrb[0].mxu0
    %2628 = vmatprep.mubr.f32.mxu0 0.0
    %2629 = vmatmul.mubr.f32.gmra.mrb[0].mxu0 %v2532
    %v2630 = vpop.f32.mrb[0].mxu0
    %v2631 = vadd.f32 0.0, %v2630
    %v2632 = vpop.f32.mrb[0].mxu0
    %2633 = vdwg.mxu0
    %v2634 = vsub.f32 %v2621, %v461
    %v2635 = vsub.f32 %v2626, %v463
    %v2636 = vsub.f32 %v2631, %v465
    %v2637 = vsel %vm472, %v2634, -inf
    %2638 = vmax.xlane.f32.xlu0 %v2637
    %v2639 = vpop.xlane.xlu0 %2638
    %v2640 = vsel %vm472, %v2635, -inf
    %2641 = vmax.xlane.f32.xlu0 %v2640
    %v2642 = vpop.xlane.xlu0 %2641
    %v2643 = vsel %vm479, %v2636, -inf
    %2644 = vmax.xlane.f32.xlu0 %v2643
    %v2645 = vpop.xlane.xlu0 %2644
    %v2646 = vsub.f32 %v2634, %v2639
    %v2647 = vsub.f32 %v2635, %v2642
    %v2648 = vsub.f32 %v2636, %v2645
    %v2649 = vmul.f32 %v2646, 1.442695
    %v2650 = vpow.pop %v2649
    %v2651 = vmul.f32 %v2647, 1.442695
    %v2652 = vpow.pop %v2651
    %v2653 = vmul.f32 %v2648, 1.442695
    %v2654 = vpow.pop %v2653
    %v2656 = vsel %vm472, %v2650, 0
    %v2659 = vsel %vm472, %v2652, 0
    %v2662 = vsel %vm472, %v2654, 0
    %2664 = vmatprep.subr.mxu0 0.0
    %2665 = vmatpush1.msra.mxu0 %v493
    %2666 = vmatprep.subr.mxu0 0.0
    %2667 = vmatpush1.msra.mxu0 %v495
    %2668 = vmatprep.subr.mxu0 0.0
    %2669 = vmatpush1.msra.mxu0 %v497
    %2670 = vmatprep.subr.mxu0 0.0
    %2671 = vmatpush1.msra.mxu0 %v499
    %2672 = vmatprep.subr.mxu0 0.0
    %2673 = vmatpush1.msra.mxu0 %v501
    %2674 = vmatprep.subr.mxu0 0.0
    %2675 = vmatpush1.msra.mxu0 %v503
    %2676 = vmatprep.subr.mxu0 0.0
    %2677 = vmatpush1.msra.mxu0 %v505
    %2678 = vmatprep.subr.mxu0 0.0
    %2679 = vmatpush1.msra.mxu0 %v507
    %2680 = vmatprep.subr.mxu0 0.0
    %2681 = vmatpush1.msra.mxu0 %v509
    %2682 = vmatprep.subr.mxu0 0.0
    %2683 = vmatpush1.msra.mxu0 %v511
    %2684 = vmatprep.subr.mxu0 0.0
    %2685 = vmatpush1.msra.mxu0 0.0
    %2686 = vmatprep.subr.mxu0 0.0
    %2687 = vmatpush1.msra.mxu0 0.0
    %2688 = vmatprep.subr.mxu0 0.0
    %2689 = vmatpush1.msra.mxu0 0.0
    %2690 = vmatprep.subr.mxu0 0.0
    %2691 = vmatpush1.msra.mxu0 0.0
    %2692 = vmatprep.subr.mxu0 0.0
    %2693 = vmatpush1.msra.mxu0 0.0
    %2694 = vmatprep.subr.mxu0 0.0
    %2695 = vmatpush1.msra.mxu0 0.0
    %2696 = vmatprep.subr.mxu0 0.0
    %2697 = vmatpush1.msra.mxu0 0.0
    %2698 = vmatprep.subr.mxu0 0.0
    %2699 = vmatpush1.msra.mxu0 0.0
    %2700 = vmatprep.subr.mxu0 0.0
    %2701 = vmatpush1.msra.mxu0 0.0
    %2702 = vmatprep.subr.mxu0 0.0
    %2703 = vmatpush1.msra.mxu0 0.0
    %2704 = vmatprep.subr.mxu0 0.0
    %2705 = vmatpush1.msra.mxu0 0.0
    %2706 = vmatprep.subr.mxu0 0.0
    %2707 = vmatpush1.msra.mxu0 0.0
    %2708 = vmatprep.subr.mxu0 0.0
    %2709 = vmatpush1.msra.mxu0 0.0
    %2710 = vmatprep.subr.mxu0 0.0
    %2711 = vmatpush1.msra.mxu0 0.0
    %2712 = vmatprep.subr.mxu0 0.0
    %2713 = vmatpush1.msra.mxu0 0.0
    %2714 = vmatprep.subr.mxu0 0.0
    %2715 = vmatpush1.msra.mxu0 0.0
    %2716 = vmatprep.subr.mxu0 0.0
    %2717 = vmatpush1.msra.mxu0 0.0
    %2718 = vmatprep.subr.mxu0 0.0
    %2719 = vmatpush1.msra.mxu0 0.0
    %2720 = vmatprep.subr.mxu0 0.0
    %2721 = vmatpush1.msra.mxu0 0.0
    %2722 = vmatprep.subr.mxu0 0.0
    %2723 = vmatpush1.msra.mxu0 0.0
    %2724 = vmatprep.subr.mxu0 0.0
    %2725 = vmatpush1.msra.mxu0 0.0
    %2726 = vmatprep.subr.mxu0 0.0
    %2727 = vmatpush1.msra.mxu0 0.0
    %2728 = vmatprep.mubr.f32.mxu0 0.0
    %2729 = vmatmul.mubr.f32.gmra.mrb[0].mxu0 %v2656
    %v2730 = vpop.f32.mrb[0].mxu0
    %v2731 = vadd.f32 %v526, %v2730
    %v2732 = vpop.f32.mrb[0].mxu0
    %2733 = vmatprep.mubr.f32.mxu0 0.0
    %2734 = vmatmul.mubr.f32.gmra.mrb[0].mxu0 %v2659
    %v2735 = vpop.f32.mrb[0].mxu0
    %v2736 = vadd.f32 %v528, %v2735
    %v2737 = vpop.f32.mrb[0].mxu0
    %2738 = vmatprep.mubr.f32.mxu0 0.0
    %2739 = vmatmul.mubr.f32.gmra.mrb[0].mxu0 %v2662
    %v2740 = vpop.f32.mrb[0].mxu0
    %v2741 = vadd.f32 %v530, %v2740
    %v2742 = vpop.f32.mrb[0].mxu0
    %2743 = vdwg.mxu0
    %v2744 = vadd.f32 %v2731, 1e-30
    %v2745 = vadd.f32 %v2736, 1e-30
    %v2746 = vadd.f32 %v2741, 1e-30
    %v2747 = vrcp.pop %v2744
    %v2748 = vrcp.pop %v2745
    %v2749 = vrcp.pop %v2746
    %v2750 = vmul.f32 %v2650, %v2747
    %v2751 = vmul.f32 %v2652, %v2748
    %v2752 = vmul.f32 %v2654, %v2749
    %2763 = vrot.lane.b32.xlu0 %v2488, 112
    %v2764 = vpop.permute.xlu0 %2763
    %2765 = vrot.lane.b32.xlu0 %v2489, 112
    %v2766 = vpop.permute.xlu0 %2765
    %2767 = vrot.lane.b32.xlu0 %v2490, 112
    %v2768 = vpop.permute.xlu0 %2767
    %2769 = vrot.lane.b32.xlu0 %v2491, 112
    %v2770 = vpop.permute.xlu0 %2769
    %2771 = vrot.lane.b32.xlu0 %v2492, 112
    %v2772 = vpop.permute.xlu0 %2771
    %2773 = vrot.lane.b32.xlu0 %v2493, 112
    %v2774 = vpop.permute.xlu0 %2773
    %2775 = vrot.lane.b32.xlu0 %v2494, 112
    %v2776 = vpop.permute.xlu0 %2775
    %2777 = vrot.lane.b32.xlu0 %v2495, 112
    %v2778 = vpop.permute.xlu0 %2777
    %2779 = vrot.lane.b32.xlu0 %v2496, 112
    %v2780 = vpop.permute.xlu0 %2779
    %2781 = vrot.lane.b32.xlu0 %v2497, 112
    %v2782 = vpop.permute.xlu0 %2781
    %v2794 = vsel %vm472, %v2750, 0
    %v2797 = vsel %vm472, %v2751, 0
    %v2800 = vsel %vm472, %v2752, 0
    %2802 = vmatprep.subr.mxu0 0.0
    %2803 = vmatpush1.msra.mxu0 %v2764
    %2804 = vmatprep.subr.mxu0 0.0
    %2805 = vmatpush1.msra.mxu0 %v2766
    %2806 = vmatprep.subr.mxu0 0.0
    %2807 = vmatpush1.msra.mxu0 %v2768
    %2808 = vmatprep.subr.mxu0 0.0
    %2809 = vmatpush1.msra.mxu0 %v2770
    %2810 = vmatprep.subr.mxu0 0.0
    %2811 = vmatpush1.msra.mxu0 %v2772
    %2812 = vmatprep.subr.mxu0 0.0
    %2813 = vmatpush1.msra.mxu0 %v2774
    %2814 = vmatprep.subr.mxu0 0.0
    %2815 = vmatpush1.msra.mxu0 %v2776
    %2816 = vmatprep.subr.mxu0 0.0
    %2817 = vmatpush1.msra.mxu0 %v2778
    %2818 = vmatprep.subr.mxu0 0.0
    %2819 = vmatpush1.msra.mxu0 %v2780
    %2820 = vmatprep.subr.mxu0 0.0
    %2821 = vmatpush1.msra.mxu0 %v2782
    %2822 = vmatprep.subr.mxu0 0.0
    %2823 = vmatpush1.msra.mxu0 0.0
    %2824 = vmatprep.subr.mxu0 0.0
    %2825 = vmatpush1.msra.mxu0 0.0
    %2826 = vmatprep.subr.mxu0 0.0
    %2827 = vmatpush1.msra.mxu0 0.0
    %2828 = vmatprep.subr.mxu0 0.0
    %2829 = vmatpush1.msra.mxu0 0.0
    %2830 = vmatprep.subr.mxu0 0.0
    %2831 = vmatpush1.msra.mxu0 0.0
    %2832 = vmatprep.subr.mxu0 0.0
    %2833 = vmatpush1.msra.mxu0 0.0
    %2834 = vmatprep.subr.mxu0 0.0
    %2835 = vmatpush1.msra.mxu0 0.0
    %2836 = vmatprep.subr.mxu0 0.0
    %2837 = vmatpush1.msra.mxu0 0.0
    %2838 = vmatprep.subr.mxu0 0.0
    %2839 = vmatpush1.msra.mxu0 0.0
    %2840 = vmatprep.subr.mxu0 0.0
    %2841 = vmatpush1.msra.mxu0 0.0
    %2842 = vmatprep.subr.mxu0 0.0
    %2843 = vmatpush1.msra.mxu0 0.0
    %2844 = vmatprep.subr.mxu0 0.0
    %2845 = vmatpush1.msra.mxu0 0.0
    %2846 = vmatprep.subr.mxu0 0.0
    %2847 = vmatpush1.msra.mxu0 0.0
    %2848 = vmatprep.subr.mxu0 0.0
    %2849 = vmatpush1.msra.mxu0 0.0
    %2850 = vmatprep.subr.mxu0 0.0
    %2851 = vmatpush1.msra.mxu0 0.0
    %2852 = vmatprep.subr.mxu0 0.0
    %2853 = vmatpush1.msra.mxu0 0.0
    %2854 = vmatprep.subr.mxu0 0.0
    %2855 = vmatpush1.msra.mxu0 0.0
    %2856 = vmatprep.subr.mxu0 0.0
    %2857 = vmatpush1.msra.mxu0 0.0
    %2858 = vmatprep.subr.mxu0 0.0
    %2859 = vmatpush1.msra.mxu0 0.0
    %2860 = vmatprep.subr.mxu0 0.0
    %2861 = vmatpush1.msra.mxu0 0.0
    %2862 = vmatprep.subr.mxu0 0.0
    %2863 = vmatpush1.msra.mxu0 0.0
    %2864 = vmatprep.subr.mxu0 0.0
    %2865 = vmatpush1.msra.mxu0 0.0
    %2866 = vmatprep.mubr.f32.mxu0 0.0
    %2867 = vmatmul.mubr.f32.gmra.mrb[0].mxu0 %v2794
    %v2868 = vpop.f32.mrb[0].mxu0
    %v2869 = vadd.f32 0.0, %v2868
    %v2870 = vpop.f32.mrb[0].mxu0
    %2871 = vmatprep.mubr.f32.mxu0 0.0
    %2872 = vmatmul.mubr.f32.gmra.mrb[0].mxu0 %v2797
    %v2873 = vpop.f32.mrb[0].mxu0
    %v2874 = vadd.f32 0.0, %v2873
    %v2875 = vpop.f32.mrb[0].mxu0
    %2876 = vmatprep.mubr.f32.mxu0 0.0
    %2877 = vmatmul.mubr.f32.gmra.mrb[0].mxu0 %v2800
    %v2878 = vpop.f32.mrb[0].mxu0
    %v2879 = vadd.f32 0.0, %v2878
    %v2880 = vpop.f32.mrb[0].mxu0
    %2881 = vdwg.mxu0
    %v2883 = vsel %vm115, %v2869, 0
    %v2886 = vsel %vm115, %v2874, 0
    %v2889 = vsel %vm115, %v2879, 0
    %2891 = vmatprep.subr.mxu0 0.0
    %2892 = vmatpush1.msra.mxu0 %v763
    %2893 = vmatprep.subr.mxu0 0.0
    %2894 = vmatpush1.msra.mxu0 0.0
    %2895 = vmatprep.subr.mxu0 0.0
    %2896 = vmatpush1.msra.mxu0 0.0
    %2897 = vmatprep.subr.mxu0 0.0
    %2898 = vmatpush1.msra.mxu0 0.0
    %2899 = vmatprep.subr.mxu0 0.0
    %2900 = vmatpush1.msra.mxu0 0.0
    %2901 = vmatprep.subr.mxu0 0.0
    %2902 = vmatpush1.msra.mxu0 0.0
    %2903 = vmatprep.subr.mxu0 0.0
    %2904 = vmatpush1.msra.mxu0 0.0
    %2905 = vmatprep.subr.mxu0 0.0
    %2906 = vmatpush1.msra.mxu0 0.0
    %2907 = vmatprep.subr.mxu0 0.0
    %2908 = vmatpush1.msra.mxu0 0.0
    %2909 = vmatprep.subr.mxu0 0.0
    %2910 = vmatpush1.msra.mxu0 0.0
    %2911 = vmatprep.subr.mxu0 0.0
    %2912 = vmatpush1.msra.mxu0 0.0
    %2913 = vmatprep.subr.mxu0 0.0
    %2914 = vmatpush1.msra.mxu0 0.0
    %2915 = vmatprep.subr.mxu0 0.0
    %2916 = vmatpush1.msra.mxu0 0.0
    %2917 = vmatprep.subr.mxu0 0.0
    %2918 = vmatpush1.msra.mxu0 0.0
    %2919 = vmatprep.subr.mxu0 0.0
    %2920 = vmatpush1.msra.mxu0 0.0
    %2921 = vmatprep.subr.mxu0 0.0
    %2922 = vmatpush1.msra.mxu0 0.0
    %2923 = vmatprep.subr.mxu0 0.0
    %2924 = vmatpush1.msra.mxu0 0.0
    %2925 = vmatprep.subr.mxu0 0.0
    %2926 = vmatpush1.msra.mxu0 0.0
    %2927 = vmatprep.subr.mxu0 0.0
    %2928 = vmatpush1.msra.mxu0 0.0
    %2929 = vmatprep.subr.mxu0 0.0
    %2930 = vmatpush1.msra.mxu0 0.0
    %2931 = vmatprep.subr.mxu0 0.0
    %2932 = vmatpush1.msra.mxu0 0.0
    %2933 = vmatprep.subr.mxu0 0.0
    %2934 = vmatpush1.msra.mxu0 0.0
    %2935 = vmatprep.subr.mxu0 0.0
    %2936 = vmatpush1.msra.mxu0 0.0
    %2937 = vmatprep.subr.mxu0 0.0
    %2938 = vmatpush1.msra.mxu0 0.0
    %2939 = vmatprep.subr.mxu0 0.0
    %2940 = vmatpush1.msra.mxu0 0.0
    %2941 = vmatprep.subr.mxu0 0.0
    %2942 = vmatpush1.msra.mxu0 0.0
    %2943 = vmatprep.subr.mxu0 0.0
    %2944 = vmatpush1.msra.mxu0 0.0
    %2945 = vmatprep.subr.mxu0 0.0
    %2946 = vmatpush1.msra.mxu0 0.0
    %2947 = vmatprep.subr.mxu0 0.0
    %2948 = vmatpush1.msra.mxu0 0.0
    %2949 = vmatprep.subr.mxu0 0.0
    %2950 = vmatpush1.msra.mxu0 0.0
    %2951 = vmatprep.subr.mxu0 0.0
    %2952 = vmatpush1.msra.mxu0 0.0
    %2953 = vmatprep.subr.mxu0 0.0
    %2954 = vmatpush1.msra.mxu0 0.0
    %2955 = vmatprep.mubr.f32.mxu0 0.0
    %2956 = vmatmul.mubr.f32.gmra.mrb[0].mxu0 %v2883
    %v2957 = vpop.f32.mrb[0].mxu0
    %v2958 = vadd.f32 %v766, %v2957
    %v2959 = vpop.f32.mrb[0].mxu0
    %2960 = vmatprep.mubr.f32.mxu0 0.0
    %2961 = vmatmul.mubr.f32.gmra.mrb[0].mxu0 %v2886
    %v2962 = vpop.f32.mrb[0].mxu0
    %v2963 = vadd.f32 %v766, %v2962
    %v2964 = vpop.f32.mrb[0].mxu0
    %2965 = vmatprep.mubr.f32.mxu0 0.0
    %2966 = vmatmul.mubr.f32.gmra.mrb[0].mxu0 %v2889
    %v2967 = vpop.f32.mrb[0].mxu0
    %v2968 = vadd.f32 %v766, %v2967
    %v2969 = vpop.f32.mrb[0].mxu0
    %2970 = vdwg.mxu0
    %v2971 = vadd.f32 %v2374, %v2958
    %v2972 = vadd.f32 %v2375, %v2963
    %v2973 = vadd.f32 %v2376, %v2968
    %v2975 = vsel %vm115, %v2971, 0
    %v2978 = vsel %vm115, %v2972, 0
    %v2981 = vsel %vm115, %v2973, 0
    %2983 = vmatprep.subr.mxu0 0.0
    %2984 = vmatpush1.msra.mxu0 %v871
    %2985 = vmatprep.subr.mxu0 0.0
    %2986 = vmatpush1.msra.mxu0 0.0
    %2987 = vmatprep.subr.mxu0 0.0
    %2988 = vmatpush1.msra.mxu0 0.0
    %2989 = vmatprep.subr.mxu0 0.0
    %2990 = vmatpush1.msra.mxu0 0.0
    %2991 = vmatprep.subr.mxu0 0.0
    %2992 = vmatpush1.msra.mxu0 0.0
    %2993 = vmatprep.subr.mxu0 0.0
    %2994 = vmatpush1.msra.mxu0 0.0
    %2995 = vmatprep.subr.mxu0 0.0
    %2996 = vmatpush1.msra.mxu0 0.0
    %2997 = vmatprep.subr.mxu0 0.0
    %2998 = vmatpush1.msra.mxu0 0.0
    %2999 = vmatprep.subr.mxu0 0.0
    %3000 = vmatpush1.msra.mxu0 0.0
    %3001 = vmatprep.subr.mxu0 0.0
    %3002 = vmatpush1.msra.mxu0 0.0
    %3003 = vmatprep.subr.mxu0 0.0
    %3004 = vmatpush1.msra.mxu0 0.0
    %3005 = vmatprep.subr.mxu0 0.0
    %3006 = vmatpush1.msra.mxu0 0.0
    %3007 = vmatprep.subr.mxu0 0.0
    %3008 = vmatpush1.msra.mxu0 0.0
    %3009 = vmatprep.subr.mxu0 0.0
    %3010 = vmatpush1.msra.mxu0 0.0
    %3011 = vmatprep.subr.mxu0 0.0
    %3012 = vmatpush1.msra.mxu0 0.0
    %3013 = vmatprep.subr.mxu0 0.0
    %3014 = vmatpush1.msra.mxu0 0.0
    %3015 = vmatprep.subr.mxu0 0.0
    %3016 = vmatpush1.msra.mxu0 0.0
    %3017 = vmatprep.subr.mxu0 0.0
    %3018 = vmatpush1.msra.mxu0 0.0
    %3019 = vmatprep.subr.mxu0 0.0
    %3020 = vmatpush1.msra.mxu0 0.0
    %3021 = vmatprep.subr.mxu0 0.0
    %3022 = vmatpush1.msra.mxu0 0.0
    %3023 = vmatprep.subr.mxu0 0.0
    %3024 = vmatpush1.msra.mxu0 0.0
    %3025 = vmatprep.subr.mxu0 0.0
    %3026 = vmatpush1.msra.mxu0 0.0
    %3027 = vmatprep.subr.mxu0 0.0
    %3028 = vmatpush1.msra.mxu0 0.0
    %3029 = vmatprep.subr.mxu0 0.0
    %3030 = vmatpush1.msra.mxu0 0.0
    %3031 = vmatprep.subr.mxu0 0.0
    %3032 = vmatpush1.msra.mxu0 0.0
    %3033 = vmatprep.subr.mxu0 0.0
    %3034 = vmatpush1.msra.mxu0 0.0
    %3035 = vmatprep.subr.mxu0 0.0
    %3036 = vmatpush1.msra.mxu0 0.0
    %3037 = vmatprep.subr.mxu0 0.0
    %3038 = vmatpush1.msra.mxu0 0.0
    %3039 = vmatprep.subr.mxu0 0.0
    %3040 = vmatpush1.msra.mxu0 0.0
    %3041 = vmatprep.subr.mxu0 0.0
    %3042 = vmatpush1.msra.mxu0 0.0
    %3043 = vmatprep.subr.mxu0 0.0
    %3044 = vmatpush1.msra.mxu0 0.0
    %3045 = vmatprep.subr.mxu0 0.0
    %3046 = vmatpush1.msra.mxu0 0.0
    %3047 = vmatprep.mubr.f32.mxu0 0.0
    %3048 = vmatmul.mubr.f32.gmra.mrb[0].mxu0 %v2975
    %v3049 = vpop.f32.mrb[0].mxu0
    %v3050 = vadd.f32 %v874, %v3049
    %v3051 = vpop.f32.mrb[0].mxu0
    %3052 = vmatprep.mubr.f32.mxu0 0.0
    %3053 = vmatmul.mubr.f32.gmra.mrb[0].mxu0 %v2978
    %v3054 = vpop.f32.mrb[0].mxu0
    %v3055 = vadd.f32 %v874, %v3054
    %v3056 = vpop.f32.mrb[0].mxu0
    %3057 = vmatprep.mubr.f32.mxu0 0.0
    %3058 = vmatmul.mubr.f32.gmra.mrb[0].mxu0 %v2981
    %v3059 = vpop.f32.mrb[0].mxu0
    %v3060 = vadd.f32 %v874, %v3059
    %v3061 = vpop.f32.mrb[0].mxu0
    %3062 = vdwg.mxu0
    %vm3063 = vcmp.ge.f32.partialorder %v3050, 0.0
    %vm3064 = vcmp.ge.f32.partialorder %v3055, 0.0
    %vm3065 = vcmp.ge.f32.partialorder %v3060, 0.0
    %v3066 = vmul.f32 %v3050, 0.01
    %v3067 = vmul.f32 %v3055, 0.01
    %v3068 = vmul.f32 %v3060, 0.01
    %v3069 = vsel %vm3063, %v3050, %v3066
    %v3070 = vsel %vm3064, %v3055, %v3067
    %v3071 = vsel %vm3065, %v3060, %v3068
    %v3073 = vsel %vm977, %v3069, 0
    %v3076 = vsel %vm977, %v3070, 0
    %v3079 = vsel %vm977, %v3071, 0
    %3081 = vmatprep.subr.mxu0 0.0
    %3082 = vmatpush1.msra.mxu0 %v862
    %3083 = vmatprep.subr.mxu0 0.0
    %3084 = vmatpush1.msra.mxu0 %v863
    %3085 = vmatprep.subr.mxu0 0.0
    %3086 = vmatpush1.msra.mxu0 0.0
    %3087 = vmatprep.subr.mxu0 0.0
    %3088 = vmatpush1.msra.mxu0 0.0
    %3089 = vmatprep.subr.mxu0 0.0
    %3090 = vmatpush1.msra.mxu0 0.0
    %3091 = vmatprep.subr.mxu0 0.0
    %3092 = vmatpush1.msra.mxu0 0.0
    %3093 = vmatprep.subr.mxu0 0.0
    %3094 = vmatpush1.msra.mxu0 0.0
    %3095 = vmatprep.subr.mxu0 0.0
    %3096 = vmatpush1.msra.mxu0 0.0
    %3097 = vmatprep.subr.mxu0 0.0
    %3098 = vmatpush1.msra.mxu0 0.0
    %3099 = vmatprep.subr.mxu0 0.0
    %3100 = vmatpush1.msra.mxu0 0.0
    %3101 = vmatprep.subr.mxu0 0.0
    %3102 = vmatpush1.msra.mxu0 0.0
    %3103 = vmatprep.subr.mxu0 0.0
    %3104 = vmatpush1.msra.mxu0 0.0
    %3105 = vmatprep.subr.mxu0 0.0
    %3106 = vmatpush1.msra.mxu0 0.0
    %3107 = vmatprep.subr.mxu0 0.0
    %3108 = vmatpush1.msra.mxu0 0.0
    %3109 = vmatprep.subr.mxu0 0.0
    %3110 = vmatpush1.msra.mxu0 0.0
    %3111 = vmatprep.subr.mxu0 0.0
    %3112 = vmatpush1.msra.mxu0 0.0
    %3113 = vmatprep.subr.mxu0 0.0
    %3114 = vmatpush1.msra.mxu0 0.0
    %3115 = vmatprep.subr.mxu0 0.0
    %3116 = vmatpush1.msra.mxu0 0.0
    %3117 = vmatprep.subr.mxu0 0.0
    %3118 = vmatpush1.msra.mxu0 0.0
    %3119 = vmatprep.subr.mxu0 0.0
    %3120 = vmatpush1.msra.mxu0 0.0
    %3121 = vmatprep.subr.mxu0 0.0
    %3122 = vmatpush1.msra.mxu0 0.0
    %3123 = vmatprep.subr.mxu0 0.0
    %3124 = vmatpush1.msra.mxu0 0.0
    %3125 = vmatprep.subr.mxu0 0.0
    %3126 = vmatpush1.msra.mxu0 0.0
    %3127 = vmatprep.subr.mxu0 0.0
    %3128 = vmatpush1.msra.mxu0 0.0
    %3129 = vmatprep.subr.mxu0 0.0
    %3130 = vmatpush1.msra.mxu0 0.0
    %3131 = vmatprep.subr.mxu0 0.0
    %3132 = vmatpush1.msra.mxu0 0.0
    %3133 = vmatprep.subr.mxu0 0.0
    %3134 = vmatpush1.msra.mxu0 0.0
    %3135 = vmatprep.subr.mxu0 0.0
    %3136 = vmatpush1.msra.mxu0 0.0
    %3137 = vmatprep.subr.mxu0 0.0
    %3138 = vmatpush1.msra.mxu0 0.0
    %3139 = vmatprep.subr.mxu0 0.0
    %3140 = vmatpush1.msra.mxu0 0.0
    %3141 = vmatprep.subr.mxu0 0.0
    %3142 = vmatpush1.msra.mxu0 0.0
    %3143 = vmatprep.subr.mxu0 0.0
    %3144 = vmatpush1.msra.mxu0 0.0
    %3145 = vmatprep.mubr.f32.mxu0 0.0
    %3146 = vmatmul.mubr.f32.gmra.mrb[0].mxu0 %v3073
    %v3147 = vpop.f32.mrb[0].mxu0
    %v3148 = vadd.f32 %v975, %v3147
    %v3149 = vpop.f32.mrb[0].mxu0
    %3150 = vmatprep.mubr.f32.mxu0 0.0
    %3151 = vmatmul.mubr.f32.gmra.mrb[0].mxu0 %v3076
    %v3152 = vpop.f32.mrb[0].mxu0
    %v3153 = vadd.f32 %v975, %v3152
    %v3154 = vpop.f32.mrb[0].mxu0
    %3155 = vmatprep.mubr.f32.mxu0 0.0
    %3156 = vmatmul.mubr.f32.gmra.mrb[0].mxu0 %v3079
    %v3157 = vpop.f32.mrb[0].mxu0
    %v3158 = vadd.f32 %v975, %v3157
    %v3159 = vpop.f32.mrb[0].mxu0
    %3160 = vdwg.mxu0
    %v3161 = vadd.f32 %v2971, %v3148
    %v3162 = vadd.f32 %v2972, %v3153
    %v3163 = vadd.f32 %v2973, %v3158
    %3164 = vrot.lane.b32.xlu0 %v107, 32
    %v3165 = vpop.permute.xlu0 %3164
    %3167 = vrot.lane.b32.xlu0 %v113, 32
    %v3168 = vpop.permute.xlu0 %3167
    %3170 = vmatprep.subr.mxu0 0.0
    %3171 = vmatpush1.msra.mxu0 %v3165
    %3172 = vmatprep.subr.mxu0 0.0
    %3173 = vmatpush1.msra.mxu0 0.0
    %3174 = vmatprep.subr.mxu0 0.0
    %3175 = vmatpush1.msra.mxu0 0.0
    %3176 = vmatprep.subr.mxu0 0.0
    %3177 = vmatpush1.msra.mxu0 0.0
    %3178 = vmatprep.subr.mxu0 0.0
    %3179 = vmatpush1.msra.mxu0 0.0
    %3180 = vmatprep.subr.mxu0 0.0
    %3181 = vmatpush1.msra.mxu0 0.0
    %3182 = vmatprep.subr.mxu0 0.0
    %3183 = vmatpush1.msra.mxu0 0.0
    %3184 = vmatprep.subr.mxu0 0.0
    %3185 = vmatpush1.msra.mxu0 0.0
    %3186 = vmatprep.subr.mxu0 0.0
    %3187 = vmatpush1.msra.mxu0 0.0
    %3188 = vmatprep.subr.mxu0 0.0
    %3189 = vmatpush1.msra.mxu0 0.0
    %3190 = vmatprep.subr.mxu0 0.0
    %3191 = vmatpush1.msra.mxu0 0.0
    %3192 = vmatprep.subr.mxu0 0.0
    %3193 = vmatpush1.msra.mxu0 0.0
    %3194 = vmatprep.subr.mxu0 0.0
    %3195 = vmatpush1.msra.mxu0 0.0
    %3196 = vmatprep.subr.mxu0 0.0
    %3197 = vmatpush1.msra.mxu0 0.0
    %3198 = vmatprep.subr.mxu0 0.0
    %3199 = vmatpush1.msra.mxu0 0.0
    %3200 = vmatprep.subr.mxu0 0.0
    %3201 = vmatpush1.msra.mxu0 0.0
    %3202 = vmatprep.subr.mxu0 0.0
    %3203 = vmatpush1.msra.mxu0 0.0
    %3204 = vmatprep.subr.mxu0 0.0
    %3205 = vmatpush1.msra.mxu0 0.0
    %3206 = vmatprep.subr.mxu0 0.0
    %3207 = vmatpush1.msra.mxu0 0.0
    %3208 = vmatprep.subr.mxu0 0.0
    %3209 = vmatpush1.msra.mxu0 0.0
    %3210 = vmatprep.subr.mxu0 0.0
    %3211 = vmatpush1.msra.mxu0 0.0
    %3212 = vmatprep.subr.mxu0 0.0
    %3213 = vmatpush1.msra.mxu0 0.0
    %3214 = vmatprep.subr.mxu0 0.0
    %3215 = vmatpush1.msra.mxu0 0.0
    %3216 = vmatprep.subr.mxu0 0.0
    %3217 = vmatpush1.msra.mxu0 0.0
    %3218 = vmatprep.subr.mxu0 0.0
    %3219 = vmatpush1.msra.mxu0 0.0
    %3220 = vmatprep.subr.mxu0 0.0
    %3221 = vmatpush1.msra.mxu0 0.0
    %3222 = vmatprep.subr.mxu0 0.0
    %3223 = vmatpush1.msra.mxu0 0.0
    %3224 = vmatprep.subr.mxu0 0.0
    %3225 = vmatpush1.msra.mxu0 0.0
    %3226 = vmatprep.subr.mxu0 0.0
    %3227 = vmatpush1.msra.mxu0 0.0
    %3228 = vmatprep.subr.mxu0 0.0
    %3229 = vmatpush1.msra.mxu0 0.0
    %3230 = vmatprep.subr.mxu0 0.0
    %3231 = vmatpush1.msra.mxu0 0.0
    %3232 = vmatprep.subr.mxu0 0.0
    %3233 = vmatpush1.msra.mxu0 0.0
    %3234 = vmatprep.mubr.f32.mxu0 0.0
    %3235 = vmatmul.mubr.f32.gmra.mrb[0].mxu0 %v1077
    %v3236 = vpop.f32.mrb[0].mxu0
    %v3237 = vadd.f32 %v3168, %v3236
    %v3238 = vpop.f32.mrb[0].mxu0
    %3239 = vdwg.mxu0
    %v3241 = vrot.slane %v3237, 6
    %v3243 = vrot.slane %v3237, 4
    %v3245 = vrot.slane %v3237, 2
    %v3247 = vsel %vm1158, %v3237, %v3241
    %v3248 = vsel %vm218, %v3247, %v3243
    %v3249 = vsel %vm1161, %v3248, %v3245
    %v3250 = vmul.f32 %v3249, %v1165
    %v3251 = vmul.f32 %v3249, %v1169
    %3253 = vrot.lane.b32.xlu0 %v3250, 120
    %v3254 = vpop.permute.xlu0 %3253
    %v3255 = vsel %vm115, %v3237, 0
    %v3257 = vsel %vm115, %v3254, 0
    %3259 = vmatprep.subr.mxu0 0.0
    %3260 = vmatpush1.xpose.msra.mxu0 %v3257
    %3261 = vmatprep.subr.mxu0 0.0
    %3262 = vmatpush1.xpose.msra.mxu0 0.0
    %3263 = vmatprep.subr.mxu0 0.0
    %3264 = vmatpush1.xpose.msra.mxu0 0.0
    %3265 = vmatprep.subr.mxu0 0.0
    %3266 = vmatpush1.xpose.msra.mxu0 0.0
    %3267 = vmatprep.subr.mxu0 0.0
    %3268 = vmatpush1.xpose.msra.mxu0 0.0
    %3269 = vmatprep.subr.mxu0 0.0
    %3270 = vmatpush1.xpose.msra.mxu0 0.0
    %3271 = vmatprep.subr.mxu0 0.0
    %3272 = vmatpush1.xpose.msra.mxu0 0.0
    %3273 = vmatprep.subr.mxu0 0.0
    %3274 = vmatpush1.xpose.msra.mxu0 0.0
    %3275 = vmatprep.subr.mxu0 0.0
    %3276 = vmatpush1.xpose.msra.mxu0 0.0
    %3277 = vmatprep.subr.mxu0 0.0
    %3278 = vmatpush1.xpose.msra.mxu0 0.0
    %3279 = vmatprep.subr.mxu0 0.0
    %3280 = vmatpush1.xpose.msra.mxu0 0.0
    %3281 = vmatprep.subr.mxu0 0.0
    %3282 = vmatpush1.xpose.msra.mxu0 0.0
    %3283 = vmatprep.subr.mxu0 0.0
    %3284 = vmatpush1.xpose.msra.mxu0 0.0
    %3285 = vmatprep.subr.mxu0 0.0
    %3286 = vmatpush1.xpose.msra.mxu0 0.0
    %3287 = vmatprep.subr.mxu0 0.0
    %3288 = vmatpush1.xpose.msra.mxu0 0.0
    %3289 = vmatprep.subr.mxu0 0.0
    %3290 = vmatpush1.xpose.msra.mxu0 0.0
    %3291 = vmatprep.subr.mxu0 0.0
    %3292 = vmatpush1.xpose.msra.mxu0 0.0
    %3293 = vmatprep.subr.mxu0 0.0
    %3294 = vmatpush1.xpose.msra.mxu0 0.0
    %3295 = vmatprep.subr.mxu0 0.0
    %3296 = vmatpush1.xpose.msra.mxu0 0.0
    %3297 = vmatprep.subr.mxu0 0.0
    %3298 = vmatpush1.xpose.msra.mxu0 0.0
    %3299 = vmatprep.subr.mxu0 0.0
    %3300 = vmatpush1.xpose.msra.mxu0 0.0
    %3301 = vmatprep.subr.mxu0 0.0
    %3302 = vmatpush1.xpose.msra.mxu0 0.0
    %3303 = vmatprep.subr.mxu0 0.0
    %3304 = vmatpush1.xpose.msra.mxu0 0.0
    %3305 = vmatprep.subr.mxu0 0.0
    %3306 = vmatpush1.xpose.msra.mxu0 0.0
    %3307 = vmatprep.subr.mxu0 0.0
    %3308 = vmatpush1.xpose.msra.mxu0 0.0
    %3309 = vmatprep.subr.mxu0 0.0
    %3310 = vmatpush1.xpose.msra.mxu0 0.0
    %3311 = vmatprep.subr.mxu0 0.0
    %3312 = vmatpush1.xpose.msra.mxu0 0.0
    %3313 = vmatprep.subr.mxu0 0.0
    %3314 = vmatpush1.xpose.msra.mxu0 0.0
    %3315 = vmatprep.subr.mxu0 0.0
    %3316 = vmatpush1.xpose.msra.mxu0 0.0
    %3317 = vmatprep.subr.mxu0 0.0
    %3318 = vmatpush1.xpose.msra.mxu0 0.0
    %3319 = vmatprep.subr.mxu0 0.0
    %3320 = vmatpush1.xpose.msra.mxu0 0.0
    %3321 = vmatprep.subr.mxu0 0.0
    %3322 = vmatpush1.xpose.msra.mxu0 0.0
    %3323 = vmatprep.mubr.f32.mxu0 0.0
    %3324 = vmatmul.mubr.f32.gmra.mrb[0].mxu0 %v3255
    %v3325 = vpop.f32.mrb[0].mxu0
    %v3326 = vadd.f32 0.0, %v3325
    %v3327 = vpop.f32.mrb[0].mxu0
    %3328 = vdwg.mxu0
    %v3329 = vsub.f32 %v3326, %v1249
    %v3330 = vsel %vm1251, %v3329, -inf
    %3331 = vmax.xlane.f32.xlu0 %v3330
    %v3332 = vpop.xlane.xlu0 %3331
    %v3333 = vsub.f32 %v3329, %v3332
    %v3334 = vmul.f32 %v3333, 1.442695
    %v3335 = vpow.pop %v3334
    %v3337 = vsel %vm115, %v3335, 0
    %3339 = vmatprep.subr.mxu0 0.0
    %3340 = vmatpush1.msra.mxu0 %v1259
    %3341 = vmatprep.subr.mxu0 0.0
    %3342 = vmatpush1.msra.mxu0 0.0
    %3343 = vmatprep.subr.mxu0 0.0
    %3344 = vmatpush1.msra.mxu0 0.0
    %3345 = vmatprep.subr.mxu0 0.0
    %3346 = vmatpush1.msra.mxu0 0.0
    %3347 = vmatprep.subr.mxu0 0.0
    %3348 = vmatpush1.msra.mxu0 0.0
    %3349 = vmatprep.subr.mxu0 0.0
    %3350 = vmatpush1.msra.mxu0 0.0
    %3351 = vmatprep.subr.mxu0 0.0
    %3352 = vmatpush1.msra.mxu0 0.0
    %3353 = vmatprep.subr.mxu0 0.0
    %3354 = vmatpush1.msra.mxu0 0.0
    %3355 = vmatprep.subr.mxu0 0.0
    %3356 = vmatpush1.msra.mxu0 0.0
    %3357 = vmatprep.subr.mxu0 0.0
    %3358 = vmatpush1.msra.mxu0 0.0
    %3359 = vmatprep.subr.mxu0 0.0
    %3360 = vmatpush1.msra.mxu0 0.0
    %3361 = vmatprep.subr.mxu0 0.0
    %3362 = vmatpush1.msra.mxu0 0.0
    %3363 = vmatprep.subr.mxu0 0.0
    %3364 = vmatpush1.msra.mxu0 0.0
    %3365 = vmatprep.subr.mxu0 0.0
    %3366 = vmatpush1.msra.mxu0 0.0
    %3367 = vmatprep.subr.mxu0 0.0
    %3368 = vmatpush1.msra.mxu0 0.0
    %3369 = vmatprep.subr.mxu0 0.0
    %3370 = vmatpush1.msra.mxu0 0.0
    %3371 = vmatprep.subr.mxu0 0.0
    %3372 = vmatpush1.msra.mxu0 0.0
    %3373 = vmatprep.subr.mxu0 0.0
    %3374 = vmatpush1.msra.mxu0 0.0
    %3375 = vmatprep.subr.mxu0 0.0
    %3376 = vmatpush1.msra.mxu0 0.0
    %3377 = vmatprep.subr.mxu0 0.0
    %3378 = vmatpush1.msra.mxu0 0.0
    %3379 = vmatprep.subr.mxu0 0.0
    %3380 = vmatpush1.msra.mxu0 0.0
    %3381 = vmatprep.subr.mxu0 0.0
    %3382 = vmatpush1.msra.mxu0 0.0
    %3383 = vmatprep.subr.mxu0 0.0
    %3384 = vmatpush1.msra.mxu0 0.0
    %3385 = vmatprep.subr.mxu0 0.0
    %3386 = vmatpush1.msra.mxu0 0.0
    %3387 = vmatprep.subr.mxu0 0.0
    %3388 = vmatpush1.msra.mxu0 0.0
    %3389 = vmatprep.subr.mxu0 0.0
    %3390 = vmatpush1.msra.mxu0 0.0
    %3391 = vmatprep.subr.mxu0 0.0
    %3392 = vmatpush1.msra.mxu0 0.0
    %3393 = vmatprep.subr.mxu0 0.0
    %3394 = vmatpush1.msra.mxu0 0.0
    %3395 = vmatprep.subr.mxu0 0.0
    %3396 = vmatpush1.msra.mxu0 0.0
    %3397 = vmatprep.subr.mxu0 0.0
    %3398 = vmatpush1.msra.mxu0 0.0
    %3399 = vmatprep.subr.mxu0 0.0
    %3400 = vmatpush1.msra.mxu0 0.0
    %3401 = vmatprep.subr.mxu0 0.0
    %3402 = vmatpush1.msra.mxu0 0.0
    %3403 = vmatprep.mubr.f32.mxu0 0.0
    %3404 = vmatmul.mubr.f32.gmra.mrb[0].mxu0 %v3337
    %v3405 = vpop.f32.mrb[0].mxu0
    %v3406 = vadd.f32 %v1150, %v3405
    %v3407 = vpop.f32.mrb[0].mxu0
    %3408 = vdwg.mxu0
    %v3409 = vadd.f32 %v3406, 1e-30
    %v3410 = vrcp.pop %v3409
    %v3411 = vmul.f32 %v3335, %v3410
    %3413 = vrot.lane.b32.xlu0 %v3251, 112
    %v3414 = vpop.permute.xlu0 %3413
    %v3417 = vsel %vm115, %v3411, 0
    %3419 = vmatprep.subr.mxu0 0.0
    %3420 = vmatpush1.msra.mxu0 %v3414
    %3421 = vmatprep.subr.mxu0 0.0
    %3422 = vmatpush1.msra.mxu0 0.0
    %3423 = vmatprep.subr.mxu0 0.0
    %3424 = vmatpush1.msra.mxu0 0.0
    %3425 = vmatprep.subr.mxu0 0.0
    %3426 = vmatpush1.msra.mxu0 0.0
    %3427 = vmatprep.subr.mxu0 0.0
    %3428 = vmatpush1.msra.mxu0 0.0
    %3429 = vmatprep.subr.mxu0 0.0
    %3430 = vmatpush1.msra.mxu0 0.0
    %3431 = vmatprep.subr.mxu0 0.0
    %3432 = vmatpush1.msra.mxu0 0.0
    %3433 = vmatprep.subr.mxu0 0.0
    %3434 = vmatpush1.msra.mxu0 0.0
    %3435 = vmatprep.subr.mxu0 0.0
    %3436 = vmatpush1.msra.mxu0 0.0
    %3437 = vmatprep.subr.mxu0 0.0
    %3438 = vmatpush1.msra.mxu0 0.0
    %3439 = vmatprep.subr.mxu0 0.0
    %3440 = vmatpush1.msra.mxu0 0.0
    %3441 = vmatprep.subr.mxu0 0.0
    %3442 = vmatpush1.msra.mxu0 0.0
    %3443 = vmatprep.subr.mxu0 0.0
    %3444 = vmatpush1.msra.mxu0 0.0
    %3445 = vmatprep.subr.mxu0 0.0
    %3446 = vmatpush1.msra.mxu0 0.0
    %3447 = vmatprep.subr.mxu0 0.0
    %3448 = vmatpush1.msra.mxu0 0.0
    %3449 = vmatprep.subr.mxu0 0.0
    %3450 = vmatpush1.msra.mxu0 0.0
    %3451 = vmatprep.subr.mxu0 0.0
    %3452 = vmatpush1.msra.mxu0 0.0
    %3453 = vmatprep.subr.mxu0 0.0
    %3454 = vmatpush1.msra.mxu0 0.0
    %3455 = vmatprep.subr.mxu0 0.0
    %3456 = vmatpush1.msra.mxu0 0.0
    %3457 = vmatprep.subr.mxu0 0.0
    %3458 = vmatpush1.msra.mxu0 0.0
    %3459 = vmatprep.subr.mxu0 0.0
    %3460 = vmatpush1.msra.mxu0 0.0
    %3461 = vmatprep.subr.mxu0 0.0
    %3462 = vmatpush1.msra.mxu0 0.0
    %3463 = vmatprep.subr.mxu0 0.0
    %3464 = vmatpush1.msra.mxu0 0.0
    %3465 = vmatprep.subr.mxu0 0.0
    %3466 = vmatpush1.msra.mxu0 0.0
    %3467 = vmatprep.subr.mxu0 0.0
    %3468 = vmatpush1.msra.mxu0 0.0
    %3469 = vmatprep.subr.mxu0 0.0
    %3470 = vmatpush1.msra.mxu0 0.0
    %3471 = vmatprep.subr.mxu0 0.0
    %3472 = vmatpush1.msra.mxu0 0.0
    %3473 = vmatprep.subr.mxu0 0.0
    %3474 = vmatpush1.msra.mxu0 0.0
    %3475 = vmatprep.subr.mxu0 0.0
    %3476 = vmatpush1.msra.mxu0 0.0
    %3477 = vmatprep.subr.mxu0 0.0
    %3478 = vmatpush1.msra.mxu0 0.0
    %3479 = vmatprep.subr.mxu0 0.0
    %3480 = vmatpush1.msra.mxu0 0.0
    %3481 = vmatprep.subr.mxu0 0.0
    %3482 = vmatpush1.msra.mxu0 0.0
    %3483 = vmatprep.mubr.f32.mxu0 0.0
    %3484 = vmatmul.mubr.f32.gmra.mrb[0].mxu0 %v3417
    %v3485 = vpop.f32.mrb[0].mxu0
    %v3486 = vadd.f32 0.0, %v3485
    %v3487 = vpop.f32.mrb[0].mxu0
    %3488 = vdwg.mxu0
    %3489 = vrot.lane.b32.xlu0 %v107, 8
    %v3490 = vpop.permute.xlu0 %3489
    %3492 = vrot.lane.b32.xlu0 %v113, 8
    %v3493 = vpop.permute.xlu0 %3492
    %v3496 = vsel %vm115, %v3486, 0
    %3498 = vmatprep.subr.mxu0 0.0
    %3499 = vmatpush1.msra.mxu0 %v3490
    %3500 = vmatprep.subr.mxu0 0.0
    %3501 = vmatpush1.msra.mxu0 0.0
    %3502 = vmatprep.subr.mxu0 0.0
    %3503 = vmatpush1.msra.mxu0 0.0
    %3504 = vmatprep.subr.mxu0 0.0
    %3505 = vmatpush1.msra.mxu0 0.0
    %3506 = vmatprep.subr.mxu0 0.0
    %3507 = vmatpush1.msra.mxu0 0.0
    %3508 = vmatprep.subr.mxu0 0.0
    %3509 = vmatpush1.msra.mxu0 0.0
    %3510 = vmatprep.subr.mxu0 0.0
    %3511 = vmatpush1.msra.mxu0 0.0
    %3512 = vmatprep.subr.mxu0 0.0
    %3513 = vmatpush1.msra.mxu0 0.0
    %3514 = vmatprep.subr.mxu0 0.0
    %3515 = vmatpush1.msra.mxu0 0.0
    %3516 = vmatprep.subr.mxu0 0.0
    %3517 = vmatpush1.msra.mxu0 0.0
    %3518 = vmatprep.subr.mxu0 0.0
    %3519 = vmatpush1.msra.mxu0 0.0
    %3520 = vmatprep.subr.mxu0 0.0
    %3521 = vmatpush1.msra.mxu0 0.0
    %3522 = vmatprep.subr.mxu0 0.0
    %3523 = vmatpush1.msra.mxu0 0.0
    %3524 = vmatprep.subr.mxu0 0.0
    %3525 = vmatpush1.msra.mxu0 0.0
    %3526 = vmatprep.subr.mxu0 0.0
    %3527 = vmatpush1.msra.mxu0 0.0
    %3528 = vmatprep.subr.mxu0 0.0
    %3529 = vmatpush1.msra.mxu0 0.0
    %3530 = vmatprep.subr.mxu0 0.0
    %3531 = vmatpush1.msra.mxu0 0.0
    %3532 = vmatprep.subr.mxu0 0.0
    %3533 = vmatpush1.msra.mxu0 0.0
    %3534 = vmatprep.subr.mxu0 0.0
    %3535 = vmatpush1.msra.mxu0 0.0
    %3536 = vmatprep.subr.mxu0 0.0
    %3537 = vmatpush1.msra.mxu0 0.0
    %3538 = vmatprep.subr.mxu0 0.0
    %3539 = vmatpush1.msra.mxu0 0.0
    %3540 = vmatprep.subr.mxu0 0.0
    %3541 = vmatpush1.msra.mxu0 0.0
    %3542 = vmatprep.subr.mxu0 0.0
    %3543 = vmatpush1.msra.mxu0 0.0
    %3544 = vmatprep.subr.mxu0 0.0
    %3545 = vmatpush1.msra.mxu0 0.0
    %3546 = vmatprep.subr.mxu0 0.0
    %3547 = vmatpush1.msra.mxu0 0.0
    %3548 = vmatprep.subr.mxu0 0.0
    %3549 = vmatpush1.msra.mxu0 0.0
    %3550 = vmatprep.subr.mxu0 0.0
    %3551 = vmatpush1.msra.mxu0 0.0
    %3552 = vmatprep.subr.mxu0 0.0
    %3553 = vmatpush1.msra.mxu0 0.0
    %3554 = vmatprep.subr.mxu0 0.0
    %3555 = vmatpush1.msra.mxu0 0.0
    %3556 = vmatprep.subr.mxu0 0.0
    %3557 = vmatpush1.msra.mxu0 0.0
    %3558 = vmatprep.subr.mxu0 0.0
    %3559 = vmatpush1.msra.mxu0 0.0
    %3560 = vmatprep.subr.mxu0 0.0
    %3561 = vmatpush1.msra.mxu0 0.0
    %3562 = vmatprep.mubr.f32.mxu0 0.0
    %3563 = vmatmul.mubr.f32.gmra.mrb[0].mxu0 %v3496
    %v3564 = vpop.f32.mrb[0].mxu0
    %v3565 = vadd.f32 %v3493, %v3564
    %v3566 = vpop.f32.mrb[0].mxu0
    %3567 = vdwg.mxu0
    %v3568 = vadd.f32 %v100, %v3565
    %v3571 = vsel %vm115, %v3568, 0
    %3573 = vmatprep.subr.mxu0 0.0
    %3574 = vmatpush1.msra.mxu0 %v860
    %3575 = vmatprep.subr.mxu0 0.0
    %3576 = vmatpush1.msra.mxu0 0.0
    %3577 = vmatprep.subr.mxu0 0.0
    %3578 = vmatpush1.msra.mxu0 0.0
    %3579 = vmatprep.subr.mxu0 0.0
    %3580 = vmatpush1.msra.mxu0 0.0
    %3581 = vmatprep.subr.mxu0 0.0
    %3582 = vmatpush1.msra.mxu0 0.0
    %3583 = vmatprep.subr.mxu0 0.0
    %3584 = vmatpush1.msra.mxu0 0.0
    %3585 = vmatprep.subr.mxu0 0.0
    %3586 = vmatpush1.msra.mxu0 0.0
    %3587 = vmatprep.subr.mxu0 0.0
    %3588 = vmatpush1.msra.mxu0 0.0
    %3589 = vmatprep.subr.mxu0 0.0
    %3590 = vmatpush1.msra.mxu0 0.0
    %3591 = vmatprep.subr.mxu0 0.0
    %3592 = vmatpush1.msra.mxu0 0.0
    %3593 = vmatprep.subr.mxu0 0.0
    %3594 = vmatpush1.msra.mxu0 0.0
    %3595 = vmatprep.subr.mxu0 0.0
    %3596 = vmatpush1.msra.mxu0 0.0
    %3597 = vmatprep.subr.mxu0 0.0
    %3598 = vmatpush1.msra.mxu0 0.0
    %3599 = vmatprep.subr.mxu0 0.0
    %3600 = vmatpush1.msra.mxu0 0.0
    %3601 = vmatprep.subr.mxu0 0.0
    %3602 = vmatpush1.msra.mxu0 0.0
    %3603 = vmatprep.subr.mxu0 0.0
    %3604 = vmatpush1.msra.mxu0 0.0
    %3605 = vmatprep.subr.mxu0 0.0
    %3606 = vmatpush1.msra.mxu0 0.0
    %3607 = vmatprep.subr.mxu0 0.0
    %3608 = vmatpush1.msra.mxu0 0.0
    %3609 = vmatprep.subr.mxu0 0.0
    %3610 = vmatpush1.msra.mxu0 0.0
    %3611 = vmatprep.subr.mxu0 0.0
    %3612 = vmatpush1.msra.mxu0 0.0
    %3613 = vmatprep.subr.mxu0 0.0
    %3614 = vmatpush1.msra.mxu0 0.0
    %3615 = vmatprep.subr.mxu0 0.0
    %3616 = vmatpush1.msra.mxu0 0.0
    %3617 = vmatprep.subr.mxu0 0.0
    %3618 = vmatpush1.msra.mxu0 0.0
    %3619 = vmatprep.subr.mxu0 0.0
    %3620 = vmatpush1.msra.mxu0 0.0
    %3621 = vmatprep.subr.mxu0 0.0
    %3622 = vmatpush1.msra.mxu0 0.0
    %3623 = vmatprep.subr.mxu0 0.0
    %3624 = vmatpush1.msra.mxu0 0.0
    %3625 = vmatprep.subr.mxu0 0.0
    %3626 = vmatpush1.msra.mxu0 0.0
    %3627 = vmatprep.subr.mxu0 0.0
    %3628 = vmatpush1.msra.mxu0 0.0
    %3629 = vmatprep.subr.mxu0 0.0
    %3630 = vmatpush1.msra.mxu0 0.0
    %3631 = vmatprep.subr.mxu0 0.0
    %3632 = vmatpush1.msra.mxu0 0.0
    %3633 = vmatprep.subr.mxu0 0.0
    %3634 = vmatpush1.msra.mxu0 0.0
    %3635 = vmatprep.subr.mxu0 0.0
    %3636 = vmatpush1.msra.mxu0 0.0
    %3637 = vmatprep.mubr.f32.mxu0 0.0
    %3638 = vmatmul.mubr.f32.gmra.mrb[0].mxu0 %v3571
    %v3639 = vpop.f32.mrb[0].mxu0
    %v3640 = vadd.f32 %v868, %v3639
    %v3641 = vpop.f32.mrb[0].mxu0
    %3642 = vdwg.mxu0
    %3643 = vrot.lane.b32.xlu0 %v860, 120
    %v3644 = vpop.permute.xlu0 %3643
    %3646 = vrot.lane.b32.xlu0 %v868, 120
    %v3647 = vpop.permute.xlu0 %3646
    %v3650 = vsel %vm115, %v3161, 0
    %v3653 = vsel %vm115, %v3162, 0
    %v3656 = vsel %vm115, %v3163, 0
    %3658 = vmatprep.subr.mxu0 0.0
    %3659 = vmatpush1.msra.mxu0 %v3644
    %3660 = vmatprep.subr.mxu0 0.0
    %3661 = vmatpush1.msra.mxu0 0.0
    %3662 = vmatprep.subr.mxu0 0.0
    %3663 = vmatpush1.msra.mxu0 0.0
    %3664 = vmatprep.subr.mxu0 0.0
    %3665 = vmatpush1.msra.mxu0 0.0
    %3666 = vmatprep.subr.mxu0 0.0
    %3667 = vmatpush1.msra.mxu0 0.0
    %3668 = vmatprep.subr.mxu0 0.0
    %3669 = vmatpush1.msra.mxu0 0.0
    %3670 = vmatprep.subr.mxu0 0.0
    %3671 = vmatpush1.msra.mxu0 0.0
    %3672 = vmatprep.subr.mxu0 0.0
    %3673 = vmatpush1.msra.mxu0 0.0
    %3674 = vmatprep.subr.mxu0 0.0
    %3675 = vmatpush1.msra.mxu0 0.0
    %3676 = vmatprep.subr.mxu0 0.0
    %3677 = vmatpush1.msra.mxu0 0.0
    %3678 = vmatprep.subr.mxu0 0.0
    %3679 = vmatpush1.msra.mxu0 0.0
    %3680 = vmatprep.subr.mxu0 0.0
    %3681 = vmatpush1.msra.mxu0 0.0
    %3682 = vmatprep.subr.mxu0 0.0
    %3683 = vmatpush1.msra.mxu0 0.0
    %3684 = vmatprep.subr.mxu0 0.0
    %3685 = vmatpush1.msra.mxu0 0.0
    %3686 = vmatprep.subr.mxu0 0.0
    %3687 = vmatpush1.msra.mxu0 0.0
    %3688 = vmatprep.subr.mxu0 0.0
    %3689 = vmatpush1.msra.mxu0 0.0
    %3690 = vmatprep.subr.mxu0 0.0
    %3691 = vmatpush1.msra.mxu0 0.0
    %3692 = vmatprep.subr.mxu0 0.0
    %3693 = vmatpush1.msra.mxu0 0.0
    %3694 = vmatprep.subr.mxu0 0.0
    %3695 = vmatpush1.msra.mxu0 0.0
    %3696 = vmatprep.subr.mxu0 0.0
    %3697 = vmatpush1.msra.mxu0 0.0
    %3698 = vmatprep.subr.mxu0 0.0
    %3699 = vmatpush1.msra.mxu0 0.0
    %3700 = vmatprep.subr.mxu0 0.0
    %3701 = vmatpush1.msra.mxu0 0.0
    %3702 = vmatprep.subr.mxu0 0.0
    %3703 = vmatpush1.msra.mxu0 0.0
    %3704 = vmatprep.subr.mxu0 0.0
    %3705 = vmatpush1.msra.mxu0 0.0
    %3706 = vmatprep.subr.mxu0 0.0
    %3707 = vmatpush1.msra.mxu0 0.0
    %3708 = vmatprep.subr.mxu0 0.0
    %3709 = vmatpush1.msra.mxu0 0.0
    %3710 = vmatprep.subr.mxu0 0.0
    %3711 = vmatpush1.msra.mxu0 0.0
    %3712 = vmatprep.subr.mxu0 0.0
    %3713 = vmatpush1.msra.mxu0 0.0
    %3714 = vmatprep.subr.mxu0 0.0
    %3715 = vmatpush1.msra.mxu0 0.0
    %3716 = vmatprep.subr.mxu0 0.0
    %3717 = vmatpush1.msra.mxu0 0.0
    %3718 = vmatprep.subr.mxu0 0.0
    %3719 = vmatpush1.msra.mxu0 0.0
    %3720 = vmatprep.subr.mxu0 0.0
    %3721 = vmatpush1.msra.mxu0 0.0
    %3722 = vmatprep.mubr.f32.mxu0 0.0
    %3723 = vmatmul.mubr.f32.gmra.mrb[0].mxu0 %v3650
    %v3724 = vpop.f32.mrb[0].mxu0
    %v3725 = vadd.f32 %v3647, %v3724
    %v3726 = vpop.f32.mrb[0].mxu0
    %3727 = vmatprep.mubr.f32.mxu0 0.0
    %3728 = vmatmul.mubr.f32.gmra.mrb[0].mxu0 %v3653
    %v3729 = vpop.f32.mrb[0].mxu0
    %v3730 = vadd.f32 %v3647, %v3729
    %v3731 = vpop.f32.mrb[0].mxu0
    %3732 = vmatprep.mubr.f32.mxu0 0.0
    %3733 = vmatmul.mubr.f32.gmra.mrb[0].mxu0 %v3656
    %v3734 = vpop.f32.mrb[0].mxu0
    %v3735 = vadd.f32 %v3647, %v3734
    %v3736 = vpop.f32.mrb[0].mxu0
    %3737 = vdwg.mxu0
    %v3741 = vrot.slane %v3725, 4
    %v3742 = vrot.slane %v3730, 4
    %v3743 = vsel %vm218, %v3741, %v3742
    %v3744 = vrot.slane %v3735, 4
    %v3745 = vsel %vm218, %v3742, %v3744
    %v3749 = vsel %vm218, %v3735, %v3741
    %v3750 = vmul.f32 %v3725, %v205
    %v3751 = vmul.f32 %v3730, %v206
    %v3752 = vmul.f32 %v3749, %v207
    %v3753 = vmul.f32 %v3743, %v208
    %v3754 = vmul.f32 %v3745, %v209
    %v3755 = vmul.f32 %v3725, %v210
    %v3756 = vmul.f32 %v3730, %v211
    %v3757 = vmul.f32 %v3749, %v212
    %v3758 = vmul.f32 %v3743, %v213
    %v3759 = vmul.f32 %v3745, %v214
    %v3760 = vmul.f32 %v3725, %v239
    %v3761 = vmul.f32 %v3730, %v241
    %v3762 = vmul.f32 %v3749, %v243
    %v3763 = vmul.f32 %v3743, %v245
    %v3764 = vmul.f32 %v3745, %v247
    %v3765 = vmul.f32 %v3725, %v249
    %v3766 = vmul.f32 %v3730, %v251
    %v3767 = vmul.f32 %v3749, %v253
    %v3768 = vmul.f32 %v3743, %v255
    %v3769 = vmul.f32 %v3745, %v257
    %v3771 = vsel %vm115, %v3640, 0
    %v3774 = vsel %vm115, %v3750, 0
    %v3777 = vsel %vm115, %v3751, 0
    %v3780 = vsel %vm115, %v3752, 0
    %v3783 = vsel %vm115, %v3753, 0
    %v3786 = vsel %vm115, %v3754, 0
    %v3789 = vsel %vm115, %v3755, 0
    %v3792 = vsel %vm115, %v3756, 0
    %v3795 = vsel %vm115, %v3757, 0
    %v3798 = vsel %vm115, %v3758, 0
    %v3801 = vsel %vm115, %v3759, 0
    %3803 = vmatprep.subr.mxu0 0.0
    %3804 = vmatpush1.xpose.msra.mxu0 %v3774
    %3805 = vmatprep.subr.mxu0 0.0
    %3806 = vmatpush1.xpose.msra.mxu0 %v3777
    %3807 = vmatprep.subr.mxu0 0.0
    %3808 = vmatpush1.xpose.msra.mxu0 %v3780
    %3809 = vmatprep.subr.mxu0 0.0
    %3810 = vmatpush1.xpose.msra.mxu0 %v3783
    %3811 = vmatprep.subr.mxu0 0.0
    %3812 = vmatpush1.xpose.msra.mxu0 %v3786
    %3813 = vmatprep.subr.mxu0 0.0
    %3814 = vmatpush1.xpose.msra.mxu0 %v3789
    %3815 = vmatprep.subr.mxu0 0.0
    %3816 = vmatpush1.xpose.msra.mxu0 %v3792
    %3817 = vmatprep.subr.mxu0 0.0
    %3818 = vmatpush1.xpose.msra.mxu0 %v3795
    %3819 = vmatprep.subr.mxu0 0.0
    %3820 = vmatpush1.xpose.msra.mxu0 %v3798
    %3821 = vmatprep.subr.mxu0 0.0
    %3822 = vmatpush1.xpose.msra.mxu0 %v3801
    %3823 = vmatprep.subr.mxu0 0.0
    %3824 = vmatpush1.xpose.msra.mxu0 0.0
    %3825 = vmatprep.subr.mxu0 0.0
    %3826 = vmatpush1.xpose.msra.mxu0 0.0
    %3827 = vmatprep.subr.mxu0 0.0
    %3828 = vmatpush1.xpose.msra.mxu0 0.0
    %3829 = vmatprep.subr.mxu0 0.0
    %3830 = vmatpush1.xpose.msra.mxu0 0.0
    %3831 = vmatprep.subr.mxu0 0.0
    %3832 = vmatpush1.xpose.msra.mxu0 0.0
    %3833 = vmatprep.subr.mxu0 0.0
    %3834 = vmatpush1.xpose.msra.mxu0 0.0
    %3835 = vmatprep.subr.mxu0 0.0
    %3836 = vmatpush1.xpose.msra.mxu0 0.0
    %3837 = vmatprep.subr.mxu0 0.0
    %3838 = vmatpush1.xpose.msra.mxu0 0.0
    %3839 = vmatprep.subr.mxu0 0.0
    %3840 = vmatpush1.xpose.msra.mxu0 0.0
    %3841 = vmatprep.subr.mxu0 0.0
    %3842 = vmatpush1.xpose.msra.mxu0 0.0
    %3843 = vmatprep.subr.mxu0 0.0
    %3844 = vmatpush1.xpose.msra.mxu0 0.0
    %3845 = vmatprep.subr.mxu0 0.0
    %3846 = vmatpush1.xpose.msra.mxu0 0.0
    %3847 = vmatprep.subr.mxu0 0.0
    %3848 = vmatpush1.xpose.msra.mxu0 0.0
    %3849 = vmatprep.subr.mxu0 0.0
    %3850 = vmatpush1.xpose.msra.mxu0 0.0
    %3851 = vmatprep.subr.mxu0 0.0
    %3852 = vmatpush1.xpose.msra.mxu0 0.0
    %3853 = vmatprep.subr.mxu0 0.0
    %3854 = vmatpush1.xpose.msra.mxu0 0.0
    %3855 = vmatprep.subr.mxu0 0.0
    %3856 = vmatpush1.xpose.msra.mxu0 0.0
    %3857 = vmatprep.subr.mxu0 0.0
    %3858 = vmatpush1.xpose.msra.mxu0 0.0
    %3859 = vmatprep.subr.mxu0 0.0
    %3860 = vmatpush1.xpose.msra.mxu0 0.0
    %3861 = vmatprep.subr.mxu0 0.0
    %3862 = vmatpush1.xpose.msra.mxu0 0.0
    %3863 = vmatprep.subr.mxu0 0.0
    %3864 = vmatpush1.xpose.msra.mxu0 0.0
    %3865 = vmatprep.subr.mxu0 0.0
    %3866 = vmatpush1.xpose.msra.mxu0 0.0
    %3867 = vmatprep.mubr.f32.mxu0 0.0
    %3868 = vmatmul.mubr.f32.gmra.mrb[0].mxu0 %v3771
    %v3869 = vpop.f32.mrb[0].mxu0
    %v3870 = vadd.f32 0.0, %v3869
    %v3871 = vpop.f32.mrb[0].mxu0
    %3872 = vdwg.mxu0
    %v3873 = vsub.f32 %v3870, %v1805
    %v3874 = vsel %vm1808, %v3873, -inf
    %3875 = vmax.xlane.f32.xlu0 %v3874
    %v3876 = vpop.xlane.xlu0 %3875
    %v3877 = vsub.f32 %v3873, %v3876
    %v3878 = vmul.f32 %v3877, 1.442695
    %v3879 = vpow.pop %v3878
    %v3881 = vsel %vm472, %v3879, 0
    %3883 = vmatprep.subr.mxu0 0.0
    %3884 = vmatpush1.msra.mxu0 %v493
    %3885 = vmatprep.subr.mxu0 0.0
    %3886 = vmatpush1.msra.mxu0 %v495
    %3887 = vmatprep.subr.mxu0 0.0
    %3888 = vmatpush1.msra.mxu0 %v497
    %3889 = vmatprep.subr.mxu0 0.0
    %3890 = vmatpush1.msra.mxu0 %v499
    %3891 = vmatprep.subr.mxu0 0.0
    %3892 = vmatpush1.msra.mxu0 %v501
    %3893 = vmatprep.subr.mxu0 0.0
    %3894 = vmatpush1.msra.mxu0 %v503
    %3895 = vmatprep.subr.mxu0 0.0
    %3896 = vmatpush1.msra.mxu0 %v505
    %3897 = vmatprep.subr.mxu0 0.0
    %3898 = vmatpush1.msra.mxu0 %v507
    %3899 = vmatprep.subr.mxu0 0.0
    %3900 = vmatpush1.msra.mxu0 %v509
    %3901 = vmatprep.subr.mxu0 0.0
    %3902 = vmatpush1.msra.mxu0 %v511
    %3903 = vmatprep.subr.mxu0 0.0
    %3904 = vmatpush1.msra.mxu0 0.0
    %3905 = vmatprep.subr.mxu0 0.0
    %3906 = vmatpush1.msra.mxu0 0.0
    %3907 = vmatprep.subr.mxu0 0.0
    %3908 = vmatpush1.msra.mxu0 0.0
    %3909 = vmatprep.subr.mxu0 0.0
    %3910 = vmatpush1.msra.mxu0 0.0
    %3911 = vmatprep.subr.mxu0 0.0
    %3912 = vmatpush1.msra.mxu0 0.0
    %3913 = vmatprep.subr.mxu0 0.0
    %3914 = vmatpush1.msra.mxu0 0.0
    %3915 = vmatprep.subr.mxu0 0.0
    %3916 = vmatpush1.msra.mxu0 0.0
    %3917 = vmatprep.subr.mxu0 0.0
    %3918 = vmatpush1.msra.mxu0 0.0
    %3919 = vmatprep.subr.mxu0 0.0
    %3920 = vmatpush1.msra.mxu0 0.0
    %3921 = vmatprep.subr.mxu0 0.0
    %3922 = vmatpush1.msra.mxu0 0.0
    %3923 = vmatprep.subr.mxu0 0.0
    %3924 = vmatpush1.msra.mxu0 0.0
    %3925 = vmatprep.subr.mxu0 0.0
    %3926 = vmatpush1.msra.mxu0 0.0
    %3927 = vmatprep.subr.mxu0 0.0
    %3928 = vmatpush1.msra.mxu0 0.0
    %3929 = vmatprep.subr.mxu0 0.0
    %3930 = vmatpush1.msra.mxu0 0.0
    %3931 = vmatprep.subr.mxu0 0.0
    %3932 = vmatpush1.msra.mxu0 0.0
    %3933 = vmatprep.subr.mxu0 0.0
    %3934 = vmatpush1.msra.mxu0 0.0
    %3935 = vmatprep.subr.mxu0 0.0
    %3936 = vmatpush1.msra.mxu0 0.0
    %3937 = vmatprep.subr.mxu0 0.0
    %3938 = vmatpush1.msra.mxu0 0.0
    %3939 = vmatprep.subr.mxu0 0.0
    %3940 = vmatpush1.msra.mxu0 0.0
    %3941 = vmatprep.subr.mxu0 0.0
    %3942 = vmatpush1.msra.mxu0 0.0
    %3943 = vmatprep.subr.mxu0 0.0
    %3944 = vmatpush1.msra.mxu0 0.0
    %3945 = vmatprep.subr.mxu0 0.0
    %3946 = vmatpush1.msra.mxu0 0.0
    %3947 = vmatprep.mubr.f32.mxu0 0.0
    %3948 = vmatmul.mubr.f32.gmra.mrb[0].mxu0 %v3881
    %v3949 = vpop.f32.mrb[0].mxu0
    %v3950 = vadd.f32 %v1817, %v3949
    %v3951 = vpop.f32.mrb[0].mxu0
    %3952 = vdwg.mxu0
    %v3953 = vadd.f32 %v3950, 1e-30
    %v3954 = vrcp.pop %v3953
    %v3955 = vmul.f32 %v3879, %v3954
    %3966 = vrot.lane.b32.xlu0 %v3760, 120
    %v3967 = vpop.permute.xlu0 %3966
    %3968 = vrot.lane.b32.xlu0 %v3761, 120
    %v3969 = vpop.permute.xlu0 %3968
    %3970 = vrot.lane.b32.xlu0 %v3762, 120
    %v3971 = vpop.permute.xlu0 %3970
    %3972 = vrot.lane.b32.xlu0 %v3763, 120
    %v3973 = vpop.permute.xlu0 %3972
    %3974 = vrot.lane.b32.xlu0 %v3764, 120
    %v3975 = vpop.permute.xlu0 %3974
    %3976 = vrot.lane.b32.xlu0 %v3765, 120
    %v3977 = vpop.permute.xlu0 %3976
    %3978 = vrot.lane.b32.xlu0 %v3766, 120
    %v3979 = vpop.permute.xlu0 %3978
    %3980 = vrot.lane.b32.xlu0 %v3767, 120
    %v3981 = vpop.permute.xlu0 %3980
    %3982 = vrot.lane.b32.xlu0 %v3768, 120
    %v3983 = vpop.permute.xlu0 %3982
    %3984 = vrot.lane.b32.xlu0 %v3769, 120
    %v3985 = vpop.permute.xlu0 %3984
    %v3997 = vsel %vm472, %v3955, 0
    %3999 = vmatprep.subr.mxu0 0.0
    %4000 = vmatpush1.msra.mxu0 %v3967
    %4001 = vmatprep.subr.mxu0 0.0
    %4002 = vmatpush1.msra.mxu0 %v3969
    %4003 = vmatprep.subr.mxu0 0.0
    %4004 = vmatpush1.msra.mxu0 %v3971
    %4005 = vmatprep.subr.mxu0 0.0
    %4006 = vmatpush1.msra.mxu0 %v3973
    %4007 = vmatprep.subr.mxu0 0.0
    %4008 = vmatpush1.msra.mxu0 %v3975
    %4009 = vmatprep.subr.mxu0 0.0
    %4010 = vmatpush1.msra.mxu0 %v3977
    %4011 = vmatprep.subr.mxu0 0.0
    %4012 = vmatpush1.msra.mxu0 %v3979
    %4013 = vmatprep.subr.mxu0 0.0
    %4014 = vmatpush1.msra.mxu0 %v3981
    %4015 = vmatprep.subr.mxu0 0.0
    %4016 = vmatpush1.msra.mxu0 %v3983
    %4017 = vmatprep.subr.mxu0 0.0
    %4018 = vmatpush1.msra.mxu0 %v3985
    %4019 = vmatprep.subr.mxu0 0.0
    %4020 = vmatpush1.msra.mxu0 0.0
    %4021 = vmatprep.subr.mxu0 0.0
    %4022 = vmatpush1.msra.mxu0 0.0
    %4023 = vmatprep.subr.mxu0 0.0
    %4024 = vmatpush1.msra.mxu0 0.0
    %4025 = vmatprep.subr.mxu0 0.0
    %4026 = vmatpush1.msra.mxu0 0.0
    %4027 = vmatprep.subr.mxu0 0.0
    %4028 = vmatpush1.msra.mxu0 0.0
    %4029 = vmatprep.subr.mxu0 0.0
    %4030 = vmatpush1.msra.mxu0 0.0
    %4031 = vmatprep.subr.mxu0 0.0
    %4032 = vmatpush1.msra.mxu0 0.0
    %4033 = vmatprep.subr.mxu0 0.0
    %4034 = vmatpush1.msra.mxu0 0.0
    %4035 = vmatprep.subr.mxu0 0.0
    %4036 = vmatpush1.msra.mxu0 0.0
    %4037 = vmatprep.subr.mxu0 0.0
    %4038 = vmatpush1.msra.mxu0 0.0
    %4039 = vmatprep.subr.mxu0 0.0
    %4040 = vmatpush1.msra.mxu0 0.0
    %4041 = vmatprep.subr.mxu0 0.0
    %4042 = vmatpush1.msra.mxu0 0.0
    %4043 = vmatprep.subr.mxu0 0.0
    %4044 = vmatpush1.msra.mxu0 0.0
    %4045 = vmatprep.subr.mxu0 0.0
    %4046 = vmatpush1.msra.mxu0 0.0
    %4047 = vmatprep.subr.mxu0 0.0
    %4048 = vmatpush1.msra.mxu0 0.0
    %4049 = vmatprep.subr.mxu0 0.0
    %4050 = vmatpush1.msra.mxu0 0.0
    %4051 = vmatprep.subr.mxu0 0.0
    %4052 = vmatpush1.msra.mxu0 0.0
    %4053 = vmatprep.subr.mxu0 0.0
    %4054 = vmatpush1.msra.mxu0 0.0
    %4055 = vmatprep.subr.mxu0 0.0
    %4056 = vmatpush1.msra.mxu0 0.0
    %4057 = vmatprep.subr.mxu0 0.0
    %4058 = vmatpush1.msra.mxu0 0.0
    %4059 = vmatprep.subr.mxu0 0.0
    %4060 = vmatpush1.msra.mxu0 0.0
    %4061 = vmatprep.subr.mxu0 0.0
    %4062 = vmatpush1.msra.mxu0 0.0
    %4063 = vmatprep.mubr.f32.mxu0 0.0
    %4064 = vmatmul.mubr.f32.gmra.mrb[0].mxu0 %v3997
    %v4065 = vpop.f32.mrb[0].mxu0
    %v4066 = vadd.f32 0.0, %v4065
    %v4067 = vpop.f32.mrb[0].mxu0
    %4068 = vdwg.mxu0
    %4069 = vrot.lane.b32.xlu0 %v860, 104
    %v4070 = vpop.permute.xlu0 %4069
    %4072 = vrot.lane.b32.xlu0 %v868, 104
    %v4073 = vpop.permute.xlu0 %4072
    %v4076 = vsel %vm115, %v4066, 0
    %4078 = vmatprep.subr.mxu0 0.0
    %4079 = vmatpush1.msra.mxu0 %v4070
    %4080 = vmatprep.subr.mxu0 0.0
    %4081 = vmatpush1.msra.mxu0 0.0
    %4082 = vmatprep.subr.mxu0 0.0
    %4083 = vmatpush1.msra.mxu0 0.0
    %4084 = vmatprep.subr.mxu0 0.0
    %4085 = vmatpush1.msra.mxu0 0.0
    %4086 = vmatprep.subr.mxu0 0.0
    %4087 = vmatpush1.msra.mxu0 0.0
    %4088 = vmatprep.subr.mxu0 0.0
    %4089 = vmatpush1.msra.mxu0 0.0
    %4090 = vmatprep.subr.mxu0 0.0
    %4091 = vmatpush1.msra.mxu0 0.0
    %4092 = vmatprep.subr.mxu0 0.0
    %4093 = vmatpush1.msra.mxu0 0.0
    %4094 = vmatprep.subr.mxu0 0.0
    %4095 = vmatpush1.msra.mxu0 0.0
    %4096 = vmatprep.subr.mxu0 0.0
    %4097 = vmatpush1.msra.mxu0 0.0
    %4098 = vmatprep.subr.mxu0 0.0
    %4099 = vmatpush1.msra.mxu0 0.0
    %4100 = vmatprep.subr.mxu0 0.0
    %4101 = vmatpush1.msra.mxu0 0.0
    %4102 = vmatprep.subr.mxu0 0.0
    %4103 = vmatpush1.msra.mxu0 0.0
    %4104 = vmatprep.subr.mxu0 0.0
    %4105 = vmatpush1.msra.mxu0 0.0
    %4106 = vmatprep.subr.mxu0 0.0
    %4107 = vmatpush1.msra.mxu0 0.0
    %4108 = vmatprep.subr.mxu0 0.0
    %4109 = vmatpush1.msra.mxu0 0.0
    %4110 = vmatprep.subr.mxu0 0.0
    %4111 = vmatpush1.msra.mxu0 0.0
    %4112 = vmatprep.subr.mxu0 0.0
    %4113 = vmatpush1.msra.mxu0 0.0
    %4114 = vmatprep.subr.mxu0 0.0
    %4115 = vmatpush1.msra.mxu0 0.0
    %4116 = vmatprep.subr.mxu0 0.0
    %4117 = vmatpush1.msra.mxu0 0.0
    %4118 = vmatprep.subr.mxu0 0.0
    %4119 = vmatpush1.msra.mxu0 0.0
    %4120 = vmatprep.subr.mxu0 0.0
    %4121 = vmatpush1.msra.mxu0 0.0
    %4122 = vmatprep.subr.mxu0 0.0
    %4123 = vmatpush1.msra.mxu0 0.0
    %4124 = vmatprep.subr.mxu0 0.0
    %4125 = vmatpush1.msra.mxu0 0.0
    %4126 = vmatprep.subr.mxu0 0.0
    %4127 = vmatpush1.msra.mxu0 0.0
    %4128 = vmatprep.subr.mxu0 0.0
    %4129 = vmatpush1.msra.mxu0 0.0
    %4130 = vmatprep.subr.mxu0 0.0
    %4131 = vmatpush1.msra.mxu0 0.0
    %4132 = vmatprep.subr.mxu0 0.0
    %4133 = vmatpush1.msra.mxu0 0.0
    %4134 = vmatprep.subr.mxu0 0.0
    %4135 = vmatpush1.msra.mxu0 0.0
    %4136 = vmatprep.subr.mxu0 0.0
    %4137 = vmatpush1.msra.mxu0 0.0
    %4138 = vmatprep.subr.mxu0 0.0
    %4139 = vmatpush1.msra.mxu0 0.0
    %4140 = vmatprep.subr.mxu0 0.0
    %4141 = vmatpush1.msra.mxu0 0.0
    %4142 = vmatprep.mubr.f32.mxu0 0.0
    %4143 = vmatmul.mubr.f32.gmra.mrb[0].mxu0 %v4076
    %v4144 = vpop.f32.mrb[0].mxu0
    %v4145 = vadd.f32 %v4073, %v4144
    %v4146 = vpop.f32.mrb[0].mxu0
    %4147 = vdwg.mxu0
    %v4148 = vadd.f32 %v3568, %v4145
    %4149 = vrot.lane.b32.xlu0 %v860, 64
    %v4150 = vpop.permute.xlu0 %4149
    %4152 = vrot.lane.b32.xlu0 %v868, 64
    %v4153 = vpop.permute.xlu0 %4152
    %v4156 = vsel %vm115, %v4148, 0
    %4158 = vmatprep.subr.mxu0 0.0
    %4159 = vmatpush1.msra.mxu0 %v4150
    %4160 = vmatprep.subr.mxu0 0.0
    %4161 = vmatpush1.msra.mxu0 0.0
    %4162 = vmatprep.subr.mxu0 0.0
    %4163 = vmatpush1.msra.mxu0 0.0
    %4164 = vmatprep.subr.mxu0 0.0
    %4165 = vmatpush1.msra.mxu0 0.0
    %4166 = vmatprep.subr.mxu0 0.0
    %4167 = vmatpush1.msra.mxu0 0.0
    %4168 = vmatprep.subr.mxu0 0.0
    %4169 = vmatpush1.msra.mxu0 0.0
    %4170 = vmatprep.subr.mxu0 0.0
    %4171 = vmatpush1.msra.mxu0 0.0
    %4172 = vmatprep.subr.mxu0 0.0
    %4173 = vmatpush1.msra.mxu0 0.0
    %4174 = vmatprep.subr.mxu0 0.0
    %4175 = vmatpush1.msra.mxu0 0.0
    %4176 = vmatprep.subr.mxu0 0.0
    %4177 = vmatpush1.msra.mxu0 0.0
    %4178 = vmatprep.subr.mxu0 0.0
    %4179 = vmatpush1.msra.mxu0 0.0
    %4180 = vmatprep.subr.mxu0 0.0
    %4181 = vmatpush1.msra.mxu0 0.0
    %4182 = vmatprep.subr.mxu0 0.0
    %4183 = vmatpush1.msra.mxu0 0.0
    %4184 = vmatprep.subr.mxu0 0.0
    %4185 = vmatpush1.msra.mxu0 0.0
    %4186 = vmatprep.subr.mxu0 0.0
    %4187 = vmatpush1.msra.mxu0 0.0
    %4188 = vmatprep.subr.mxu0 0.0
    %4189 = vmatpush1.msra.mxu0 0.0
    %4190 = vmatprep.subr.mxu0 0.0
    %4191 = vmatpush1.msra.mxu0 0.0
    %4192 = vmatprep.subr.mxu0 0.0
    %4193 = vmatpush1.msra.mxu0 0.0
    %4194 = vmatprep.subr.mxu0 0.0
    %4195 = vmatpush1.msra.mxu0 0.0
    %4196 = vmatprep.subr.mxu0 0.0
    %4197 = vmatpush1.msra.mxu0 0.0
    %4198 = vmatprep.subr.mxu0 0.0
    %4199 = vmatpush1.msra.mxu0 0.0
    %4200 = vmatprep.subr.mxu0 0.0
    %4201 = vmatpush1.msra.mxu0 0.0
    %4202 = vmatprep.subr.mxu0 0.0
    %4203 = vmatpush1.msra.mxu0 0.0
    %4204 = vmatprep.subr.mxu0 0.0
    %4205 = vmatpush1.msra.mxu0 0.0
    %4206 = vmatprep.subr.mxu0 0.0
    %4207 = vmatpush1.msra.mxu0 0.0
    %4208 = vmatprep.subr.mxu0 0.0
    %4209 = vmatpush1.msra.mxu0 0.0
    %4210 = vmatprep.subr.mxu0 0.0
    %4211 = vmatpush1.msra.mxu0 0.0
    %4212 = vmatprep.subr.mxu0 0.0
    %4213 = vmatpush1.msra.mxu0 0.0
    %4214 = vmatprep.subr.mxu0 0.0
    %4215 = vmatpush1.msra.mxu0 0.0
    %4216 = vmatprep.subr.mxu0 0.0
    %4217 = vmatpush1.msra.mxu0 0.0
    %4218 = vmatprep.subr.mxu0 0.0
    %4219 = vmatpush1.msra.mxu0 0.0
    %4220 = vmatprep.subr.mxu0 0.0
    %4221 = vmatpush1.msra.mxu0 0.0
    %4222 = vmatprep.mubr.f32.mxu0 0.0
    %4223 = vmatmul.mubr.f32.gmra.mrb[0].mxu0 %v4156
    %v4224 = vpop.f32.mrb[0].mxu0
    %v4225 = vadd.f32 %v4153, %v4224
    %v4226 = vpop.f32.mrb[0].mxu0
    %4227 = vdwg.mxu0
    %vm4228 = vcmp.ge.f32.partialorder %v4225, 0.0
    %v4229 = vmul.f32 %v4225, 0.01
    %v4230 = vsel %vm4228, %v4225, %v4229
    %4231 = vrot.lane.b32.xlu0 %v862, 112
    %v4232 = vpop.permute.xlu0 %4231
    %4233 = vrot.lane.b32.xlu0 %v863, 112
    %v4234 = vpop.permute.xlu0 %4233
    %4237 = vrot.lane.b32.xlu0 %v868, 32
    %v4238 = vpop.permute.xlu0 %4237
    %v4241 = vsel %vm977, %v4230, 0
    %4243 = vmatprep.subr.mxu0 0.0
    %4244 = vmatpush1.msra.mxu0 %v4232
    %4245 = vmatprep.subr.mxu0 0.0
    %4246 = vmatpush1.msra.mxu0 %v4234
    %4247 = vmatprep.subr.mxu0 0.0
    %4248 = vmatpush1.msra.mxu0 0.0
    %4249 = vmatprep.subr.mxu0 0.0
    %4250 = vmatpush1.msra.mxu0 0.0
    %4251 = vmatprep.subr.mxu0 0.0
    %4252 = vmatpush1.msra.mxu0 0.0
    %4253 = vmatprep.subr.mxu0 0.0
    %4254 = vmatpush1.msra.mxu0 0.0
    %4255 = vmatprep.subr.mxu0 0.0
    %4256 = vmatpush1.msra.mxu0 0.0
    %4257 = vmatprep.subr.mxu0 0.0
    %4258 = vmatpush1.msra.mxu0 0.0
    %4259 = vmatprep.subr.mxu0 0.0
    %4260 = vmatpush1.msra.mxu0 0.0
    %4261 = vmatprep.subr.mxu0 0.0
    %4262 = vmatpush1.msra.mxu0 0.0
    %4263 = vmatprep.subr.mxu0 0.0
    %4264 = vmatpush1.msra.mxu0 0.0
    %4265 = vmatprep.subr.mxu0 0.0
    %4266 = vmatpush1.msra.mxu0 0.0
    %4267 = vmatprep.subr.mxu0 0.0
    %4268 = vmatpush1.msra.mxu0 0.0
    %4269 = vmatprep.subr.mxu0 0.0
    %4270 = vmatpush1.msra.mxu0 0.0
    %4271 = vmatprep.subr.mxu0 0.0
    %4272 = vmatpush1.msra.mxu0 0.0
    %4273 = vmatprep.subr.mxu0 0.0
    %4274 = vmatpush1.msra.mxu0 0.0
    %4275 = vmatprep.subr.mxu0 0.0
    %4276 = vmatpush1.msra.mxu0 0.0
    %4277 = vmatprep.subr.mxu0 0.0
    %4278 = vmatpush1.msra.mxu0 0.0
    %4279 = vmatprep.subr.mxu0 0.0
    %4280 = vmatpush1.msra.mxu0 0.0
    %4281 = vmatprep.subr.mxu0 0.0
    %4282 = vmatpush1.msra.mxu0 0.0
    %4283 = vmatprep.subr.mxu0 0.0
    %4284 = vmatpush1.msra.mxu0 0.0
    %4285 = vmatprep.subr.mxu0 0.0
    %4286 = vmatpush1.msra.mxu0 0.0
    %4287 = vmatprep.subr.mxu0 0.0
    %4288 = vmatpush1.msra.mxu0 0.0
    %4289 = vmatprep.subr.mxu0 0.0
    %4290 = vmatpush1.msra.mxu0 0.0
    %4291 = vmatprep.subr.mxu0 0.0
    %4292 = vmatpush1.msra.mxu0 0.0
    %4293 = vmatprep.subr.mxu0 0.0
    %4294 = vmatpush1.msra.mxu0 0.0
    %4295 = vmatprep.subr.mxu0 0.0
    %4296 = vmatpush1.msra.mxu0 0.0
    %4297 = vmatprep.subr.mxu0 0.0
    %4298 = vmatpush1.msra.mxu0 0.0
    %4299 = vmatprep.subr.mxu0 0.0
    %4300 = vmatpush1.msra.mxu0 0.0
    %4301 = vmatprep.subr.mxu0 0.0
    %4302 = vmatpush1.msra.mxu0 0.0
    %4303 = vmatprep.subr.mxu0 0.0
    %4304 = vmatpush1.msra.mxu0 0.0
    %4305 = vmatprep.subr.mxu0 0.0
    %4306 = vmatpush1.msra.mxu0 0.0
    %4307 = vmatprep.mubr.f32.mxu0 0.0
    %4308 = vmatmul.mubr.f32.gmra.mrb[0].mxu0 %v4241
    %v4309 = vpop.f32.mrb[0].mxu0
    %v4310 = vadd.f32 %v4238, %v4309
    %v4311 = vpop.f32.mrb[0].mxu0
    %4312 = vdwg.mxu0
    %v4313 = vadd.f32 %v4148, %v4310
    %v4315 = vsel %vm115, %v4313, 0
    %4317 = vmatprep.subr.mxu0 0.0
    %4318 = vmatpush1.msra.mxu0 %v2256
    %4319 = vmatprep.subr.mxu0 0.0
    %4320 = vmatpush1.msra.mxu0 0.0
    %4321 = vmatprep.subr.mxu0 0.0
    %4322 = vmatpush1.msra.mxu0 0.0
    %4323 = vmatprep.subr.mxu0 0.0
    %4324 = vmatpush1.msra.mxu0 0.0
    %4325 = vmatprep.subr.mxu0 0.0
    %4326 = vmatpush1.msra.mxu0 0.0
    %4327 = vmatprep.subr.mxu0 0.0
    %4328 = vmatpush1.msra.mxu0 0.0
    %4329 = vmatprep.subr.mxu0 0.0
    %4330 = vmatpush1.msra.mxu0 0.0
    %4331 = vmatprep.subr.mxu0 0.0
    %4332 = vmatpush1.msra.mxu0 0.0
    %4333 = vmatprep.subr.mxu0 0.0
    %4334 = vmatpush1.msra.mxu0 0.0
    %4335 = vmatprep.subr.mxu0 0.0
    %4336 = vmatpush1.msra.mxu0 0.0
    %4337 = vmatprep.subr.mxu0 0.0
    %4338 = vmatpush1.msra.mxu0 0.0
    %4339 = vmatprep.subr.mxu0 0.0
    %4340 = vmatpush1.msra.mxu0 0.0
    %4341 = vmatprep.subr.mxu0 0.0
    %4342 = vmatpush1.msra.mxu0 0.0
    %4343 = vmatprep.subr.mxu0 0.0
    %4344 = vmatpush1.msra.mxu0 0.0
    %4345 = vmatprep.subr.mxu0 0.0
    %4346 = vmatpush1.msra.mxu0 0.0
    %4347 = vmatprep.subr.mxu0 0.0
    %4348 = vmatpush1.msra.mxu0 0.0
    %4349 = vmatprep.subr.mxu0 0.0
    %4350 = vmatpush1.msra.mxu0 0.0
    %4351 = vmatprep.subr.mxu0 0.0
    %4352 = vmatpush1.msra.mxu0 0.0
    %4353 = vmatprep.subr.mxu0 0.0
    %4354 = vmatpush1.msra.mxu0 0.0
    %4355 = vmatprep.subr.mxu0 0.0
    %4356 = vmatpush1.msra.mxu0 0.0
    %4357 = vmatprep.subr.mxu0 0.0
    %4358 = vmatpush1.msra.mxu0 0.0
    %4359 = vmatprep.subr.mxu0 0.0
    %4360 = vmatpush1.msra.mxu0 0.0
    %4361 = vmatprep.subr.mxu0 0.0
    %4362 = vmatpush1.msra.mxu0 0.0
    %4363 = vmatprep.subr.mxu0 0.0
    %4364 = vmatpush1.msra.mxu0 0.0
    %4365 = vmatprep.subr.mxu0 0.0
    %4366 = vmatpush1.msra.mxu0 0.0
    %4367 = vmatprep.subr.mxu0 0.0
    %4368 = vmatpush1.msra.mxu0 0.0
    %4369 = vmatprep.subr.mxu0 0.0
    %4370 = vmatpush1.msra.mxu0 0.0
    %4371 = vmatprep.subr.mxu0 0.0
    %4372 = vmatpush1.msra.mxu0 0.0
    %4373 = vmatprep.subr.mxu0 0.0
    %4374 = vmatpush1.msra.mxu0 0.0
    %4375 = vmatprep.subr.mxu0 0.0
    %4376 = vmatpush1.msra.mxu0 0.0
    %4377 = vmatprep.subr.mxu0 0.0
    %4378 = vmatpush1.msra.mxu0 0.0
    %4379 = vmatprep.subr.mxu0 0.0
    %4380 = vmatpush1.msra.mxu0 0.0
    %4381 = vmatprep.mubr.f32.mxu0 0.0
    %4382 = vmatmul.mubr.f32.gmra.mrb[0].mxu0 %v4315
    %v4383 = vpop.f32.mrb[0].mxu0
    %v4384 = vadd.f32 %v2259, %v4383
    %v4385 = vpop.f32.mrb[0].mxu0
    %4386 = vdwg.mxu0
    %v4387 = vsub.f32 0.0, %v4384
    %v4388 = vmul.f32 %v4387, 1.442695
    %v4389 = vpow.pop %v4388
    %v4390 = vadd.f32 %v4389, 1.0
    %v4391 = vrcp.pop %v4390
    %v4392 = vmul.f32 1.0, %v4391
    %vm4393 = vcmask 25600
    %4394 = vst.msk [vmem:[#allocation10] sm:$0x3] %vm4393, %v2339
    %4395 = vst.msk [vmem:[#allocation11] sm:$0x3] %vm4393, %v4392
    // Predicated region
    $region54: #{_lambda_.1} parent=1 // pred_check
      _
    $region55: #{_lambda_.1} parent=1 // pred_check_branch
      %4397 = sbr.rel (0) target = $region57
    $region56: #{_lambda_.1} parent=1 // pred_region
      %s4399 = ssub.s32 32, 32
      %4400 = vsyncadd [#allocation4], %s4399
      %s4402 = sshll.u32 [#allocation10], 4
      %s4403 = int_to_ptr.vmem [resolvable:$true] %s4402
      %4405 = dma.vmem_to_hbm [thread:$0]  %s4403, 32, %s9, [#allocation4]
    $region57: #{_lambda_.1} parent=1 // pred_fallthru
      _
    // Predicated region
    $region58: #{_lambda_.1} parent=1 // pred_check
      _
    $region59: #{_lambda_.1} parent=1 // pred_check_branch
      %4407 = sbr.rel (0) target = $region61
    $region60: #{_lambda_.1} parent=1 // pred_region
      %s4409 = ssub.s32 32, 32
      %4410 = vsyncadd [#allocation12], %s4409
      %s4412 = sshll.u32 [#allocation11], 4
      %s4413 = int_to_ptr.vmem [resolvable:$true] %s4412
      %4415 = dma.vmem_to_hbm [thread:$0]  %s4413, 32, %s10, [#allocation12]
    $region61: #{_lambda_.1} parent=1 // pred_fallthru
      _
    // Predicated region
    $region62: #{_lambda_.1} parent=1 // pred_check
      _
    $region63: #{_lambda_.1} parent=1 // pred_check_branch
      %4417 = sbr.rel (0) target = $region65
    $region64: #{_lambda_.1} parent=1 // pred_region
      %4418 = dma.done [#allocation4], 32
    $region65: #{_lambda_.1} parent=1 // pred_fallthru
      _
    // Predicated region
    $region66: #{_lambda_.1} parent=1 // pred_check
      _
    $region67: #{_lambda_.1} parent=1 // pred_check_branch
      %4420 = sbr.rel (0) target = $region69
    $region68: #{_lambda_.1} parent=1 // pred_region
      %4421 = dma.done [#allocation12], 32
    $region69: #{_lambda_.1} parent=1 // pred_fallthru
      _
    %4422 = vsyncpa [#allocation3], 1
    %4423 = vsyncpa [#allocation6], 1
    %4424 = vsyncpa [#allocation9], 1
    %4425 = vsyncpa [#allocation4], 1
    %4426 = vsyncpa [#allocation12], 1

</llo_original>
